<compile_context>
chip_gen: v7x
topology: tpu7x:2x2x1
jax: 0.10.0
libtpu: 0.0.40
codegen_flags: <defaults>
</compile_context>

<pallas_src>
import functools

import jax
import jax.numpy as jnp
from jax.experimental import pallas as pl
from jax.experimental.pallas import tpu as pltpu

EPS = 1e-5


# ----------------------------------------------------------------------------
# Fused STFEBlock kernel: one grid step == B samples
# ----------------------------------------------------------------------------
def _stfe_kernel(x_ref, w1c_ref, wred_ref, btr_ref, sc1_ref, sh1_ref,
                 wtp_ref, btp_ref, wlg_ref, sc3_ref, sh3_ref, w2_ref,
                 o_ref, pad_ref, *, B, T, H, W, SC, mults):
    C = 4 * SC
    HW = H * W
    bf16 = jnp.bfloat16
    f32 = jnp.float32
    inv_t = 1.0 / float(T)

    # Zero the padded-conv scratch (halo columns/rows must be zero; interior is
    # overwritten by every conv).  Unconditional so it is correct under megacore split.
    pad_ref[...] = jnp.zeros(pad_ref.shape, f32)

    # ---- temporal mean of the input block -------------------------------------------
    xm = jnp.mean(x_ref[...], axis=1)                       # (B, HW, C)
    xbar = jnp.mean(xm, axis=1)                             # (B, C)  spatial+temporal pool
    xmf = xm.reshape(B * HW, C).astype(bf16)

    # ---- conv1 (1x1, no bias): only the 3 SC-chunks consumed downstream --------------
    y1c = [jnp.dot(xmf, w1c_ref[k], preferred_element_type=f32)   # (B*HW, SC) each
           for k in range(3)]

    # ---- TFAM gate: 3 temporal variants fused into 2 matmuls + 1 sigmoid -------------
    # conv1 is folded into the reduce weight (global pool is linear in the input).
    r = jnp.dot(xbar.astype(bf16), wred_ref[...],
                preferred_element_type=f32) + btr_ref[...]        # (B, 3*RC)
    r = jnp.maximum(r * sc1_ref[...] + sh1_ref[...], 0.0)         # BN1d(eval) + ReLU
    z = jnp.dot(r.astype(bf16), wtp_ref[...],
                preferred_element_type=f32) + btp_ref[...]        # (B, 3*C)
    s3 = pl.reciprocal(1.0 + jnp.exp(-z), approx=True)            # sigmoid (EUP)
    s_var = [s3[:, v * C:(v + 1) * C] for v in range(3)]          # t==0 / interior / t==T-1

    s_mean = jnp.zeros((B, C), f32)
    for s, m in zip(s_var, mults):
        if m != 0.0:
            s_mean = s_mean + m * s
    g_mean = s_mean * inv_t + 1.0                                 # mean_t(sigmoid)+1, (B, C)

    # ---- LGCSM: 3 chained 3x3 convs on temporal means of TFAM chunks 2 / 3 ------------
    def conv3x3(v3, ci):                                          # v3: (B, HW, SC)
        # aligned interior store into the zero-haloed scratch (interior starts at
        # sublane 8; halo columns at 7 and 8+W stay zero)
        pad_ref[:, 1:H + 1, 8:8 + W, :] = v3.reshape(B, H, W, SC)
        pv = pad_ref[...]
        patches = jnp.concatenate(
            [pv[:, ky:ky + H, 7 + kx:7 + kx + W, :]
             for ky in range(3) for kx in range(3)], axis=-1)     # (B, H, W, 9*SC)
        out = jnp.dot(patches.reshape(B * HW, 9 * SC).astype(bf16), wlg_ref[ci],
                      preferred_element_type=f32)                 # single fused-tap matmul
        return out.reshape(B, HW, SC)

    x2m = g_mean[:, SC:2 * SC][:, None, :] * y1c[1].reshape(B, HW, SC)
    x3m = g_mean[:, 2 * SC:3 * SC][:, None, :] * y1c[2].reshape(B, HW, SC)
    a = conv3x3(x2m, 0)
    b = conv3x3(x2m + a, 1)
    c = conv3x3(x3m + b, 2)

    # ---- BatchNorm3d (eval) + ReLU --------------------------------------------------
    def bnr(v2, k):                                               # v2: (B*HW, SC)
        return jnp.maximum(v2 * sc3_ref[:, k * SC:(k + 1) * SC]
                           + sh3_ref[:, k * SC:(k + 1) * SC], 0.0)

    # Chunk 0 stays per-frame through TFAM; exact temporal mean over the (<=3) distinct
    # gate rows, since ReLU(BN(.)) does not commute with the mean.
    y1c0_3 = y1c[0].reshape(B, HW, SC)
    pm0 = jnp.zeros((B * HW, SC), f32)
    for s, m in zip(s_var, mults):
        if m != 0.0:
            v = ((s[:, :SC] + 1.0)[:, None, :] * y1c0_3).reshape(B * HW, SC)
            pm0 = pm0 + m * bnr(v, 0)
    pm0 = pm0 * inv_t

    lg = jnp.concatenate(
        [pm0,
         bnr(a.reshape(B * HW, SC), 1),
         bnr(b.reshape(B * HW, SC), 2),
         bnr(c.reshape(B * HW, SC), 3)], axis=-1)                 # (B*HW, C)

    # ---- conv2 (1x1) on the temporal mean, residual add over every frame -------------
    y2 = jnp.dot(lg.astype(bf16), w2_ref[...], preferred_element_type=f32)
    o_ref[...] = x_ref[...] + y2.reshape(B, HW, C)[:, None, :, :]


# ----------------------------------------------------------------------------
# Parameters (PyTorch-compatible shapes / init)
# ----------------------------------------------------------------------------
def init_params(key, C):
    SC = C // 4
    RC = C // 4   # TODO(synk): TFAM.reduction is undefined in the reference; assuming 4.
    ks = jax.random.split(key, 9)

    def nrm(k, shape, fan_in):
        return jax.random.normal(k, shape, jnp.float32) / jnp.sqrt(float(fan_in))

    p = {}
    # 1x1 convs as (C_in, C_out) matmul weights (== torch_W[:, :, 0, 0].T)
    p["w_conv1"] = nrm(ks[0], (C, C), C)
    p["w_conv2"] = nrm(ks[1], (C, C), C)
    # TFAM conv_reduce in torch Conv1d layout (RC, C, 3) + bias
    p["w_tr3"] = nrm(ks[2], (RC, C, 3), 3 * C)
    p["b_tr"] = nrm(ks[3], (RC,), 3 * C)
    # TFAM conv_process: torch (C, RC, 1) squeezed to (C, RC) + bias
    p["w_tp"] = nrm(ks[4], (C, RC), RC)
    p["b_tp"] = nrm(ks[5], (C,), RC)
    # TFAM BatchNorm1d(RC) -- inference-mode, PyTorch defaults
    p["bn1_gamma"] = jnp.ones((RC,), jnp.float32)
    p["bn1_beta"] = jnp.zeros((RC,), jnp.float32)
    p["bn1_mean"] = jnp.zeros((RC,), jnp.float32)
    p["bn1_var"] = jnp.ones((RC,), jnp.float32)

    # LGCSM 3x3 convs: torch (SC, SC, 3, 3) -> fused-tap matmul weight (9*SC, SC),
    # row index = (ky*3+kx)*SC + in_channel, col = out_channel.
    def lg(k):
        w = nrm(k, (SC, SC, 3, 3), SC * 9)
        return jnp.transpose(w, (2, 3, 1, 0)).reshape(9 * SC, SC)

    p["w_lg"] = jnp.stack([lg(ks[6]), lg(ks[7]), lg(ks[8])], axis=0)   # (3, 9*SC, SC)
    # LGCSM BatchNorm3d(C) -- inference-mode, PyTorch defaults
    p["bn3_gamma"] = jnp.ones((C,), jnp.float32)
    p["bn3_beta"] = jnp.zeros((C,), jnp.float32)
    p["bn3_mean"] = jnp.zeros((C,), jnp.float32)
    p["bn3_var"] = jnp.ones((C,), jnp.float32)
    return p


# ----------------------------------------------------------------------------
# Wrapper helpers
# ----------------------------------------------------------------------------
def _choose_block_batch(N, T, HW, C):
    # Rows per grid step feed the MXU M dimension: aim for >= ~512 rows, but keep the
    # double-buffered x+out blocks well under v7x's 64 MiB VMEM.  (On v7x also prefer an
    # even number of grid steps so dimension_semantics=("parallel",) fills both TCs.)
    per_sample = 2 * T * HW * C * 4                      # x block + out block, f32 bytes
    b_vmem = max(1, (36 << 20) // (2 * per_sample))      # 2x for double buffering
    b = max(1, min(N, b_vmem, -(-512 // HW)))
    while N % b:                                         # keep every grid step full
        b -= 1
    return b


def _temporal_mults(T):
    # Multiplicities of the (first, interior, last) TFAM gate rows in the temporal mean.
    if T == 1:
        return (1.0, 0.0, 0.0)
    if T == 2:
        return (1.0, 0.0, 1.0)
    return (1.0, float(T - 2), 1.0)


def _pack_weights(params, T, C):
    SC = C // 4
    RC = params["b_tr"].shape[0]
    bf16 = jnp.bfloat16

    # Fold BatchNorms (inference mode) into per-channel scale/shift.
    sc1v = params["bn1_gamma"] * jax.lax.rsqrt(params["bn1_var"] + EPS)
    sh1v = params["bn1_beta"] - params["bn1_mean"] * sc1v
    sc3v = params["bn3_gamma"] * jax.lax.rsqrt(params["bn3_var"] + EPS)
    sh3v = params["bn3_beta"] - params["bn3_mean"] * sc3v

    # TFAM conv_reduce (k=3, pad=1 over a T-constant pooled sequence) collapses into three
    # tap-sum variants; conv1 is folded in (both linear):  r_v = xbar @ (W1 @ Wred_v) + b.
    wt = params["w_tr3"]                                  # (RC, C, 3)
    wt0, wt1, wt2 = wt[..., 0], wt[..., 1], wt[..., 2]
    if T == 1:
        wf = wm = wl = wt1
    else:
        wf, wm, wl = wt1 + wt2, wt0 + wt1 + wt2, wt0 + wt1
    w1 = params["w_conv1"]                                # (C_in, C_out)
    wred = jnp.concatenate([w1 @ wf.T, w1 @ wm.T, w1 @ wl.T], axis=1)      # (C, 3*RC)
    btr3 = jnp.tile(params["b_tr"], 3).reshape(1, 3 * RC)
    sc1t = jnp.tile(sc1v, 3).reshape(1, 3 * RC)
    sh1t = jnp.tile(sh1v, 3).reshape(1, 3 * RC)

    # conv_process as a block-diagonal (3*RC, 3*C): one matmul handles all 3 variants.
    wtp = params["w_tp"].T                                # (RC, C)
    wtpd = jnp.zeros((3 * RC, 3 * C), jnp.float32)
    for v in range(3):
        wtpd = wtpd.at[v * RC:(v + 1) * RC, v * C:(v + 1) * C].set(wtp)
    btp3 = jnp.tile(params["b_tp"], 3).reshape(1, 3 * C)

    # conv1 column blocks for the three y1 chunks actually consumed downstream.
    w1c = jnp.stack([w1[:, k * SC:(k + 1) * SC] for k in range(3)], axis=0)  # (3, C, SC)

    return dict(
        w1c=w1c.astype(bf16), wred=wred.astype(bf16), btr3=btr3,
        sc1t=sc1t, sh1t=sh1t, wtpd=wtpd.astype(bf16), btp3=btp3,
        wlg=params["w_lg"].astype(bf16),
        sc3=sc3v.reshape(1, C), sh3=sh3v.reshape(1, C),
        w2=params["w_conv2"].astype(bf16))


# ----------------------------------------------------------------------------
# Forward: channels-last entry point (preferred -- no transposes around the kernel)
# ----------------------------------------------------------------------------
def stfe_block_forward_channels_last(x, params):
    """x: (N, T, H, W, C) float32 -> (N, T, H, W, C).  Keep repeated STFE blocks in this
    layout so no NTCHW<->NTHWC transposes (extra HBM passes) are needed between them."""
    N, T, H, W, C = x.shape
    assert C % 4 == 0, "out_channels must be divisible by 4"
    HW = H * W
    SC = C // 4
    RC = params["b_tr"].shape[0]

    B = _choose_block_batch(N, T, HW, C)
    mults = _temporal_mults(T)
    w = _pack_weights(params, T, C)
    wpad = ((W + 9) + 7) // 8 * 8        # zero-haloed width: interior at sublane 8 (aligned)

    x_flat = x.reshape(N, T, HW, C)      # contiguous dims -> free reshape

    kernel = functools.partial(_stfe_kernel, B=B, T=T, H=H, W=W, SC=SC, mults=mults)
    out = pl.pallas_call(
        kernel,
        grid=(N // B,),
        in_specs=[
            pl.BlockSpec((B, T, HW, C), lambda n: (n, 0, 0, 0)),       # x
            pl.BlockSpec((3, C, SC), lambda n: (0, 0, 0)),             # conv1 column blocks
            pl.BlockSpec((C, 3 * RC), lambda n: (0, 0)),               # fused reduce weight
            pl.BlockSpec((1, 3 * RC), lambda n: (0, 0)),               # reduce bias (tiled)
            pl.BlockSpec((1, 3 * RC), lambda n: (0, 0)),               # BN1 scale (tiled)
            pl.BlockSpec((1, 3 * RC), lambda n: (0, 0)),               # BN1 shift (tiled)
            pl.BlockSpec((3 * RC, 3 * C), lambda n: (0, 0)),           # block-diag process W
            pl.BlockSpec((1, 3 * C), lambda n: (0, 0)),                # process bias (tiled)
            pl.BlockSpec((3, 9 * SC, SC), lambda n: (0, 0, 0)),        # fused-tap 3x3 weights
            pl.BlockSpec((1, C), lambda n: (0, 0)),                    # BN3 scale
            pl.BlockSpec((1, C), lambda n: (0, 0)),                    # BN3 shift
            pl.BlockSpec((C, C), lambda n: (0, 0)),                    # w_conv2
        ],
        out_specs=pl.BlockSpec((B, T, HW, C), lambda n: (n, 0, 0, 0)),
        out_shape=jax.ShapeDtypeStruct((N, T, HW, C), jnp.float32),
        scratch_shapes=[pltpu.VMEM((B, H + 2, wpad, SC), jnp.float32)],  # zero-haloed images
        compiler_params=pltpu.CompilerParams(
            dimension_semantics=("parallel",),
            vmem_limit_bytes=48 * 1024 * 1024),
        # TODO(synk): pass input_output_aliases={0: 0} when x is donated/dead after the block.
    )(x_flat, w["w1c"], w["wred"], w["btr3"], w["sc1t"], w["sh1t"],
      w["wtpd"], w["btp3"], w["wlg"], w["sc3"], w["sh3"], w["w2"])

    return out.reshape(N, T, H, W, C)


def stfe_block_forward(x, params):
    """PyTorch-layout entry: x (N, T, C, H, W) -> (N, T, C, H, W).  The two transposes
    here exist only for interface parity with the reference module."""
    out = stfe_block_forward_channels_last(jnp.transpose(x, (0, 1, 3, 4, 2)), params)
    return jnp.transpose(out, (0, 1, 4, 2, 3))


if __name__ == "__main__":
    N, T, C, H, W = 2, 4, 16, 8, 8
    key = jax.random.PRNGKey(0)
    kx, kp = jax.random.split(key)
    x = jax.random.normal(kx, (N, T, C, H, W), dtype=jnp.float32)
    params = init_params(kp, C)

    out = jax.block_until_ready(jax.jit(stfe_block_forward)(x, params))
    assert out.shape == (N, T, C, H, W), out.shape
    assert out.dtype == jnp.float32
    assert bool(jnp.isfinite(out).all())
    print("KERNEL_OK")
</pallas_src>

<mosaic_0001>
module attributes {stable_mosaic.version = 11 : i64} {
  func.func @_stfe_kernel(%arg0: i32, %arg1: memref<2x4x64x16xf32, #tpu.memory_space<vmem>>, %arg2: memref<3x16x4xbf16, #tpu.memory_space<vmem>>, %arg3: memref<16x12xbf16, #tpu.memory_space<vmem>>, %arg4: memref<1x12xf32, #tpu.memory_space<vmem>>, %arg5: memref<1x12xf32, #tpu.memory_space<vmem>>, %arg6: memref<1x12xf32, #tpu.memory_space<vmem>>, %arg7: memref<12x48xbf16, #tpu.memory_space<vmem>>, %arg8: memref<1x48xf32, #tpu.memory_space<vmem>>, %arg9: memref<3x36x4xbf16, #tpu.memory_space<vmem>>, %arg10: memref<1x16xf32, #tpu.memory_space<vmem>>, %arg11: memref<1x16xf32, #tpu.memory_space<vmem>>, %arg12: memref<16x16xbf16, #tpu.memory_space<vmem>>, %arg13: memref<2x4x64x16xf32, #tpu.memory_space<vmem>>, %arg14: memref<2x10x24x4xf32, #tpu.memory_space<vmem>>) attributes {dimension_semantics = [#tpu.dimension_semantics<parallel>], iteration_bounds = array<i64: 1>, scalar_prefetch = 0 : i64, scratch_operands = 1 : i64, tpu.core_type = #tpu.core_type<tc>, window_params = [{transform_indices = @transform_0, window_bounds = array<i64: 2, 4, 64, 16>}, {pipeline_mode = #tpu.pipeline_mode<synchronous>, transform_indices = @transform_1, window_bounds = array<i64: 3, 16, 4>}, {pipeline_mode = #tpu.pipeline_mode<synchronous>, transform_indices = @transform_2, window_bounds = array<i64: 16, 12>}, {pipeline_mode = #tpu.pipeline_mode<synchronous>, transform_indices = @transform_3, window_bounds = array<i64: 1, 12>}, {pipeline_mode = #tpu.pipeline_mode<synchronous>, transform_indices = @transform_4, window_bounds = array<i64: 1, 12>}, {pipeline_mode = #tpu.pipeline_mode<synchronous>, transform_indices = @transform_5, window_bounds = array<i64: 1, 12>}, {pipeline_mode = #tpu.pipeline_mode<synchronous>, transform_indices = @transform_6, window_bounds = array<i64: 12, 48>}, {pipeline_mode = #tpu.pipeline_mode<synchronous>, transform_indices = @transform_7, window_bounds = array<i64: 1, 48>}, {pipeline_mode = #tpu.pipeline_mode<synchronous>, transform_indices = @transform_8, window_bounds = array<i64: 3, 36, 4>}, {pipeline_mode = #tpu.pipeline_mode<synchronous>, transform_indices = @transform_9, window_bounds = array<i64: 1, 16>}, {pipeline_mode = #tpu.pipeline_mode<synchronous>, transform_indices = @transform_10, window_bounds = array<i64: 1, 16>}, {pipeline_mode = #tpu.pipeline_mode<synchronous>, transform_indices = @transform_11, window_bounds = array<i64: 16, 16>}, {transform_indices = @transform_12, window_bounds = array<i64: 2, 4, 64, 16>}]} {
    %cst = arith.constant 0.000000e+00 : f32
    %0 = vector.broadcast %cst : f32 to vector<2x10x24x4xf32>
    %c0 = arith.constant 0 : index
    %c0_0 = arith.constant 0 : index
    %c0_1 = arith.constant 0 : index
    %c0_2 = arith.constant 0 : index
    %1 = vector.load %arg14[%c0, %c0_0, %c0_1, %c0_2] : memref<2x10x24x4xf32, #tpu.memory_space<vmem>>, vector<2x10x24x4xf32>
    tpu.vector_store %arg14[%c0, %c0_0, %c0_1, %c0_2], %0 {strides = array<i32>} : memref<2x10x24x4xf32, #tpu.memory_space<vmem>>, vector<2x10x24x4xf32>,
    %c0_3 = arith.constant 0 : index
    %c0_4 = arith.constant 0 : index
    %c0_5 = arith.constant 0 : index
    %c0_6 = arith.constant 0 : index
    %2 = vector.load %arg1[%c0_3, %c0_4, %c0_5, %c0_6] : memref<2x4x64x16xf32, #tpu.memory_space<vmem>>, vector<2x4x64x16xf32>
    %cst_7 = arith.constant dense<0.000000e+00> : vector<2x64x16xf32>
    %3 = vector.multi_reduction <add>, %2, %cst_7 [1] : vector<2x4x64x16xf32> to vector<2x64x16xf32>
    %cst_8 = arith.constant 4.000000e+00 : f32
    %4 = vector.broadcast %cst_8 : f32 to vector<2x64x16xf32>
    %5 = arith.divf %3, %4 : vector<2x64x16xf32>
    %cst_9 = arith.constant dense<0.000000e+00> : vector<2x16xf32>
    %6 = vector.multi_reduction <add>, %5, %cst_9 [1] : vector<2x64x16xf32> to vector<2x16xf32>
    %cst_10 = arith.constant 6.400000e+01 : f32
    %7 = vector.broadcast %cst_10 : f32 to vector<2x16xf32>
    %8 = arith.divf %6, %7 : vector<2x16xf32>
    %9 = vector.shape_cast %5 : vector<2x64x16xf32> to vector<128x16xf32>
    %10 = arith.truncf %9 : vector<128x16xf32> to vector<128x16xbf16>
    %c0_11 = arith.constant 0 : index
    %c0_12 = arith.constant 0 : index
    %c0_13 = arith.constant 0 : index
    %11 = vector.load %arg2[%c0_11, %c0_12, %c0_13] : memref<3x16x4xbf16, #tpu.memory_space<vmem>>, vector<1x16x4xbf16>
    %12 = vector.shape_cast %11 : vector<1x16x4xbf16> to vector<16x4xbf16>
    %cst_14 = arith.constant dense<0.000000e+00> : vector<128x4xf32>
    %13 = tpu.matmul %10, %12, %cst_14 {dimension_numbers = #tpu.dot_dimension_numbers<[1], [0], [0], [1], [0, 0, 1, 1], [], []>} : vector<128x16xbf16>, vector<16x4xbf16>, vector<128x4xf32> -> vector<128x4xf32>
    %c1 = arith.constant 1 : index
    %c0_15 = arith.constant 0 : index
    %c0_16 = arith.constant 0 : index
    %14 = vector.load %arg2[%c1, %c0_15, %c0_16] : memref<3x16x4xbf16, #tpu.memory_space<vmem>>, vector<1x16x4xbf16>
    %15 = vector.shape_cast %14 : vector<1x16x4xbf16> to vector<16x4xbf16>
    %cst_17 = arith.constant dense<0.000000e+00> : vector<128x4xf32>
    %16 = tpu.matmul %10, %15, %cst_17 {dimension_numbers = #tpu.dot_dimension_numbers<[1], [0], [0], [1], [0, 0, 1, 1], [], []>} : vector<128x16xbf16>, vector<16x4xbf16>, vector<128x4xf32> -> vector<128x4xf32>
    %c2 = arith.constant 2 : index
    %c0_18 = arith.constant 0 : index
    %c0_19 = arith.constant 0 : index
    %17 = vector.load %arg2[%c2, %c0_18, %c0_19] : memref<3x16x4xbf16, #tpu.memory_space<vmem>>, vector<1x16x4xbf16>
    %18 = vector.shape_cast %17 : vector<1x16x4xbf16> to vector<16x4xbf16>
    %cst_20 = arith.constant dense<0.000000e+00> : vector<128x4xf32>
    %19 = tpu.matmul %10, %18, %cst_20 {dimension_numbers = #tpu.dot_dimension_numbers<[1], [0], [0], [1], [0, 0, 1, 1], [], []>} : vector<128x16xbf16>, vector<16x4xbf16>, vector<128x4xf32> -> vector<128x4xf32>
    %20 = arith.truncf %8 : vector<2x16xf32> to vector<2x16xbf16>
    %c0_21 = arith.constant 0 : index
    %c0_22 = arith.constant 0 : index
    %21 = vector.load %arg3[%c0_21, %c0_22] : memref<16x12xbf16, #tpu.memory_space<vmem>>, vector<16x12xbf16>
    %cst_23 = arith.constant dense<0.000000e+00> : vector<2x12xf32>
    %22 = tpu.matmul %20, %21, %cst_23 {dimension_numbers = #tpu.dot_dimension_numbers<[1], [0], [0], [1], [0, 0, 1, 1], [], []>} : vector<2x16xbf16>, vector<16x12xbf16>, vector<2x12xf32> -> vector<2x12xf32>
    %c0_24 = arith.constant 0 : index
    %c0_25 = arith.constant 0 : index
    %23 = vector.load %arg4[%c0_24, %c0_25] : memref<1x12xf32, #tpu.memory_space<vmem>>, vector<1x12xf32>
    %24 = vector.broadcast %23 : vector<1x12xf32> to vector<2x12xf32>
    %25 = arith.addf %22, %24 : vector<2x12xf32>
    %c0_26 = arith.constant 0 : index
    %c0_27 = arith.constant 0 : index
    %26 = vector.load %arg5[%c0_26, %c0_27] : memref<1x12xf32, #tpu.memory_space<vmem>>, vector<1x12xf32>
    %27 = vector.broadcast %26 : vector<1x12xf32> to vector<2x12xf32>
    %28 = arith.mulf %25, %27 : vector<2x12xf32>
    %c0_28 = arith.constant 0 : index
    %c0_29 = arith.constant 0 : index
    %29 = vector.load %arg6[%c0_28, %c0_29] : memref<1x12xf32, #tpu.memory_space<vmem>>, vector<1x12xf32>
    %30 = vector.broadcast %29 : vector<1x12xf32> to vector<2x12xf32>
    %31 = arith.addf %28, %30 : vector<2x12xf32>
    %cst_30 = arith.constant 0.000000e+00 : f32
    %32 = vector.broadcast %cst_30 : f32 to vector<2x12xf32>
    %33 = arith.maximumf %31, %32 : vector<2x12xf32>
    %34 = arith.truncf %33 : vector<2x12xf32> to vector<2x12xbf16>
    %c0_31 = arith.constant 0 : index
    %c0_32 = arith.constant 0 : index
    %35 = vector.load %arg7[%c0_31, %c0_32] : memref<12x48xbf16, #tpu.memory_space<vmem>>, vector<12x48xbf16>
    %cst_33 = arith.constant dense<0.000000e+00> : vector<2x48xf32>
    %36 = tpu.matmul %34, %35, %cst_33 {dimension_numbers = #tpu.dot_dimension_numbers<[1], [0], [0], [1], [0, 0, 1, 1], [], []>} : vector<2x12xbf16>, vector<12x48xbf16>, vector<2x48xf32> -> vector<2x48xf32>
    %c0_34 = arith.constant 0 : index
    %c0_35 = arith.constant 0 : index
    %37 = vector.load %arg8[%c0_34, %c0_35] : memref<1x48xf32, #tpu.memory_space<vmem>>, vector<1x48xf32>
    %38 = vector.broadcast %37 : vector<1x48xf32> to vector<2x48xf32>
    %39 = arith.addf %36, %38 : vector<2x48xf32>
    %cst_36 = arith.constant 0.000000e+00 : f32
    %40 = vector.broadcast %cst_36 : f32 to vector<2x48xf32>
    %41 = arith.subf %40, %39 : vector<2x48xf32>
    %42 = math.exp %41 : vector<2x48xf32>
    %cst_37 = arith.constant 1.000000e+00 : f32
    %43 = vector.broadcast %cst_37 : f32 to vector<2x48xf32>
    %44 = arith.addf %43, %42 : vector<2x48xf32>
    %45 = tpu.reciprocal %44 {approx = true} : vector<2x48xf32> -> vector<2x48xf32>
    %46 = vector.extract_strided_slice %45 {offsets = [0, 0], sizes = [2, 16], strides = [1, 1]} : vector<2x48xf32> to vector<2x16xf32>
    %47 = vector.extract_strided_slice %45 {offsets = [0, 16], sizes = [2, 16], strides = [1, 1]} : vector<2x48xf32> to vector<2x16xf32>
    %48 = vector.extract_strided_slice %45 {offsets = [0, 32], sizes = [2, 16], strides = [1, 1]} : vector<2x48xf32> to vector<2x16xf32>
    %cst_38 = arith.constant 0.000000e+00 : f32
    %49 = vector.broadcast %cst_38 : f32 to vector<2x16xf32>
    %cst_39 = arith.constant 1.000000e+00 : f32
    %50 = vector.broadcast %cst_39 : f32 to vector<2x16xf32>
    %51 = arith.mulf %50, %46 : vector<2x16xf32>
    %52 = arith.addf %49, %51 : vector<2x16xf32>
    %cst_40 = arith.constant 2.000000e+00 : f32
    %53 = vector.broadcast %cst_40 : f32 to vector<2x16xf32>
    %54 = arith.mulf %53, %47 : vector<2x16xf32>
    %55 = arith.addf %52, %54 : vector<2x16xf32>
    %cst_41 = arith.constant 1.000000e+00 : f32
    %56 = vector.broadcast %cst_41 : f32 to vector<2x16xf32>
    %57 = arith.mulf %56, %48 : vector<2x16xf32>
    %58 = arith.addf %55, %57 : vector<2x16xf32>
    %cst_42 = arith.constant 2.500000e-01 : f32
    %59 = vector.broadcast %cst_42 : f32 to vector<2x16xf32>
    %60 = arith.mulf %58, %59 : vector<2x16xf32>
    %cst_43 = arith.constant 1.000000e+00 : f32
    %61 = vector.broadcast %cst_43 : f32 to vector<2x16xf32>
    %62 = arith.addf %60, %61 : vector<2x16xf32>
    %63 = vector.extract_strided_slice %62 {offsets = [0, 4], sizes = [2, 4], strides = [1, 1]} : vector<2x16xf32> to vector<2x4xf32>
    %64 = vector.shape_cast %63 : vector<2x4xf32> to vector<2x1x4xf32>
    %65 = vector.shape_cast %16 : vector<128x4xf32> to vector<2x64x4xf32>
    %66 = vector.broadcast %64 : vector<2x1x4xf32> to vector<2x64x4xf32>
    %67 = arith.mulf %66, %65 : vector<2x64x4xf32>
    %68 = vector.extract_strided_slice %62 {offsets = [0, 8], sizes = [2, 4], strides = [1, 1]} : vector<2x16xf32> to vector<2x4xf32>
    %69 = vector.shape_cast %68 : vector<2x4xf32> to vector<2x1x4xf32>
    %70 = vector.shape_cast %19 : vector<128x4xf32> to vector<2x64x4xf32>
    %71 = vector.broadcast %69 : vector<2x1x4xf32> to vector<2x64x4xf32>
    %72 = arith.mulf %71, %70 : vector<2x64x4xf32>
    %73 = vector.shape_cast %67 : vector<2x64x4xf32> to vector<2x8x8x4xf32>
    %c0_44 = arith.constant 0 : index
    %c1_45 = arith.constant 1 : index
    %c8 = arith.constant 8 : index
    %c0_46 = arith.constant 0 : index
    %74 = vector.load %arg14[%c0_44, %c1_45, %c8, %c0_46] : memref<2x10x24x4xf32, #tpu.memory_space<vmem>>, vector<2x8x8x4xf32>
    tpu.vector_store %arg14[%c0_44, %c1_45, %c8, %c0_46], %73 {strides = array<i32>} : memref<2x10x24x4xf32, #tpu.memory_space<vmem>>, vector<2x8x8x4xf32>,
    %c0_47 = arith.constant 0 : index
    %c0_48 = arith.constant 0 : index
    %c0_49 = arith.constant 0 : index
    %c0_50 = arith.constant 0 : index
    %75 = vector.load %arg14[%c0_47, %c0_48, %c0_49, %c0_50] : memref<2x10x24x4xf32, #tpu.memory_space<vmem>>, vector<2x10x24x4xf32>
    %76 = vector.extract_strided_slice %75 {offsets = [0, 0, 7, 0], sizes = [2, 8, 8, 4], strides = [1, 1, 1, 1]} : vector<2x10x24x4xf32> to vector<2x8x8x4xf32>
    %77 = vector.extract_strided_slice %75 {offsets = [0, 0, 8, 0], sizes = [2, 8, 8, 4], strides = [1, 1, 1, 1]} : vector<2x10x24x4xf32> to vector<2x8x8x4xf32>
    %78 = vector.extract_strided_slice %75 {offsets = [0, 0, 9, 0], sizes = [2, 8, 8, 4], strides = [1, 1, 1, 1]} : vector<2x10x24x4xf32> to vector<2x8x8x4xf32>
    %79 = vector.extract_strided_slice %75 {offsets = [0, 1, 7, 0], sizes = [2, 8, 8, 4], strides = [1, 1, 1, 1]} : vector<2x10x24x4xf32> to vector<2x8x8x4xf32>
    %80 = vector.extract_strided_slice %75 {offsets = [0, 1, 8, 0], sizes = [2, 8, 8, 4], strides = [1, 1, 1, 1]} : vector<2x10x24x4xf32> to vector<2x8x8x4xf32>
    %81 = vector.extract_strided_slice %75 {offsets = [0, 1, 9, 0], sizes = [2, 8, 8, 4], strides = [1, 1, 1, 1]} : vector<2x10x24x4xf32> to vector<2x8x8x4xf32>
    %82 = vector.extract_strided_slice %75 {offsets = [0, 2, 7, 0], sizes = [2, 8, 8, 4], strides = [1, 1, 1, 1]} : vector<2x10x24x4xf32> to vector<2x8x8x4xf32>
    %83 = vector.extract_strided_slice %75 {offsets = [0, 2, 8, 0], sizes = [2, 8, 8, 4], strides = [1, 1, 1, 1]} : vector<2x10x24x4xf32> to vector<2x8x8x4xf32>
    %84 = vector.extract_strided_slice %75 {offsets = [0, 2, 9, 0], sizes = [2, 8, 8, 4], strides = [1, 1, 1, 1]} : vector<2x10x24x4xf32> to vector<2x8x8x4xf32>
    %85 = tpu.concatenate %76, %77, %78, %79, %80, %81, %82, %83, %84 in 3 : vector<2x8x8x4xf32>, vector<2x8x8x4xf32>, vector<2x8x8x4xf32>, vector<2x8x8x4xf32>, vector<2x8x8x4xf32>, vector<2x8x8x4xf32>, vector<2x8x8x4xf32>, vector<2x8x8x4xf32>, vector<2x8x8x4xf32> -> vector<2x8x8x36xf32>
    %86 = vector.shape_cast %85 : vector<2x8x8x36xf32> to vector<128x36xf32>
    %87 = arith.truncf %86 : vector<128x36xf32> to vector<128x36xbf16>
    %c0_51 = arith.constant 0 : index
    %c0_52 = arith.constant 0 : index
    %c0_53 = arith.constant 0 : index
    %88 = vector.load %arg9[%c0_51, %c0_52, %c0_53] : memref<3x36x4xbf16, #tpu.memory_space<vmem>>, vector<1x36x4xbf16>
    %89 = vector.shape_cast %88 : vector<1x36x4xbf16> to vector<36x4xbf16>
    %cst_54 = arith.constant dense<0.000000e+00> : vector<128x4xf32>
    %90 = tpu.matmul %87, %89, %cst_54 {dimension_numbers = #tpu.dot_dimension_numbers<[1], [0], [0], [1], [0, 0, 1, 1], [], []>} : vector<128x36xbf16>, vector<36x4xbf16>, vector<128x4xf32> -> vector<128x4xf32>
    %91 = vector.shape_cast %90 : vector<128x4xf32> to vector<2x64x4xf32>
    %92 = arith.addf %67, %91 : vector<2x64x4xf32>
    %93 = vector.shape_cast %92 : vector<2x64x4xf32> to vector<2x8x8x4xf32>
    %c0_55 = arith.constant 0 : index
    %c1_56 = arith.constant 1 : index
    %c8_57 = arith.constant 8 : index
    %c0_58 = arith.constant 0 : index
    %94 = vector.load %arg14[%c0_55, %c1_56, %c8_57, %c0_58] : memref<2x10x24x4xf32, #tpu.memory_space<vmem>>, vector<2x8x8x4xf32>
    tpu.vector_store %arg14[%c0_55, %c1_56, %c8_57, %c0_58], %93 {strides = array<i32>} : memref<2x10x24x4xf32, #tpu.memory_space<vmem>>, vector<2x8x8x4xf32>,
    %c0_59 = arith.constant 0 : index
    %c0_60 = arith.constant 0 : index
    %c0_61 = arith.constant 0 : index
    %c0_62 = arith.constant 0 : index
    %95 = vector.load %arg14[%c0_59, %c0_60, %c0_61, %c0_62] : memref<2x10x24x4xf32, #tpu.memory_space<vmem>>, vector<2x10x24x4xf32>
    %96 = vector.extract_strided_slice %95 {offsets = [0, 0, 7, 0], sizes = [2, 8, 8, 4], strides = [1, 1, 1, 1]} : vector<2x10x24x4xf32> to vector<2x8x8x4xf32>
    %97 = vector.extract_strided_slice %95 {offsets = [0, 0, 8, 0], sizes = [2, 8, 8, 4], strides = [1, 1, 1, 1]} : vector<2x10x24x4xf32> to vector<2x8x8x4xf32>
    %98 = vector.extract_strided_slice %95 {offsets = [0, 0, 9, 0], sizes = [2, 8, 8, 4], strides = [1, 1, 1, 1]} : vector<2x10x24x4xf32> to vector<2x8x8x4xf32>
    %99 = vector.extract_strided_slice %95 {offsets = [0, 1, 7, 0], sizes = [2, 8, 8, 4], strides = [1, 1, 1, 1]} : vector<2x10x24x4xf32> to vector<2x8x8x4xf32>
    %100 = vector.extract_strided_slice %95 {offsets = [0, 1, 8, 0], sizes = [2, 8, 8, 4], strides = [1, 1, 1, 1]} : vector<2x10x24x4xf32> to vector<2x8x8x4xf32>
    %101 = vector.extract_strided_slice %95 {offsets = [0, 1, 9, 0], sizes = [2, 8, 8, 4], strides = [1, 1, 1, 1]} : vector<2x10x24x4xf32> to vector<2x8x8x4xf32>
    %102 = vector.extract_strided_slice %95 {offsets = [0, 2, 7, 0], sizes = [2, 8, 8, 4], strides = [1, 1, 1, 1]} : vector<2x10x24x4xf32> to vector<2x8x8x4xf32>
    %103 = vector.extract_strided_slice %95 {offsets = [0, 2, 8, 0], sizes = [2, 8, 8, 4], strides = [1, 1, 1, 1]} : vector<2x10x24x4xf32> to vector<2x8x8x4xf32>
    %104 = vector.extract_strided_slice %95 {offsets = [0, 2, 9, 0], sizes = [2, 8, 8, 4], strides = [1, 1, 1, 1]} : vector<2x10x24x4xf32> to vector<2x8x8x4xf32>
    %105 = tpu.concatenate %96, %97, %98, %99, %100, %101, %102, %103, %104 in 3 : vector<2x8x8x4xf32>, vector<2x8x8x4xf32>, vector<2x8x8x4xf32>, vector<2x8x8x4xf32>, vector<2x8x8x4xf32>, vector<2x8x8x4xf32>, vector<2x8x8x4xf32>, vector<2x8x8x4xf32>, vector<2x8x8x4xf32> -> vector<2x8x8x36xf32>
    %106 = vector.shape_cast %105 : vector<2x8x8x36xf32> to vector<128x36xf32>
    %107 = arith.truncf %106 : vector<128x36xf32> to vector<128x36xbf16>
    %c1_63 = arith.constant 1 : index
    %c0_64 = arith.constant 0 : index
    %c0_65 = arith.constant 0 : index
    %108 = vector.load %arg9[%c1_63, %c0_64, %c0_65] : memref<3x36x4xbf16, #tpu.memory_space<vmem>>, vector<1x36x4xbf16>
    %109 = vector.shape_cast %108 : vector<1x36x4xbf16> to vector<36x4xbf16>
    %cst_66 = arith.constant dense<0.000000e+00> : vector<128x4xf32>
    %110 = tpu.matmul %107, %109, %cst_66 {dimension_numbers = #tpu.dot_dimension_numbers<[1], [0], [0], [1], [0, 0, 1, 1], [], []>} : vector<128x36xbf16>, vector<36x4xbf16>, vector<128x4xf32> -> vector<128x4xf32>
    %111 = vector.shape_cast %110 : vector<128x4xf32> to vector<2x64x4xf32>
    %112 = arith.addf %72, %111 : vector<2x64x4xf32>
    %113 = vector.shape_cast %112 : vector<2x64x4xf32> to vector<2x8x8x4xf32>
    %c0_67 = arith.constant 0 : index
    %c1_68 = arith.constant 1 : index
    %c8_69 = arith.constant 8 : index
    %c0_70 = arith.constant 0 : index
    %114 = vector.load %arg14[%c0_67, %c1_68, %c8_69, %c0_70] : memref<2x10x24x4xf32, #tpu.memory_space<vmem>>, vector<2x8x8x4xf32>
    tpu.vector_store %arg14[%c0_67, %c1_68, %c8_69, %c0_70], %113 {strides = array<i32>} : memref<2x10x24x4xf32, #tpu.memory_space<vmem>>, vector<2x8x8x4xf32>,
    %c0_71 = arith.constant 0 : index
    %c0_72 = arith.constant 0 : index
    %c0_73 = arith.constant 0 : index
    %c0_74 = arith.constant 0 : index
    %115 = vector.load %arg14[%c0_71, %c0_72, %c0_73, %c0_74] : memref<2x10x24x4xf32, #tpu.memory_space<vmem>>, vector<2x10x24x4xf32>
    %116 = vector.extract_strided_slice %115 {offsets = [0, 0, 7, 0], sizes = [2, 8, 8, 4], strides = [1, 1, 1, 1]} : vector<2x10x24x4xf32> to vector<2x8x8x4xf32>
    %117 = vector.extract_strided_slice %115 {offsets = [0, 0, 8, 0], sizes = [2, 8, 8, 4], strides = [1, 1, 1, 1]} : vector<2x10x24x4xf32> to vector<2x8x8x4xf32>
    %118 = vector.extract_strided_slice %115 {offsets = [0, 0, 9, 0], sizes = [2, 8, 8, 4], strides = [1, 1, 1, 1]} : vector<2x10x24x4xf32> to vector<2x8x8x4xf32>
    %119 = vector.extract_strided_slice %115 {offsets = [0, 1, 7, 0], sizes = [2, 8, 8, 4], strides = [1, 1, 1, 1]} : vector<2x10x24x4xf32> to vector<2x8x8x4xf32>
    %120 = vector.extract_strided_slice %115 {offsets = [0, 1, 8, 0], sizes = [2, 8, 8, 4], strides = [1, 1, 1, 1]} : vector<2x10x24x4xf32> to vector<2x8x8x4xf32>
    %121 = vector.extract_strided_slice %115 {offsets = [0, 1, 9, 0], sizes = [2, 8, 8, 4], strides = [1, 1, 1, 1]} : vector<2x10x24x4xf32> to vector<2x8x8x4xf32>
    %122 = vector.extract_strided_slice %115 {offsets = [0, 2, 7, 0], sizes = [2, 8, 8, 4], strides = [1, 1, 1, 1]} : vector<2x10x24x4xf32> to vector<2x8x8x4xf32>
    %123 = vector.extract_strided_slice %115 {offsets = [0, 2, 8, 0], sizes = [2, 8, 8, 4], strides = [1, 1, 1, 1]} : vector<2x10x24x4xf32> to vector<2x8x8x4xf32>
    %124 = vector.extract_strided_slice %115 {offsets = [0, 2, 9, 0], sizes = [2, 8, 8, 4], strides = [1, 1, 1, 1]} : vector<2x10x24x4xf32> to vector<2x8x8x4xf32>
    %125 = tpu.concatenate %116, %117, %118, %119, %120, %121, %122, %123, %124 in 3 : vector<2x8x8x4xf32>, vector<2x8x8x4xf32>, vector<2x8x8x4xf32>, vector<2x8x8x4xf32>, vector<2x8x8x4xf32>, vector<2x8x8x4xf32>, vector<2x8x8x4xf32>, vector<2x8x8x4xf32>, vector<2x8x8x4xf32> -> vector<2x8x8x36xf32>
    %126 = vector.shape_cast %125 : vector<2x8x8x36xf32> to vector<128x36xf32>
    %127 = arith.truncf %126 : vector<128x36xf32> to vector<128x36xbf16>
    %c2_75 = arith.constant 2 : index
    %c0_76 = arith.constant 0 : index
    %c0_77 = arith.constant 0 : index
    %128 = vector.load %arg9[%c2_75, %c0_76, %c0_77] : memref<3x36x4xbf16, #tpu.memory_space<vmem>>, vector<1x36x4xbf16>
    %129 = vector.shape_cast %128 : vector<1x36x4xbf16> to vector<36x4xbf16>
    %cst_78 = arith.constant dense<0.000000e+00> : vector<128x4xf32>
    %130 = tpu.matmul %127, %129, %cst_78 {dimension_numbers = #tpu.dot_dimension_numbers<[1], [0], [0], [1], [0, 0, 1, 1], [], []>} : vector<128x36xbf16>, vector<36x4xbf16>, vector<128x4xf32> -> vector<128x4xf32>
    %131 = vector.shape_cast %130 : vector<128x4xf32> to vector<2x64x4xf32>
    %132 = vector.shape_cast %13 : vector<128x4xf32> to vector<2x64x4xf32>
    %cst_79 = arith.constant 0.000000e+00 : f32
    %133 = vector.broadcast %cst_79 : f32 to vector<128x4xf32>
    %134 = vector.extract_strided_slice %46 {offsets = [0, 0], sizes = [2, 4], strides = [1, 1]} : vector<2x16xf32> to vector<2x4xf32>
    %cst_80 = arith.constant 1.000000e+00 : f32
    %135 = vector.broadcast %cst_80 : f32 to vector<2x4xf32>
    %136 = arith.addf %134, %135 : vector<2x4xf32>
    %137 = vector.shape_cast %136 : vector<2x4xf32> to vector<2x1x4xf32>
    %138 = vector.broadcast %137 : vector<2x1x4xf32> to vector<2x64x4xf32>
    %139 = arith.mulf %138, %132 : vector<2x64x4xf32>
    %140 = vector.shape_cast %139 : vector<2x64x4xf32> to vector<128x4xf32>
    %c0_81 = arith.constant 0 : index
    %c0_82 = arith.constant 0 : index
    %141 = vector.load %arg10[%c0_81, %c0_82] : memref<1x16xf32, #tpu.memory_space<vmem>>, vector<1x4xf32>
    %142 = vector.broadcast %141 : vector<1x4xf32> to vector<128x4xf32>
    %143 = arith.mulf %140, %142 : vector<128x4xf32>
    %c0_83 = arith.constant 0 : index
    %c0_84 = arith.constant 0 : index
    %144 = vector.load %arg11[%c0_83, %c0_84] : memref<1x16xf32, #tpu.memory_space<vmem>>, vector<1x4xf32>
    %145 = vector.broadcast %144 : vector<1x4xf32> to vector<128x4xf32>
    %146 = arith.addf %143, %145 : vector<128x4xf32>
    %cst_85 = arith.constant 0.000000e+00 : f32
    %147 = vector.broadcast %cst_85 : f32 to vector<128x4xf32>
    %148 = arith.maximumf %146, %147 : vector<128x4xf32>
    %cst_86 = arith.constant 1.000000e+00 : f32
    %149 = vector.broadcast %cst_86 : f32 to vector<128x4xf32>
    %150 = arith.mulf %149, %148 : vector<128x4xf32>
    %151 = arith.addf %133, %150 : vector<128x4xf32>
    %152 = vector.extract_strided_slice %47 {offsets = [0, 0], sizes = [2, 4], strides = [1, 1]} : vector<2x16xf32> to vector<2x4xf32>
    %cst_87 = arith.constant 1.000000e+00 : f32
    %153 = vector.broadcast %cst_87 : f32 to vector<2x4xf32>
    %154 = arith.addf %152, %153 : vector<2x4xf32>
    %155 = vector.shape_cast %154 : vector<2x4xf32> to vector<2x1x4xf32>
    %156 = vector.broadcast %155 : vector<2x1x4xf32> to vector<2x64x4xf32>
    %157 = arith.mulf %156, %132 : vector<2x64x4xf32>
    %158 = vector.shape_cast %157 : vector<2x64x4xf32> to vector<128x4xf32>
    %c0_88 = arith.constant 0 : index
    %c0_89 = arith.constant 0 : index
    %159 = vector.load %arg10[%c0_88, %c0_89] : memref<1x16xf32, #tpu.memory_space<vmem>>, vector<1x4xf32>
    %160 = vector.broadcast %159 : vector<1x4xf32> to vector<128x4xf32>
    %161 = arith.mulf %158, %160 : vector<128x4xf32>
    %c0_90 = arith.constant 0 : index
    %c0_91 = arith.constant 0 : index
    %162 = vector.load %arg11[%c0_90, %c0_91] : memref<1x16xf32, #tpu.memory_space<vmem>>, vector<1x4xf32>
    %163 = vector.broadcast %162 : vector<1x4xf32> to vector<128x4xf32>
    %164 = arith.addf %161, %163 : vector<128x4xf32>
    %cst_92 = arith.constant 0.000000e+00 : f32
    %165 = vector.broadcast %cst_92 : f32 to vector<128x4xf32>
    %166 = arith.maximumf %164, %165 : vector<128x4xf32>
    %cst_93 = arith.constant 2.000000e+00 : f32
    %167 = vector.broadcast %cst_93 : f32 to vector<128x4xf32>
    %168 = arith.mulf %167, %166 : vector<128x4xf32>
    %169 = arith.addf %151, %168 : vector<128x4xf32>
    %170 = vector.extract_strided_slice %48 {offsets = [0, 0], sizes = [2, 4], strides = [1, 1]} : vector<2x16xf32> to vector<2x4xf32>
    %cst_94 = arith.constant 1.000000e+00 : f32
    %171 = vector.broadcast %cst_94 : f32 to vector<2x4xf32>
    %172 = arith.addf %170, %171 : vector<2x4xf32>
    %173 = vector.shape_cast %172 : vector<2x4xf32> to vector<2x1x4xf32>
    %174 = vector.broadcast %173 : vector<2x1x4xf32> to vector<2x64x4xf32>
    %175 = arith.mulf %174, %132 : vector<2x64x4xf32>
    %176 = vector.shape_cast %175 : vector<2x64x4xf32> to vector<128x4xf32>
    %c0_95 = arith.constant 0 : index
    %c0_96 = arith.constant 0 : index
    %177 = vector.load %arg10[%c0_95, %c0_96] : memref<1x16xf32, #tpu.memory_space<vmem>>, vector<1x4xf32>
    %178 = vector.broadcast %177 : vector<1x4xf32> to vector<128x4xf32>
    %179 = arith.mulf %176, %178 : vector<128x4xf32>
    %c0_97 = arith.constant 0 : index
    %c0_98 = arith.constant 0 : index
    %180 = vector.load %arg11[%c0_97, %c0_98] : memref<1x16xf32, #tpu.memory_space<vmem>>, vector<1x4xf32>
    %181 = vector.broadcast %180 : vector<1x4xf32> to vector<128x4xf32>
    %182 = arith.addf %179, %181 : vector<128x4xf32>
    %cst_99 = arith.constant 0.000000e+00 : f32
    %183 = vector.broadcast %cst_99 : f32 to vector<128x4xf32>
    %184 = arith.maximumf %182, %183 : vector<128x4xf32>
    %cst_100 = arith.constant 1.000000e+00 : f32
    %185 = vector.broadcast %cst_100 : f32 to vector<128x4xf32>
    %186 = arith.mulf %185, %184 : vector<128x4xf32>
    %187 = arith.addf %169, %186 : vector<128x4xf32>
    %cst_101 = arith.constant 2.500000e-01 : f32
    %188 = vector.broadcast %cst_101 : f32 to vector<128x4xf32>
    %189 = arith.mulf %187, %188 : vector<128x4xf32>
    %190 = vector.shape_cast %91 : vector<2x64x4xf32> to vector<128x4xf32>
    %c0_102 = arith.constant 0 : index
    %c4 = arith.constant 4 : index
    %191 = vector.load %arg10[%c0_102, %c4] : memref<1x16xf32, #tpu.memory_space<vmem>>, vector<1x4xf32>
    %192 = vector.broadcast %191 : vector<1x4xf32> to vector<128x4xf32>
    %193 = arith.mulf %190, %192 : vector<128x4xf32>
    %c0_103 = arith.constant 0 : index
    %c4_104 = arith.constant 4 : index
    %194 = vector.load %arg11[%c0_103, %c4_104] : memref<1x16xf32, #tpu.memory_space<vmem>>, vector<1x4xf32>
    %195 = vector.broadcast %194 : vector<1x4xf32> to vector<128x4xf32>
    %196 = arith.addf %193, %195 : vector<128x4xf32>
    %cst_105 = arith.constant 0.000000e+00 : f32
    %197 = vector.broadcast %cst_105 : f32 to vector<128x4xf32>
    %198 = arith.maximumf %196, %197 : vector<128x4xf32>
    %199 = vector.shape_cast %111 : vector<2x64x4xf32> to vector<128x4xf32>
    %c0_106 = arith.constant 0 : index
    %c8_107 = arith.constant 8 : index
    %200 = vector.load %arg10[%c0_106, %c8_107] : memref<1x16xf32, #tpu.memory_space<vmem>>, vector<1x4xf32>
    %201 = vector.broadcast %200 : vector<1x4xf32> to vector<128x4xf32>
    %202 = arith.mulf %199, %201 : vector<128x4xf32>
    %c0_108 = arith.constant 0 : index
    %c8_109 = arith.constant 8 : index
    %203 = vector.load %arg11[%c0_108, %c8_109] : memref<1x16xf32, #tpu.memory_space<vmem>>, vector<1x4xf32>
    %204 = vector.broadcast %203 : vector<1x4xf32> to vector<128x4xf32>
    %205 = arith.addf %202, %204 : vector<128x4xf32>
    %cst_110 = arith.constant 0.000000e+00 : f32
    %206 = vector.broadcast %cst_110 : f32 to vector<128x4xf32>
    %207 = arith.maximumf %205, %206 : vector<128x4xf32>
    %208 = vector.shape_cast %131 : vector<2x64x4xf32> to vector<128x4xf32>
    %c0_111 = arith.constant 0 : index
    %c12 = arith.constant 12 : index
    %209 = vector.load %arg10[%c0_111, %c12] : memref<1x16xf32, #tpu.memory_space<vmem>>, vector<1x4xf32>
    %210 = vector.broadcast %209 : vector<1x4xf32> to vector<128x4xf32>
    %211 = arith.mulf %208, %210 : vector<128x4xf32>
    %c0_112 = arith.constant 0 : index
    %c12_113 = arith.constant 12 : index
    %212 = vector.load %arg11[%c0_112, %c12_113] : memref<1x16xf32, #tpu.memory_space<vmem>>, vector<1x4xf32>
    %213 = vector.broadcast %212 : vector<1x4xf32> to vector<128x4xf32>
    %214 = arith.addf %211, %213 : vector<128x4xf32>
    %cst_114 = arith.constant 0.000000e+00 : f32
    %215 = vector.broadcast %cst_114 : f32 to vector<128x4xf32>
    %216 = arith.maximumf %214, %215 : vector<128x4xf32>
    %217 = tpu.concatenate %189, %198, %207, %216 in 1 : vector<128x4xf32>, vector<128x4xf32>, vector<128x4xf32>, vector<128x4xf32> -> vector<128x16xf32>
    %218 = arith.truncf %217 : vector<128x16xf32> to vector<128x16xbf16>
    %c0_115 = arith.constant 0 : index
    %c0_116 = arith.constant 0 : index
    %219 = vector.load %arg12[%c0_115, %c0_116] : memref<16x16xbf16, #tpu.memory_space<vmem>>, vector<16x16xbf16>
    %cst_117 = arith.constant dense<0.000000e+00> : vector<128x16xf32>
    %220 = tpu.matmul %218, %219, %cst_117 {dimension_numbers = #tpu.dot_dimension_numbers<[1], [0], [0], [1], [0, 0, 1, 1], [], []>} : vector<128x16xbf16>, vector<16x16xbf16>, vector<128x16xf32> -> vector<128x16xf32>
    %c0_118 = arith.constant 0 : index
    %c0_119 = arith.constant 0 : index
    %c0_120 = arith.constant 0 : index
    %c0_121 = arith.constant 0 : index
    %221 = vector.load %arg1[%c0_118, %c0_119, %c0_120, %c0_121] : memref<2x4x64x16xf32, #tpu.memory_space<vmem>>, vector<2x4x64x16xf32>
    %222 = vector.shape_cast %220 : vector<128x16xf32> to vector<2x64x16xf32>
    %223 = vector.shape_cast %222 : vector<2x64x16xf32> to vector<2x1x64x16xf32>
    %224 = vector.broadcast %223 : vector<2x1x64x16xf32> to vector<2x4x64x16xf32>
    %225 = arith.addf %221, %224 : vector<2x4x64x16xf32>
    %c0_122 = arith.constant 0 : index
    %c0_123 = arith.constant 0 : index
    %c0_124 = arith.constant 0 : index
    %c0_125 = arith.constant 0 : index
    %226 = vector.load %arg13[%c0_122, %c0_123, %c0_124, %c0_125] : memref<2x4x64x16xf32, #tpu.memory_space<vmem>>, vector<2x4x64x16xf32>
    tpu.vector_store %arg13[%c0_122, %c0_123, %c0_124, %c0_125], %225 {strides = array<i32>} : memref<2x4x64x16xf32, #tpu.memory_space<vmem>>, vector<2x4x64x16xf32>,
    return
  }
  func.func @transform_0(%arg0: i32) -> (i32, i32, i32, i32) {
    %c0_i32 = arith.constant 0 : i32
    %c0_i32_0 = arith.constant 0 : i32
    %c0_i32_1 = arith.constant 0 : i32
    %c0_i32_2 = arith.constant 0 : i32
    return %arg0, %c0_i32, %c0_i32_0, %c0_i32_1 : i32, i32, i32, i32
  }
  func.func @transform_1(%arg0: i32) -> (i32, i32, i32) {
    %c0_i32 = arith.constant 0 : i32
    %c0_i32_0 = arith.constant 0 : i32
    %c0_i32_1 = arith.constant 0 : i32
    %c0_i32_2 = arith.constant 0 : i32
    return %c0_i32, %c0_i32_0, %c0_i32_1 : i32, i32, i32
  }
  func.func @transform_2(%arg0: i32) -> (i32, i32) {
    %c0_i32 = arith.constant 0 : i32
    %c0_i32_0 = arith.constant 0 : i32
    %c0_i32_1 = arith.constant 0 : i32
    return %c0_i32, %c0_i32_0 : i32, i32
  }
  func.func @transform_3(%arg0: i32) -> (i32, i32) {
    %c0_i32 = arith.constant 0 : i32
    %c0_i32_0 = arith.constant 0 : i32
    %c0_i32_1 = arith.constant 0 : i32
    return %c0_i32, %c0_i32_0 : i32, i32
  }
  func.func @transform_4(%arg0: i32) -> (i32, i32) {
    %c0_i32 = arith.constant 0 : i32
    %c0_i32_0 = arith.constant 0 : i32
    %c0_i32_1 = arith.constant 0 : i32
    return %c0_i32, %c0_i32_0 : i32, i32
  }
  func.func @transform_5(%arg0: i32) -> (i32, i32) {
    %c0_i32 = arith.constant 0 : i32
    %c0_i32_0 = arith.constant 0 : i32
    %c0_i32_1 = arith.constant 0 : i32
    return %c0_i32, %c0_i32_0 : i32, i32
  }
  func.func @transform_6(%arg0: i32) -> (i32, i32) {
    %c0_i32 = arith.constant 0 : i32
    %c0_i32_0 = arith.constant 0 : i32
    %c0_i32_1 = arith.constant 0 : i32
    return %c0_i32, %c0_i32_0 : i32, i32
  }
  func.func @transform_7(%arg0: i32) -> (i32, i32) {
    %c0_i32 = arith.constant 0 : i32
    %c0_i32_0 = arith.constant 0 : i32
    %c0_i32_1 = arith.constant 0 : i32
    return %c0_i32, %c0_i32_0 : i32, i32
  }
  func.func @transform_8(%arg0: i32) -> (i32, i32, i32) {
    %c0_i32 = arith.constant 0 : i32
    %c0_i32_0 = arith.constant 0 : i32
    %c0_i32_1 = arith.constant 0 : i32
    %c0_i32_2 = arith.constant 0 : i32
    return %c0_i32, %c0_i32_0, %c0_i32_1 : i32, i32, i32
  }
  func.func @transform_9(%arg0: i32) -> (i32, i32) {
    %c0_i32 = arith.constant 0 : i32
    %c0_i32_0 = arith.constant 0 : i32
    %c0_i32_1 = arith.constant 0 : i32
    return %c0_i32, %c0_i32_0 : i32, i32
  }
  func.func @transform_10(%arg0: i32) -> (i32, i32) {
    %c0_i32 = arith.constant 0 : i32
    %c0_i32_0 = arith.constant 0 : i32
    %c0_i32_1 = arith.constant 0 : i32
    return %c0_i32, %c0_i32_0 : i32, i32
  }
  func.func @transform_11(%arg0: i32) -> (i32, i32) {
    %c0_i32 = arith.constant 0 : i32
    %c0_i32_0 = arith.constant 0 : i32
    %c0_i32_1 = arith.constant 0 : i32
    return %c0_i32, %c0_i32_0 : i32, i32
  }
  func.func @transform_12(%arg0: i32) -> (i32, i32, i32, i32) {
    %c0_i32 = arith.constant 0 : i32
    %c0_i32_0 = arith.constant 0 : i32
    %c0_i32_1 = arith.constant 0 : i32
    %c0_i32_2 = arith.constant 0 : i32
    return %arg0, %c0_i32, %c0_i32_0, %c0_i32_1 : i32, i32, i32, i32
  }
}

</mosaic_0001>

<llo_original>
// kernel: tile.33
$region0: #{tile.33}
  #allocation0 [shape = 's32[1]{0}', space=sflag, size = 0x4, scoped, tag = 'scoped memory for tile.33']
  %s0 = inlined_call_operand.vmem [shape: f32[4], index: 0, kind: input, shape index: {}]
  %s1 = inlined_call_operand.vmem [shape: f32[3,4], index: 1, kind: output, shape index: {}]
  // Predicated region
  $region2: #{tile.33} parent=0 // pred_check
    _
  $region3: #{tile.33} parent=0 // pred_check_branch
    %3 = sbr.rel (0) target = $region5
  $region4: #{tile.33} parent=0 // pred_region
    _
  $region5: #{tile.33} parent=0 // pred_fallthru
    _
  %v4 = vld [vmem:[%s0] ss:$0 sm:$0xff]
  %5 = vst [vmem:[%s1] sm:$0xf] %v4

// kernel: tile.38
$region0: #{tile.38}
  #allocation2 [shape = 's32[1]{0}', space=sflag, size = 0x4, scoped, tag = 'scoped memory for tile.38']
  %s0 = inlined_call_operand.hbm [shape: f32[16], index: 0, kind: input, shape index: {}]
  %s1 = inlined_call_operand.vmem [shape: f32[3,16], index: 1, kind: output, shape index: {}]
  $region1: #{tile.38} parent=0
    #allocation0 [shape = 'u8[512]{0}', space=vmem, size = 0x400, scoped, tag = 'operand span for operand 0']
    #allocation1 [shape = 's32[1]{0}', space=sflag, size = 0x4, scoped, tag = 'scoped memory for tile.38']
    %2 = vsyncpa [#allocation1], 0
    // Predicated region
    $region2: #{tile.38} parent=1 // pred_check
      _
    $region3: #{tile.38} parent=1 // pred_check_branch
      %4 = sbr.rel (0) target = $region5
    $region4: #{tile.38} parent=1 // pred_region
      %s6 = ssub.s32 16, 16
      %7 = vsyncadd [#allocation1], %s6
      %s9 = sshll.u32 [#allocation0], 4
      %s10 = int_to_ptr.vmem [resolvable:$true] %s9
      %12 = dma.hbm_to_vmem [thread:$0]  %s0, 16, %s10, [#allocation1]
    $region5: #{tile.38} parent=1 // pred_fallthru
      _
    // Predicated region
    $region6: #{tile.38} parent=1 // pred_check
      _
    $region7: #{tile.38} parent=1 // pred_check_branch
      %14 = sbr.rel (0) target = $region9
    $region8: #{tile.38} parent=1 // pred_region
      %15 = dma.done [#allocation1], 16
    $region9: #{tile.38} parent=1 // pred_fallthru
      _
    %v16 = vld [vmem:[#allocation0] ss:$0 sm:$0xff]
    %17 = vst [vmem:[%s1] sm:$0xf] %v16
    %18 = vsyncpa [#allocation1], 1

// kernel: tile.34
$region0: #{tile.34}
  %s0 = inlined_call_operand.vmem [shape: f32[3,4], index: 0, kind: input, shape index: {}]
  %s1 = inlined_call_operand.vmem [shape: f32[1,12], index: 1, kind: output, shape index: {}]
  $region1: #{tile.34} parent=0
    #allocation0 [shape = 'u8[4096]{0}', space=vmem, size = 0x1000, scoped, tag = 'scoped mem for output reshape']
    #allocation1 [shape = 'u8[4096]{0}', space=vmem, size = 0x1000, scoped, tag = 'scoped mem for input reshape']
    %s3 = sshllo.u32 0, 4
    %v4 = vld [vmem:[%s0] sm:%s3]
    %5 = vst [vmem:[#allocation1] sm:%s3] %v4
    %v6 = vld [vmem:[#allocation1] sm:$0x1]
    %vm7 = vcmask 31744
    %8 = vst.msk [vmem:[#allocation0] sm:$0x1] %vm7, %v6
    %s9 = scalar_lea.vmem [#allocation1], 2
    %v10 = vld [vmem:[%s9] sm:$0x1]
    %11 = vrot.lane.b32.xlu0 %v10, 8
    %v12 = vpop.permute.xlu0 %11
    %vm13 = vcmask 97344
    %14 = vst.msk [vmem:[#allocation0] sm:$0x1] %vm13, %v12
    %s15 = scalar_lea.vmem [#allocation1], 1
    %v16 = vld [vmem:[%s15] sm:$0x1]
    %17 = vrot.lane.b32.xlu0 %v16, 4
    %v18 = vpop.permute.xlu0 %17
    %vm19 = vcmask 64544
    %20 = vst.msk [vmem:[#allocation0] sm:$0x1] %vm19, %v18
    %s22 = sshllo.u32 0, 1
    %v24 = vld [vmem:[#allocation0] sm:%s22]
    %s25 = sshllo.u32 0, 1
    %26 = vst [vmem:[%s1] sm:%s25] %v24

// kernel: tile.39
$region0: #{tile.39}
  %s0 = inlined_call_operand.vmem [shape: f32[3,16], index: 0, kind: input, shape index: {}]
  %s1 = inlined_call_operand.vmem [shape: f32[1,48], index: 1, kind: output, shape index: {}]
  $region1: #{tile.39} parent=0
    #allocation0 [shape = 'u8[4096]{0}', space=vmem, size = 0x1000, scoped, tag = 'scoped mem for output reshape']
    #allocation1 [shape = 'u8[4096]{0}', space=vmem, size = 0x1000, scoped, tag = 'scoped mem for input reshape']
    %s3 = sshllo.u32 0, 4
    %v4 = vld [vmem:[%s0] sm:%s3]
    %5 = vst [vmem:[#allocation1] sm:%s3] %v4
    %v6 = vld [vmem:[#allocation1] sm:$0x1]
    %vm7 = vcmask 130048
    %8 = vst.msk [vmem:[#allocation0] sm:$0x1] %vm7, %v6
    %s9 = scalar_lea.vmem [#allocation1], 2
    %v10 = vld [vmem:[%s9] sm:$0x1]
    %11 = vrot.lane.b32.xlu0 %v10, 32
    %v12 = vpop.permute.xlu0 %11
    %vm13 = vcmask 392448
    %14 = vst.msk [vmem:[#allocation0] sm:$0x1] %vm13, %v12
    %s15 = scalar_lea.vmem [#allocation1], 1
    %v16 = vld [vmem:[%s15] sm:$0x1]
    %17 = vrot.lane.b32.xlu0 %v16, 16
    %v18 = vpop.permute.xlu0 %17
    %vm19 = vcmask 261248
    %20 = vst.msk [vmem:[#allocation0] sm:$0x1] %vm19, %v18
    %s22 = sshllo.u32 0, 1
    %v24 = vld [vmem:[#allocation0] sm:%s22]
    %s25 = sshllo.u32 0, 1
    %26 = vst [vmem:[%s1] sm:%s25] %v24

// kernel: tile.23
$region0: #{tile.23}
  #allocation2 [shape = 's32[1]{0}', space=sflag, size = 0x4, scoped, tag = 'scoped memory for tile.23']
  %s0 = inlined_call_operand.hbm [shape: f32[4], index: 0, kind: input, shape index: {}]
  %s1 = inlined_call_operand.vmem [shape: f32[3,4], index: 1, kind: output, shape index: {}]
  $region1: #{tile.23} parent=0
    #allocation0 [shape = 'u8[512]{0}', space=vmem, size = 0x400, scoped, tag = 'operand span for operand 0']
    #allocation1 [shape = 's32[1]{0}', space=sflag, size = 0x4, scoped, tag = 'scoped memory for tile.23']
    %2 = vsyncpa [#allocation1], 0
    // Predicated region
    $region2: #{tile.23} parent=1 // pred_check
      _
    $region3: #{tile.23} parent=1 // pred_check_branch
      %4 = sbr.rel (0) target = $region5
    $region4: #{tile.23} parent=1 // pred_region
      %s6 = ssub.s32 16, 16
      %7 = vsyncadd [#allocation1], %s6
      %s9 = sshll.u32 [#allocation0], 4
      %s10 = int_to_ptr.vmem [resolvable:$true] %s9
      %12 = dma.hbm_to_vmem [thread:$0]  %s0, 16, %s10, [#allocation1]
    $region5: #{tile.23} parent=1 // pred_fallthru
      _
    // Predicated region
    $region6: #{tile.23} parent=1 // pred_check
      _
    $region7: #{tile.23} parent=1 // pred_check_branch
      %14 = sbr.rel (0) target = $region9
    $region8: #{tile.23} parent=1 // pred_region
      %15 = dma.done [#allocation1], 16
    $region9: #{tile.23} parent=1 // pred_fallthru
      _
    %v16 = vld [vmem:[#allocation0] ss:$0 sm:$0xff]
    %17 = vst [vmem:[%s1] sm:$0xf] %v16
    %18 = vsyncpa [#allocation1], 1

// kernel: stfe_block_forward.1
$region0: #{stfe_block_forward.1}
  #allocation0 [shape = 'u32[]', space=smem, size = 0x4, offset = 0x4, fixed_abs, tag = 'smem constant byte address 0x4 - core index']
  #allocation1 [shape = 'u32[144,128]{1,0:T(1,128)}', space=vmem, size = 0x12000, scoped, tag = 'internal scratch']
  #allocation2 [shape = 'f32[2,10,24,4]{3,2,1,0:T(8,128)}', space=vmem, size = 0x3c000, scoped, tag = 'scratch operand']
  %s0 = inlined_call_operand.vmem [shape: f32[2,4,64,16], index: 0, kind: input, shape index: {}]
  %s1 = inlined_call_operand.vmem [shape: bf16[3,16,4], index: 1, kind: input, shape index: {}]
  %s2 = inlined_call_operand.vmem [shape: bf16[16,12], index: 2, kind: input, shape index: {}]
  %s3 = inlined_call_operand.vmem [shape: f32[1,12], index: 3, kind: input, shape index: {}]
  %s4 = inlined_call_operand.vmem [shape: f32[1,12], index: 4, kind: input, shape index: {}]
  %s5 = inlined_call_operand.vmem [shape: f32[1,12], index: 5, kind: input, shape index: {}]
  %s6 = inlined_call_operand.vmem [shape: bf16[12,48], index: 6, kind: input, shape index: {}]
  %s7 = inlined_call_operand.vmem [shape: f32[1,48], index: 7, kind: input, shape index: {}]
  %s8 = inlined_call_operand.vmem [shape: bf16[3,36,4], index: 8, kind: input, shape index: {}]
  %s9 = inlined_call_operand.vmem [shape: f32[1,16], index: 9, kind: input, shape index: {}]
  %s10 = inlined_call_operand.vmem [shape: f32[1,16], index: 10, kind: input, shape index: {}]
  %s11 = inlined_call_operand.vmem [shape: bf16[16,16], index: 11, kind: input, shape index: {}]
  %s12 = inlined_call_operand.hbm [shape: f32[2,4,64,16], index: 12, kind: output, shape index: {}]
  %s13 = sld [smem:[#allocation0]]
  $region58: #{stfe_block_forward.1} parent=0
    _
  %s15 = ssub.s32 1, %s13
  %s16 = scalar_select 0, %s15, %s13
  $region1: #{stfe_block_forward.1} parent=0
    #allocation3 [shape = 'u8[262144]{0}', space=vmem, size = 0x40000, scoped, tag = 'output window, operand 0, single buffered']
    #allocation4 [shape = 's32[1]{0}', space=sflag, size = 0x4, scoped, tag = 'scoped memory for stfe_block_forward.1']
    %17 = vsyncpa [#allocation4], 0
    // Predicated region
    $region2: #{stfe_block_forward.1} parent=1 // pred_check
      _
    $region3: #{stfe_block_forward.1} parent=1 // pred_check_branch
      %19 = sbr.rel (0) target = $region5
    $region4: #{stfe_block_forward.1} parent=1 // pred_region
      _
    $region5: #{stfe_block_forward.1} parent=1 // pred_fallthru
      _
    // Predicated region
    $region6: #{stfe_block_forward.1} parent=1 // pred_check
      _
    $region7: #{stfe_block_forward.1} parent=1 // pred_check_branch
      %21 = sbr.rel (0) target = $region9
    $region8: #{stfe_block_forward.1} parent=1 // pred_region
      _
    $region9: #{stfe_block_forward.1} parent=1 // pred_fallthru
      _
    // Predicated region
    $region10: #{stfe_block_forward.1} parent=1 // pred_check
      _
    $region11: #{stfe_block_forward.1} parent=1 // pred_check_branch
      %23 = sbr.rel (0) target = $region13
    $region12: #{stfe_block_forward.1} parent=1 // pred_region
      _
    $region13: #{stfe_block_forward.1} parent=1 // pred_fallthru
      _
    // Predicated region
    $region14: #{stfe_block_forward.1} parent=1 // pred_check
      _
    $region15: #{stfe_block_forward.1} parent=1 // pred_check_branch
      %25 = sbr.rel (0) target = $region17
    $region16: #{stfe_block_forward.1} parent=1 // pred_region
      _
    $region17: #{stfe_block_forward.1} parent=1 // pred_fallthru
      _
    // Predicated region
    $region18: #{stfe_block_forward.1} parent=1 // pred_check
      _
    $region19: #{stfe_block_forward.1} parent=1 // pred_check_branch
      %27 = sbr.rel (0) target = $region21
    $region20: #{stfe_block_forward.1} parent=1 // pred_region
      _
    $region21: #{stfe_block_forward.1} parent=1 // pred_fallthru
      _
    // Predicated region
    $region22: #{stfe_block_forward.1} parent=1 // pred_check
      _
    $region23: #{stfe_block_forward.1} parent=1 // pred_check_branch
      %29 = sbr.rel (0) target = $region25
    $region24: #{stfe_block_forward.1} parent=1 // pred_region
      _
    $region25: #{stfe_block_forward.1} parent=1 // pred_fallthru
      _
    // Predicated region
    $region26: #{stfe_block_forward.1} parent=1 // pred_check
      _
    $region27: #{stfe_block_forward.1} parent=1 // pred_check_branch
      %31 = sbr.rel (0) target = $region29
    $region28: #{stfe_block_forward.1} parent=1 // pred_region
      _
    $region29: #{stfe_block_forward.1} parent=1 // pred_fallthru
      _
    // Predicated region
    $region30: #{stfe_block_forward.1} parent=1 // pred_check
      _
    $region31: #{stfe_block_forward.1} parent=1 // pred_check_branch
      %33 = sbr.rel (0) target = $region33
    $region32: #{stfe_block_forward.1} parent=1 // pred_region
      _
    $region33: #{stfe_block_forward.1} parent=1 // pred_fallthru
      _
    // Predicated region
    $region34: #{stfe_block_forward.1} parent=1 // pred_check
      _
    $region35: #{stfe_block_forward.1} parent=1 // pred_check_branch
      %35 = sbr.rel (0) target = $region37
    $region36: #{stfe_block_forward.1} parent=1 // pred_region
      _
    $region37: #{stfe_block_forward.1} parent=1 // pred_fallthru
      _
    // Predicated region
    $region38: #{stfe_block_forward.1} parent=1 // pred_check
      _
    $region39: #{stfe_block_forward.1} parent=1 // pred_check_branch
      %37 = sbr.rel (0) target = $region41
    $region40: #{stfe_block_forward.1} parent=1 // pred_region
      _
    $region41: #{stfe_block_forward.1} parent=1 // pred_fallthru
      _
    // Predicated region
    $region42: #{stfe_block_forward.1} parent=1 // pred_check
      _
    $region43: #{stfe_block_forward.1} parent=1 // pred_check_branch
      %39 = sbr.rel (0) target = $region45
    $region44: #{stfe_block_forward.1} parent=1 // pred_region
      _
    $region45: #{stfe_block_forward.1} parent=1 // pred_fallthru
      _
    // Predicated region
    $region46: #{stfe_block_forward.1} parent=1 // pred_check
      _
    $region47: #{stfe_block_forward.1} parent=1 // pred_check_branch
      %41 = sbr.rel (0) target = $region49
    $region48: #{stfe_block_forward.1} parent=1 // pred_region
      _
    $region49: #{stfe_block_forward.1} parent=1 // pred_fallthru
      _
    %vm43 = vcmask 31744
    %44 = vst.msk [vmem:[#allocation2] sm:$0xff] %vm43, 0.0
    %45 = vst.msk [vmem:[#allocation2 + $0x8] sm:$0xff] %vm43, 0.0
    %46 = vst.msk [vmem:[#allocation2 + $0x10] sm:$0xff] %vm43, 0.0
    %47 = vst.msk [vmem:[#allocation2 + $0x18] sm:$0xff] %vm43, 0.0
    %48 = vst.msk [vmem:[#allocation2 + $0x20] sm:$0xff] %vm43, 0.0
    %49 = vst.msk [vmem:[#allocation2 + $0x28] sm:$0xff] %vm43, 0.0
    %50 = vst.msk [vmem:[#allocation2 + $0x30] sm:$0xff] %vm43, 0.0
    %51 = vst.msk [vmem:[#allocation2 + $0x38] sm:$0xff] %vm43, 0.0
    %52 = vst.msk [vmem:[#allocation2 + $0x40] sm:$0xff] %vm43, 0.0
    %53 = vst.msk [vmem:[#allocation2 + $0x48] sm:$0xff] %vm43, 0.0
    %54 = vst.msk [vmem:[#allocation2 + $0x50] sm:$0xff] %vm43, 0.0
    %55 = vst.msk [vmem:[#allocation2 + $0x58] sm:$0xff] %vm43, 0.0
    %56 = vst.msk [vmem:[#allocation2 + $0x60] sm:$0xff] %vm43, 0.0
    %57 = vst.msk [vmem:[#allocation2 + $0x68] sm:$0xff] %vm43, 0.0
    %58 = vst.msk [vmem:[#allocation2 + $0x70] sm:$0xff] %vm43, 0.0
    %59 = vst.msk [vmem:[#allocation2 + $0x78] sm:$0xff] %vm43, 0.0
    %60 = vst.msk [vmem:[#allocation2 + $0x80] sm:$0xff] %vm43, 0.0
    %61 = vst.msk [vmem:[#allocation2 + $0x88] sm:$0xff] %vm43, 0.0
    %62 = vst.msk [vmem:[#allocation2 + $0x90] sm:$0xff] %vm43, 0.0
    %63 = vst.msk [vmem:[#allocation2 + $0x98] sm:$0xff] %vm43, 0.0
    %64 = vst.msk [vmem:[#allocation2 + $0xa0] sm:$0xff] %vm43, 0.0
    %65 = vst.msk [vmem:[#allocation2 + $0xa8] sm:$0xff] %vm43, 0.0
    %66 = vst.msk [vmem:[#allocation2 + $0xb0] sm:$0xff] %vm43, 0.0
    %67 = vst.msk [vmem:[#allocation2 + $0xb8] sm:$0xff] %vm43, 0.0
    %68 = vst.msk [vmem:[#allocation2 + $0xc0] sm:$0xff] %vm43, 0.0
    %69 = vst.msk [vmem:[#allocation2 + $0xc8] sm:$0xff] %vm43, 0.0
    %70 = vst.msk [vmem:[#allocation2 + $0xd0] sm:$0xff] %vm43, 0.0
    %71 = vst.msk [vmem:[#allocation2 + $0xd8] sm:$0xff] %vm43, 0.0
    %72 = vst.msk [vmem:[#allocation2 + $0xe0] sm:$0xff] %vm43, 0.0
    %73 = vst.msk [vmem:[#allocation2 + $0xe8] sm:$0xff] %vm43, 0.0
    %74 = vst.msk [vmem:[#allocation2 + $0xf0] sm:$0xff] %vm43, 0.0
    %75 = vst.msk [vmem:[#allocation2 + $0xf8] sm:$0xff] %vm43, 0.0
    %76 = vst.msk [vmem:[#allocation2 + $0x100] sm:$0xff] %vm43, 0.0
    %77 = vst.msk [vmem:[#allocation2 + $0x108] sm:$0xff] %vm43, 0.0
    %78 = vst.msk [vmem:[#allocation2 + $0x110] sm:$0xff] %vm43, 0.0
    %79 = vst.msk [vmem:[#allocation2 + $0x118] sm:$0xff] %vm43, 0.0
    %80 = vst.msk [vmem:[#allocation2 + $0x120] sm:$0xff] %vm43, 0.0
    %81 = vst.msk [vmem:[#allocation2 + $0x128] sm:$0xff] %vm43, 0.0
    %82 = vst.msk [vmem:[#allocation2 + $0x130] sm:$0xff] %vm43, 0.0
    %83 = vst.msk [vmem:[#allocation2 + $0x138] sm:$0xff] %vm43, 0.0
    %84 = vst.msk [vmem:[#allocation2 + $0x140] sm:$0xff] %vm43, 0.0
    %85 = vst.msk [vmem:[#allocation2 + $0x148] sm:$0xff] %vm43, 0.0
    %86 = vst.msk [vmem:[#allocation2 + $0x150] sm:$0xff] %vm43, 0.0
    %87 = vst.msk [vmem:[#allocation2 + $0x158] sm:$0xff] %vm43, 0.0
    %88 = vst.msk [vmem:[#allocation2 + $0x160] sm:$0xff] %vm43, 0.0
    %89 = vst.msk [vmem:[#allocation2 + $0x168] sm:$0xff] %vm43, 0.0
    %90 = vst.msk [vmem:[#allocation2 + $0x170] sm:$0xff] %vm43, 0.0
    %91 = vst.msk [vmem:[#allocation2 + $0x178] sm:$0xff] %vm43, 0.0
    %92 = vst.msk [vmem:[#allocation2 + $0x180] sm:$0xff] %vm43, 0.0
    %93 = vst.msk [vmem:[#allocation2 + $0x188] sm:$0xff] %vm43, 0.0
    %94 = vst.msk [vmem:[#allocation2 + $0x190] sm:$0xff] %vm43, 0.0
    %95 = vst.msk [vmem:[#allocation2 + $0x198] sm:$0xff] %vm43, 0.0
    %96 = vst.msk [vmem:[#allocation2 + $0x1a0] sm:$0xff] %vm43, 0.0
    %97 = vst.msk [vmem:[#allocation2 + $0x1a8] sm:$0xff] %vm43, 0.0
    %98 = vst.msk [vmem:[#allocation2 + $0x1b0] sm:$0xff] %vm43, 0.0
    %99 = vst.msk [vmem:[#allocation2 + $0x1b8] sm:$0xff] %vm43, 0.0
    %100 = vst.msk [vmem:[#allocation2 + $0x1c0] sm:$0xff] %vm43, 0.0
    %101 = vst.msk [vmem:[#allocation2 + $0x1c8] sm:$0xff] %vm43, 0.0
    %102 = vst.msk [vmem:[#allocation2 + $0x1d0] sm:$0xff] %vm43, 0.0
    %103 = vst.msk [vmem:[#allocation2 + $0x1d8] sm:$0xff] %vm43, 0.0
    %v104 = vld [vmem:[%s0] sm:$0xff]
    %v105 = vld [vmem:[%s0 + $0x8] sm:$0xff]
    %v106 = vld [vmem:[%s0 + $0x10] sm:$0xff]
    %v107 = vld [vmem:[%s0 + $0x18] sm:$0xff]
    %v108 = vld [vmem:[%s0 + $0x20] sm:$0xff]
    %v109 = vld [vmem:[%s0 + $0x28] sm:$0xff]
    %v110 = vld [vmem:[%s0 + $0x30] sm:$0xff]
    %v111 = vld [vmem:[%s0 + $0x38] sm:$0xff]
    %v112 = vld [vmem:[%s0 + $0x40] sm:$0xff]
    %v113 = vld [vmem:[%s0 + $0x48] sm:$0xff]
    %v114 = vld [vmem:[%s0 + $0x50] sm:$0xff]
    %v115 = vld [vmem:[%s0 + $0x58] sm:$0xff]
    %v116 = vld [vmem:[%s0 + $0x60] sm:$0xff]
    %v117 = vld [vmem:[%s0 + $0x68] sm:$0xff]
    %v118 = vld [vmem:[%s0 + $0x70] sm:$0xff]
    %v119 = vld [vmem:[%s0 + $0x78] sm:$0xff]
    %v120 = vld [vmem:[%s0 + $0x80] sm:$0xff]
    %v121 = vld [vmem:[%s0 + $0x88] sm:$0xff]
    %v122 = vld [vmem:[%s0 + $0x90] sm:$0xff]
    %v123 = vld [vmem:[%s0 + $0x98] sm:$0xff]
    %v124 = vld [vmem:[%s0 + $0xa0] sm:$0xff]
    %v125 = vld [vmem:[%s0 + $0xa8] sm:$0xff]
    %v126 = vld [vmem:[%s0 + $0xb0] sm:$0xff]
    %v127 = vld [vmem:[%s0 + $0xb8] sm:$0xff]
    %v128 = vld [vmem:[%s0 + $0xc0] sm:$0xff]
    %v129 = vld [vmem:[%s0 + $0xc8] sm:$0xff]
    %v130 = vld [vmem:[%s0 + $0xd0] sm:$0xff]
    %v131 = vld [vmem:[%s0 + $0xd8] sm:$0xff]
    %v132 = vld [vmem:[%s0 + $0xe0] sm:$0xff]
    %v133 = vld [vmem:[%s0 + $0xe8] sm:$0xff]
    %v134 = vld [vmem:[%s0 + $0xf0] sm:$0xff]
    %v135 = vld [vmem:[%s0 + $0xf8] sm:$0xff]
    %v136 = vld [vmem:[%s0 + $0x100] sm:$0xff]
    %v137 = vld [vmem:[%s0 + $0x108] sm:$0xff]
    %v138 = vld [vmem:[%s0 + $0x110] sm:$0xff]
    %v139 = vld [vmem:[%s0 + $0x118] sm:$0xff]
    %v140 = vld [vmem:[%s0 + $0x120] sm:$0xff]
    %v141 = vld [vmem:[%s0 + $0x128] sm:$0xff]
    %v142 = vld [vmem:[%s0 + $0x130] sm:$0xff]
    %v143 = vld [vmem:[%s0 + $0x138] sm:$0xff]
    %v144 = vld [vmem:[%s0 + $0x140] sm:$0xff]
    %v145 = vld [vmem:[%s0 + $0x148] sm:$0xff]
    %v146 = vld [vmem:[%s0 + $0x150] sm:$0xff]
    %v147 = vld [vmem:[%s0 + $0x158] sm:$0xff]
    %v148 = vld [vmem:[%s0 + $0x160] sm:$0xff]
    %v149 = vld [vmem:[%s0 + $0x168] sm:$0xff]
    %v150 = vld [vmem:[%s0 + $0x170] sm:$0xff]
    %v151 = vld [vmem:[%s0 + $0x178] sm:$0xff]
    %v152 = vld [vmem:[%s0 + $0x180] sm:$0xff]
    %v153 = vld [vmem:[%s0 + $0x188] sm:$0xff]
    %v154 = vld [vmem:[%s0 + $0x190] sm:$0xff]
    %v155 = vld [vmem:[%s0 + $0x198] sm:$0xff]
    %v156 = vld [vmem:[%s0 + $0x1a0] sm:$0xff]
    %v157 = vld [vmem:[%s0 + $0x1a8] sm:$0xff]
    %v158 = vld [vmem:[%s0 + $0x1b0] sm:$0xff]
    %v159 = vld [vmem:[%s0 + $0x1b8] sm:$0xff]
    %v160 = vld [vmem:[%s0 + $0x1c0] sm:$0xff]
    %v161 = vld [vmem:[%s0 + $0x1c8] sm:$0xff]
    %v162 = vld [vmem:[%s0 + $0x1d0] sm:$0xff]
    %v163 = vld [vmem:[%s0 + $0x1d8] sm:$0xff]
    %v164 = vld [vmem:[%s0 + $0x1e0] sm:$0xff]
    %v165 = vld [vmem:[%s0 + $0x1e8] sm:$0xff]
    %v166 = vld [vmem:[%s0 + $0x1f0] sm:$0xff]
    %v167 = vld [vmem:[%s0 + $0x1f8] sm:$0xff]
    %vm168 = vcmask 130048
    %v169 = vsel %vm168, %v104, 0.0
    %v170 = vsel %vm168, %v112, 0.0
    %v171 = vadd.f32 %v169, %v170
    %v172 = vsel %vm168, %v120, 0.0
    %v173 = vadd.f32 %v171, %v172
    %v174 = vsel %vm168, %v128, 0.0
    %v175 = vadd.f32 %v173, %v174
    %v176 = vsel %vm168, %v105, 0.0
    %v177 = vsel %vm168, %v113, 0.0
    %v178 = vadd.f32 %v176, %v177
    %v179 = vsel %vm168, %v121, 0.0
    %v180 = vadd.f32 %v178, %v179
    %v181 = vsel %vm168, %v129, 0.0
    %v182 = vadd.f32 %v180, %v181
    %v183 = vsel %vm168, %v106, 0.0
    %v184 = vsel %vm168, %v114, 0.0
    %v185 = vadd.f32 %v183, %v184
    %v186 = vsel %vm168, %v122, 0.0
    %v187 = vadd.f32 %v185, %v186
    %v188 = vsel %vm168, %v130, 0.0
    %v189 = vadd.f32 %v187, %v188
    %v190 = vsel %vm168, %v107, 0.0
    %v191 = vsel %vm168, %v115, 0.0
    %v192 = vadd.f32 %v190, %v191
    %v193 = vsel %vm168, %v123, 0.0
    %v194 = vadd.f32 %v192, %v193
    %v195 = vsel %vm168, %v131, 0.0
    %v196 = vadd.f32 %v194, %v195
    %v197 = vsel %vm168, %v108, 0.0
    %v198 = vsel %vm168, %v116, 0.0
    %v199 = vadd.f32 %v197, %v198
    %v200 = vsel %vm168, %v124, 0.0
    %v201 = vadd.f32 %v199, %v200
    %v202 = vsel %vm168, %v132, 0.0
    %v203 = vadd.f32 %v201, %v202
    %v204 = vsel %vm168, %v109, 0.0
    %v205 = vsel %vm168, %v117, 0.0
    %v206 = vadd.f32 %v204, %v205
    %v207 = vsel %vm168, %v125, 0.0
    %v208 = vadd.f32 %v206, %v207
    %v209 = vsel %vm168, %v133, 0.0
    %v210 = vadd.f32 %v208, %v209
    %v211 = vsel %vm168, %v110, 0.0
    %v212 = vsel %vm168, %v118, 0.0
    %v213 = vadd.f32 %v211, %v212
    %v214 = vsel %vm168, %v126, 0.0
    %v215 = vadd.f32 %v213, %v214
    %v216 = vsel %vm168, %v134, 0.0
    %v217 = vadd.f32 %v215, %v216
    %v218 = vsel %vm168, %v111, 0.0
    %v219 = vsel %vm168, %v119, 0.0
    %v220 = vadd.f32 %v218, %v219
    %v221 = vsel %vm168, %v127, 0.0
    %v222 = vadd.f32 %v220, %v221
    %v223 = vsel %vm168, %v135, 0.0
    %v224 = vadd.f32 %v222, %v223
    %v225 = vsel %vm168, %v136, 0.0
    %v226 = vsel %vm168, %v144, 0.0
    %v227 = vadd.f32 %v225, %v226
    %v228 = vsel %vm168, %v152, 0.0
    %v229 = vadd.f32 %v227, %v228
    %v230 = vsel %vm168, %v160, 0.0
    %v231 = vadd.f32 %v229, %v230
    %v232 = vsel %vm168, %v137, 0.0
    %v233 = vsel %vm168, %v145, 0.0
    %v234 = vadd.f32 %v232, %v233
    %v235 = vsel %vm168, %v153, 0.0
    %v236 = vadd.f32 %v234, %v235
    %v237 = vsel %vm168, %v161, 0.0
    %v238 = vadd.f32 %v236, %v237
    %v239 = vsel %vm168, %v138, 0.0
    %v240 = vsel %vm168, %v146, 0.0
    %v241 = vadd.f32 %v239, %v240
    %v242 = vsel %vm168, %v154, 0.0
    %v243 = vadd.f32 %v241, %v242
    %v244 = vsel %vm168, %v162, 0.0
    %v245 = vadd.f32 %v243, %v244
    %v246 = vsel %vm168, %v139, 0.0
    %v247 = vsel %vm168, %v147, 0.0
    %v248 = vadd.f32 %v246, %v247
    %v249 = vsel %vm168, %v155, 0.0
    %v250 = vadd.f32 %v248, %v249
    %v251 = vsel %vm168, %v163, 0.0
    %v252 = vadd.f32 %v250, %v251
    %v253 = vsel %vm168, %v140, 0.0
    %v254 = vsel %vm168, %v148, 0.0
    %v255 = vadd.f32 %v253, %v254
    %v256 = vsel %vm168, %v156, 0.0
    %v257 = vadd.f32 %v255, %v256
    %v258 = vsel %vm168, %v164, 0.0
    %v259 = vadd.f32 %v257, %v258
    %v260 = vsel %vm168, %v141, 0.0
    %v261 = vsel %vm168, %v149, 0.0
    %v262 = vadd.f32 %v260, %v261
    %v263 = vsel %vm168, %v157, 0.0
    %v264 = vadd.f32 %v262, %v263
    %v265 = vsel %vm168, %v165, 0.0
    %v266 = vadd.f32 %v264, %v265
    %v267 = vsel %vm168, %v142, 0.0
    %v268 = vsel %vm168, %v150, 0.0
    %v269 = vadd.f32 %v267, %v268
    %v270 = vsel %vm168, %v158, 0.0
    %v271 = vadd.f32 %v269, %v270
    %v272 = vsel %vm168, %v166, 0.0
    %v273 = vadd.f32 %v271, %v272
    %v274 = vsel %vm168, %v143, 0.0
    %v275 = vsel %vm168, %v151, 0.0
    %v276 = vadd.f32 %v274, %v275
    %v277 = vsel %vm168, %v159, 0.0
    %v278 = vadd.f32 %v276, %v277
    %v279 = vsel %vm168, %v167, 0.0
    %v280 = vadd.f32 %v278, %v279
    %v281 = vrcp.pop 4.0
    %v282 = vmul.f32 %v175, %v281
    %v283 = vmul.f32 %v182, %v281
    %v284 = vmul.f32 %v189, %v281
    %v285 = vmul.f32 %v196, %v281
    %v286 = vmul.f32 %v203, %v281
    %v287 = vmul.f32 %v210, %v281
    %v288 = vmul.f32 %v217, %v281
    %v289 = vmul.f32 %v224, %v281
    %v290 = vmul.f32 %v231, %v281
    %v291 = vmul.f32 %v238, %v281
    %v292 = vmul.f32 %v245, %v281
    %v293 = vmul.f32 %v252, %v281
    %v294 = vmul.f32 %v259, %v281
    %v295 = vmul.f32 %v266, %v281
    %v296 = vmul.f32 %v273, %v281
    %v297 = vmul.f32 %v280, %v281
    %v298 = vsel %vm168, %v282, 0.0
    %v299 = vsel %vm168, %v283, 0.0
    %v300 = vadd.f32 %v298, %v299
    %v301 = vsel %vm168, %v284, 0.0
    %v302 = vadd.f32 %v300, %v301
    %v303 = vsel %vm168, %v285, 0.0
    %v304 = vadd.f32 %v302, %v303
    %v305 = vsel %vm168, %v286, 0.0
    %v306 = vadd.f32 %v304, %v305
    %v307 = vsel %vm168, %v287, 0.0
    %v308 = vadd.f32 %v306, %v307
    %v309 = vsel %vm168, %v288, 0.0
    %v310 = vadd.f32 %v308, %v309
    %v311 = vsel %vm168, %v289, 0.0
    %v312 = vadd.f32 %v310, %v311
    %v313 = vrot.slane %v312, 4
    %v314 = vadd.f32 %v312, %v313
    %v315 = vrot.slane %v314, 2
    %v316 = vadd.f32 %v314, %v315
    %v317 = vrot.slane %v316, 1
    %v318 = vadd.f32 %v316, %v317
    %v319 = vsel %vm168, %v290, 0.0
    %v320 = vsel %vm168, %v291, 0.0
    %v321 = vadd.f32 %v319, %v320
    %v322 = vsel %vm168, %v292, 0.0
    %v323 = vadd.f32 %v321, %v322
    %v324 = vsel %vm168, %v293, 0.0
    %v325 = vadd.f32 %v323, %v324
    %v326 = vsel %vm168, %v294, 0.0
    %v327 = vadd.f32 %v325, %v326
    %v328 = vsel %vm168, %v295, 0.0
    %v329 = vadd.f32 %v327, %v328
    %v330 = vsel %vm168, %v296, 0.0
    %v331 = vadd.f32 %v329, %v330
    %v332 = vsel %vm168, %v297, 0.0
    %v333 = vadd.f32 %v331, %v332
    %v334 = vrot.slane %v333, 4
    %v335 = vadd.f32 %v333, %v334
    %v336 = vrot.slane %v335, 2
    %v337 = vadd.f32 %v335, %v336
    %v338 = vrot.slane %v337, 1
    %v339 = vadd.f32 %v337, %v338
    %v340 = vrcp.pop 64.0
    %v341 = vmul.f32 %v318, %v340
    %v342 = vmul.f32 %v339, %v340
    %v343 = vpack.c.bf16 %v283, %v282
    %v344 = vpack.c.bf16 %v285, %v284
    %v345 = vpack.c.bf16 %v287, %v286
    %v346 = vpack.c.bf16 %v289, %v288
    %v347 = vpack.c.bf16 %v291, %v290
    %v348 = vpack.c.bf16 %v293, %v292
    %v349 = vpack.c.bf16 %v295, %v294
    %v350 = vpack.c.bf16 %v297, %v296
    %v351 = vld [vmem:[%s1] sm:$0xf]
    %v352 = vld [vmem:[%s1 + $0x4] sm:$0xf]
    %v355 = vunpack.c.l.b16 %v351
    %v356 = vunpack.c.l.b16 %v352
    %v357 = vpack.c.b16 %v356, %v355
    %v360 = vsel %vm168, %v343, 0
    %v363 = vsel %vm168, %v344, 0
    %v366 = vsel %vm168, %v345, 0
    %v369 = vsel %vm168, %v346, 0
    %v372 = vsel %vm168, %v347, 0
    %v375 = vsel %vm168, %v348, 0
    %v378 = vsel %vm168, %v349, 0
    %v381 = vsel %vm168, %v350, 0
    %383 = vmatprep.subr.bf16.mxu0 0
    %384 = vmatpush1.bf16.msra.mxu0 %v357
    %385 = vmatprep.subr.bf16.mxu0 0
    %386 = vmatpush1.bf16.msra.mxu0 0
    %387 = vmatprep.subr.bf16.mxu0 0
    %388 = vmatpush1.bf16.msra.mxu0 0
    %389 = vmatprep.subr.bf16.mxu0 0
    %390 = vmatpush1.bf16.msra.mxu0 0
    %391 = vmatprep.subr.bf16.mxu0 0
    %392 = vmatpush1.bf16.msra.mxu0 0
    %393 = vmatprep.subr.bf16.mxu0 0
    %394 = vmatpush1.bf16.msra.mxu0 0
    %395 = vmatprep.subr.bf16.mxu0 0
    %396 = vmatpush1.bf16.msra.mxu0 0
    %397 = vmatprep.subr.bf16.mxu0 0
    %398 = vmatpush1.bf16.msra.mxu0 0
    %399 = vmatprep.subr.bf16.mxu0 0
    %400 = vmatpush1.bf16.msra.mxu0 0
    %401 = vmatprep.subr.bf16.mxu0 0
    %402 = vmatpush1.bf16.msra.mxu0 0
    %403 = vmatprep.subr.bf16.mxu0 0
    %404 = vmatpush1.bf16.msra.mxu0 0
    %405 = vmatprep.subr.bf16.mxu0 0
    %406 = vmatpush1.bf16.msra.mxu0 0
    %407 = vmatprep.subr.bf16.mxu0 0
    %408 = vmatpush1.bf16.msra.mxu0 0
    %409 = vmatprep.subr.bf16.mxu0 0
    %410 = vmatpush1.bf16.msra.mxu0 0
    %411 = vmatprep.subr.bf16.mxu0 0
    %412 = vmatpush1.bf16.msra.mxu0 0
    %413 = vmatprep.subr.bf16.mxu0 0
    %414 = vmatpush1.bf16.msra.mxu0 0
    %415 = vmatprep.mubr.bf16.mxu0 0
    %416 = vmatmul.mubr.bf16.gmra.mrb[0].mxu0 %v360
    %v417 = vpop.f32.mrb[0].mxu0
    %v418 = vadd.f32 0.0, %v417
    %v419 = vpop.f32.mrb[0].mxu0
    %v420 = vpop.f32.mrb[0].mxu0
    %v421 = vadd.f32 0.0, %v420
    %v422 = vpop.f32.mrb[0].mxu0
    %423 = vmatprep.mubr.bf16.mxu0 0
    %424 = vmatmul.mubr.bf16.gmra.mrb[0].mxu0 %v363
    %v425 = vpop.f32.mrb[0].mxu0
    %v426 = vadd.f32 0.0, %v425
    %v427 = vpop.f32.mrb[0].mxu0
    %v428 = vpop.f32.mrb[0].mxu0
    %v429 = vadd.f32 0.0, %v428
    %v430 = vpop.f32.mrb[0].mxu0
    %431 = vmatprep.mubr.bf16.mxu0 0
    %432 = vmatmul.mubr.bf16.gmra.mrb[0].mxu0 %v366
    %v433 = vpop.f32.mrb[0].mxu0
    %v434 = vadd.f32 0.0, %v433
    %v435 = vpop.f32.mrb[0].mxu0
    %v436 = vpop.f32.mrb[0].mxu0
    %v437 = vadd.f32 0.0, %v436
    %v438 = vpop.f32.mrb[0].mxu0
    %439 = vmatprep.mubr.bf16.mxu0 0
    %440 = vmatmul.mubr.bf16.gmra.mrb[0].mxu0 %v369
    %v441 = vpop.f32.mrb[0].mxu0
    %v442 = vadd.f32 0.0, %v441
    %v443 = vpop.f32.mrb[0].mxu0
    %v444 = vpop.f32.mrb[0].mxu0
    %v445 = vadd.f32 0.0, %v444
    %v446 = vpop.f32.mrb[0].mxu0
    %447 = vmatprep.mubr.bf16.mxu0 0
    %448 = vmatmul.mubr.bf16.gmra.mrb[0].mxu0 %v372
    %v449 = vpop.f32.mrb[0].mxu0
    %v450 = vadd.f32 0.0, %v449
    %v451 = vpop.f32.mrb[0].mxu0
    %v452 = vpop.f32.mrb[0].mxu0
    %v453 = vadd.f32 0.0, %v452
    %v454 = vpop.f32.mrb[0].mxu0
    %455 = vmatprep.mubr.bf16.mxu0 0
    %456 = vmatmul.mubr.bf16.gmra.mrb[0].mxu0 %v375
    %v457 = vpop.f32.mrb[0].mxu0
    %v458 = vadd.f32 0.0, %v457
    %v459 = vpop.f32.mrb[0].mxu0
    %v460 = vpop.f32.mrb[0].mxu0
    %v461 = vadd.f32 0.0, %v460
    %v462 = vpop.f32.mrb[0].mxu0
    %463 = vmatprep.mubr.bf16.mxu0 0
    %464 = vmatmul.mubr.bf16.gmra.mrb[0].mxu0 %v378
    %v465 = vpop.f32.mrb[0].mxu0
    %v466 = vadd.f32 0.0, %v465
    %v467 = vpop.f32.mrb[0].mxu0
    %v468 = vpop.f32.mrb[0].mxu0
    %v469 = vadd.f32 0.0, %v468
    %v470 = vpop.f32.mrb[0].mxu0
    %471 = vmatprep.mubr.bf16.mxu0 0
    %472 = vmatmul.mubr.bf16.gmra.mrb[0].mxu0 %v381
    %v473 = vpop.f32.mrb[0].mxu0
    %v474 = vadd.f32 0.0, %v473
    %v475 = vpop.f32.mrb[0].mxu0
    %v476 = vpop.f32.mrb[0].mxu0
    %v477 = vadd.f32 0.0, %v476
    %v478 = vpop.f32.mrb[0].mxu0
    %479 = vdwg.mxu0
    %s480 = scalar_lea.vmem %s1, 8
    %v481 = vld [vmem:[%s480] sm:$0xf]
    %v482 = vld [vmem:[%s480 + $0x4] sm:$0xf]
    %v485 = vunpack.c.l.b16 %v481
    %v486 = vunpack.c.l.b16 %v482
    %v487 = vpack.c.b16 %v486, %v485
    %489 = vmatprep.subr.bf16.mxu0 0
    %490 = vmatpush1.bf16.msra.mxu0 %v487
    %491 = vmatprep.subr.bf16.mxu0 0
    %492 = vmatpush1.bf16.msra.mxu0 0
    %493 = vmatprep.subr.bf16.mxu0 0
    %494 = vmatpush1.bf16.msra.mxu0 0
    %495 = vmatprep.subr.bf16.mxu0 0
    %496 = vmatpush1.bf16.msra.mxu0 0
    %497 = vmatprep.subr.bf16.mxu0 0
    %498 = vmatpush1.bf16.msra.mxu0 0
    %499 = vmatprep.subr.bf16.mxu0 0
    %500 = vmatpush1.bf16.msra.mxu0 0
    %501 = vmatprep.subr.bf16.mxu0 0
    %502 = vmatpush1.bf16.msra.mxu0 0
    %503 = vmatprep.subr.bf16.mxu0 0
    %504 = vmatpush1.bf16.msra.mxu0 0
    %505 = vmatprep.subr.bf16.mxu0 0
    %506 = vmatpush1.bf16.msra.mxu0 0
    %507 = vmatprep.subr.bf16.mxu0 0
    %508 = vmatpush1.bf16.msra.mxu0 0
    %509 = vmatprep.subr.bf16.mxu0 0
    %510 = vmatpush1.bf16.msra.mxu0 0
    %511 = vmatprep.subr.bf16.mxu0 0
    %512 = vmatpush1.bf16.msra.mxu0 0
    %513 = vmatprep.subr.bf16.mxu0 0
    %514 = vmatpush1.bf16.msra.mxu0 0
    %515 = vmatprep.subr.bf16.mxu0 0
    %516 = vmatpush1.bf16.msra.mxu0 0
    %517 = vmatprep.subr.bf16.mxu0 0
    %518 = vmatpush1.bf16.msra.mxu0 0
    %519 = vmatprep.subr.bf16.mxu0 0
    %520 = vmatpush1.bf16.msra.mxu0 0
    %521 = vmatprep.mubr.bf16.mxu0 0
    %522 = vmatmul.mubr.bf16.gmra.mrb[0].mxu0 %v360
    %v523 = vpop.f32.mrb[0].mxu0
    %v524 = vadd.f32 0.0, %v523
    %v525 = vpop.f32.mrb[0].mxu0
    %v526 = vpop.f32.mrb[0].mxu0
    %v527 = vadd.f32 0.0, %v526
    %v528 = vpop.f32.mrb[0].mxu0
    %529 = vmatprep.mubr.bf16.mxu0 0
    %530 = vmatmul.mubr.bf16.gmra.mrb[0].mxu0 %v363
    %v531 = vpop.f32.mrb[0].mxu0
    %v532 = vadd.f32 0.0, %v531
    %v533 = vpop.f32.mrb[0].mxu0
    %v534 = vpop.f32.mrb[0].mxu0
    %v535 = vadd.f32 0.0, %v534
    %v536 = vpop.f32.mrb[0].mxu0
    %537 = vmatprep.mubr.bf16.mxu0 0
    %538 = vmatmul.mubr.bf16.gmra.mrb[0].mxu0 %v366
    %v539 = vpop.f32.mrb[0].mxu0
    %v540 = vadd.f32 0.0, %v539
    %v541 = vpop.f32.mrb[0].mxu0
    %v542 = vpop.f32.mrb[0].mxu0
    %v543 = vadd.f32 0.0, %v542
    %v544 = vpop.f32.mrb[0].mxu0
    %545 = vmatprep.mubr.bf16.mxu0 0
    %546 = vmatmul.mubr.bf16.gmra.mrb[0].mxu0 %v369
    %v547 = vpop.f32.mrb[0].mxu0
    %v548 = vadd.f32 0.0, %v547
    %v549 = vpop.f32.mrb[0].mxu0
    %v550 = vpop.f32.mrb[0].mxu0
    %v551 = vadd.f32 0.0, %v550
    %v552 = vpop.f32.mrb[0].mxu0
    %553 = vmatprep.mubr.bf16.mxu0 0
    %554 = vmatmul.mubr.bf16.gmra.mrb[0].mxu0 %v372
    %v555 = vpop.f32.mrb[0].mxu0
    %v556 = vadd.f32 0.0, %v555
    %v557 = vpop.f32.mrb[0].mxu0
    %v558 = vpop.f32.mrb[0].mxu0
    %v559 = vadd.f32 0.0, %v558
    %v560 = vpop.f32.mrb[0].mxu0
    %561 = vmatprep.mubr.bf16.mxu0 0
    %562 = vmatmul.mubr.bf16.gmra.mrb[0].mxu0 %v375
    %v563 = vpop.f32.mrb[0].mxu0
    %v564 = vadd.f32 0.0, %v563
    %v565 = vpop.f32.mrb[0].mxu0
    %v566 = vpop.f32.mrb[0].mxu0
    %v567 = vadd.f32 0.0, %v566
    %v568 = vpop.f32.mrb[0].mxu0
    %569 = vmatprep.mubr.bf16.mxu0 0
    %570 = vmatmul.mubr.bf16.gmra.mrb[0].mxu0 %v378
    %v571 = vpop.f32.mrb[0].mxu0
    %v572 = vadd.f32 0.0, %v571
    %v573 = vpop.f32.mrb[0].mxu0
    %v574 = vpop.f32.mrb[0].mxu0
    %v575 = vadd.f32 0.0, %v574
    %v576 = vpop.f32.mrb[0].mxu0
    %577 = vmatprep.mubr.bf16.mxu0 0
    %578 = vmatmul.mubr.bf16.gmra.mrb[0].mxu0 %v381
    %v579 = vpop.f32.mrb[0].mxu0
    %v580 = vadd.f32 0.0, %v579
    %v581 = vpop.f32.mrb[0].mxu0
    %v582 = vpop.f32.mrb[0].mxu0
    %v583 = vadd.f32 0.0, %v582
    %v584 = vpop.f32.mrb[0].mxu0
    %585 = vdwg.mxu0
    %s586 = scalar_lea.vmem %s1, 16
    %v587 = vld [vmem:[%s586] sm:$0xf]
    %v588 = vld [vmem:[%s586 + $0x4] sm:$0xf]
    %v591 = vunpack.c.l.b16 %v587
    %v592 = vunpack.c.l.b16 %v588
    %v593 = vpack.c.b16 %v592, %v591
    %595 = vmatprep.subr.bf16.mxu0 0
    %596 = vmatpush1.bf16.msra.mxu0 %v593
    %597 = vmatprep.subr.bf16.mxu0 0
    %598 = vmatpush1.bf16.msra.mxu0 0
    %599 = vmatprep.subr.bf16.mxu0 0
    %600 = vmatpush1.bf16.msra.mxu0 0
    %601 = vmatprep.subr.bf16.mxu0 0
    %602 = vmatpush1.bf16.msra.mxu0 0
    %603 = vmatprep.subr.bf16.mxu0 0
    %604 = vmatpush1.bf16.msra.mxu0 0
    %605 = vmatprep.subr.bf16.mxu0 0
    %606 = vmatpush1.bf16.msra.mxu0 0
    %607 = vmatprep.subr.bf16.mxu0 0
    %608 = vmatpush1.bf16.msra.mxu0 0
    %609 = vmatprep.subr.bf16.mxu0 0
    %610 = vmatpush1.bf16.msra.mxu0 0
    %611 = vmatprep.subr.bf16.mxu0 0
    %612 = vmatpush1.bf16.msra.mxu0 0
    %613 = vmatprep.subr.bf16.mxu0 0
    %614 = vmatpush1.bf16.msra.mxu0 0
    %615 = vmatprep.subr.bf16.mxu0 0
    %616 = vmatpush1.bf16.msra.mxu0 0
    %617 = vmatprep.subr.bf16.mxu0 0
    %618 = vmatpush1.bf16.msra.mxu0 0
    %619 = vmatprep.subr.bf16.mxu0 0
    %620 = vmatpush1.bf16.msra.mxu0 0
    %621 = vmatprep.subr.bf16.mxu0 0
    %622 = vmatpush1.bf16.msra.mxu0 0
    %623 = vmatprep.subr.bf16.mxu0 0
    %624 = vmatpush1.bf16.msra.mxu0 0
    %625 = vmatprep.subr.bf16.mxu0 0
    %626 = vmatpush1.bf16.msra.mxu0 0
    %627 = vmatprep.mubr.bf16.mxu0 0
    %628 = vmatmul.mubr.bf16.gmra.mrb[0].mxu0 %v360
    %v629 = vpop.f32.mrb[0].mxu0
    %v630 = vadd.f32 0.0, %v629
    %v631 = vpop.f32.mrb[0].mxu0
    %v632 = vpop.f32.mrb[0].mxu0
    %v633 = vadd.f32 0.0, %v632
    %v634 = vpop.f32.mrb[0].mxu0
    %635 = vmatprep.mubr.bf16.mxu0 0
    %636 = vmatmul.mubr.bf16.gmra.mrb[0].mxu0 %v363
    %v637 = vpop.f32.mrb[0].mxu0
    %v638 = vadd.f32 0.0, %v637
    %v639 = vpop.f32.mrb[0].mxu0
    %v640 = vpop.f32.mrb[0].mxu0
    %v641 = vadd.f32 0.0, %v640
    %v642 = vpop.f32.mrb[0].mxu0
    %643 = vmatprep.mubr.bf16.mxu0 0
    %644 = vmatmul.mubr.bf16.gmra.mrb[0].mxu0 %v366
    %v645 = vpop.f32.mrb[0].mxu0
    %v646 = vadd.f32 0.0, %v645
    %v647 = vpop.f32.mrb[0].mxu0
    %v648 = vpop.f32.mrb[0].mxu0
    %v649 = vadd.f32 0.0, %v648
    %v650 = vpop.f32.mrb[0].mxu0
    %651 = vmatprep.mubr.bf16.mxu0 0
    %652 = vmatmul.mubr.bf16.gmra.mrb[0].mxu0 %v369
    %v653 = vpop.f32.mrb[0].mxu0
    %v654 = vadd.f32 0.0, %v653
    %v655 = vpop.f32.mrb[0].mxu0
    %v656 = vpop.f32.mrb[0].mxu0
    %v657 = vadd.f32 0.0, %v656
    %v658 = vpop.f32.mrb[0].mxu0
    %659 = vmatprep.mubr.bf16.mxu0 0
    %660 = vmatmul.mubr.bf16.gmra.mrb[0].mxu0 %v372
    %v661 = vpop.f32.mrb[0].mxu0
    %v662 = vadd.f32 0.0, %v661
    %v663 = vpop.f32.mrb[0].mxu0
    %v664 = vpop.f32.mrb[0].mxu0
    %v665 = vadd.f32 0.0, %v664
    %v666 = vpop.f32.mrb[0].mxu0
    %667 = vmatprep.mubr.bf16.mxu0 0
    %668 = vmatmul.mubr.bf16.gmra.mrb[0].mxu0 %v375
    %v669 = vpop.f32.mrb[0].mxu0
    %v670 = vadd.f32 0.0, %v669
    %v671 = vpop.f32.mrb[0].mxu0
    %v672 = vpop.f32.mrb[0].mxu0
    %v673 = vadd.f32 0.0, %v672
    %v674 = vpop.f32.mrb[0].mxu0
    %675 = vmatprep.mubr.bf16.mxu0 0
    %676 = vmatmul.mubr.bf16.gmra.mrb[0].mxu0 %v378
    %v677 = vpop.f32.mrb[0].mxu0
    %v678 = vadd.f32 0.0, %v677
    %v679 = vpop.f32.mrb[0].mxu0
    %v680 = vpop.f32.mrb[0].mxu0
    %v681 = vadd.f32 0.0, %v680
    %v682 = vpop.f32.mrb[0].mxu0
    %683 = vmatprep.mubr.bf16.mxu0 0
    %684 = vmatmul.mubr.bf16.gmra.mrb[0].mxu0 %v381
    %v685 = vpop.f32.mrb[0].mxu0
    %v686 = vadd.f32 0.0, %v685
    %v687 = vpop.f32.mrb[0].mxu0
    %v688 = vpop.f32.mrb[0].mxu0
    %v689 = vadd.f32 0.0, %v688
    %v690 = vpop.f32.mrb[0].mxu0
    %691 = vdwg.mxu0
    %v692 = vpack.c.bf16 %v341, %v341
    %v693 = vpack.c.bf16 %v342, %v342
    %v694 = vld [vmem:[%s2] sm:$0xf]
    %v695 = vld [vmem:[%s2 + $0x4] sm:$0xf]
    %v696 = vld [vmem:[%s3] sm:$0x1]
    %v698 = vlaneseq
    %v699 = vshrl.u32 %v698, 7
    %v700 = vsub.s32 0, %v699
    %v701 = vrot.slane %v696, %v700
    %v705 = vunpack.c.l.b16 %v692
    %v706 = vunpack.c.l.b16 %v693
    %vm707 = vcmask 1041409
    %v708 = vsel %vm707, %v706, %v705
    %v709 = vpack.c.b16 %v708, %v708
    %v712 = vunpack.c.l.b16 %v694
    %v713 = vunpack.c.l.b16 %v695
    %v714 = vpack.c.b16 %v713, %v712
    %v717 = vsel %vm168, %v709, 0
    %719 = vmatprep.subr.bf16.mxu0 0
    %720 = vmatpush1.bf16.msra.mxu0 %v714
    %721 = vmatprep.subr.bf16.mxu0 0
    %722 = vmatpush1.bf16.msra.mxu0 0
    %723 = vmatprep.subr.bf16.mxu0 0
    %724 = vmatpush1.bf16.msra.mxu0 0
    %725 = vmatprep.subr.bf16.mxu0 0
    %726 = vmatpush1.bf16.msra.mxu0 0
    %727 = vmatprep.subr.bf16.mxu0 0
    %728 = vmatpush1.bf16.msra.mxu0 0
    %729 = vmatprep.subr.bf16.mxu0 0
    %730 = vmatpush1.bf16.msra.mxu0 0
    %731 = vmatprep.subr.bf16.mxu0 0
    %732 = vmatpush1.bf16.msra.mxu0 0
    %733 = vmatprep.subr.bf16.mxu0 0
    %734 = vmatpush1.bf16.msra.mxu0 0
    %735 = vmatprep.subr.bf16.mxu0 0
    %736 = vmatpush1.bf16.msra.mxu0 0
    %737 = vmatprep.subr.bf16.mxu0 0
    %738 = vmatpush1.bf16.msra.mxu0 0
    %739 = vmatprep.subr.bf16.mxu0 0
    %740 = vmatpush1.bf16.msra.mxu0 0
    %741 = vmatprep.subr.bf16.mxu0 0
    %742 = vmatpush1.bf16.msra.mxu0 0
    %743 = vmatprep.subr.bf16.mxu0 0
    %744 = vmatpush1.bf16.msra.mxu0 0
    %745 = vmatprep.subr.bf16.mxu0 0
    %746 = vmatpush1.bf16.msra.mxu0 0
    %747 = vmatprep.subr.bf16.mxu0 0
    %748 = vmatpush1.bf16.msra.mxu0 0
    %749 = vmatprep.subr.bf16.mxu0 0
    %750 = vmatpush1.bf16.msra.mxu0 0
    %751 = vmatprep.mubr.bf16.mxu0 0
    %752 = vmatmul.mubr.bf16.gmra.mrb[0].mxu0 %v717
    %v753 = vpop.f32.mrb[0].mxu0
    %v754 = vadd.f32 %v701, %v753
    %v755 = vpop.f32.mrb[0].mxu0
    %v756 = vpop.f32.mrb[0].mxu0
    %v757 = vpop.f32.mrb[0].mxu0
    %758 = vdwg.mxu0
    %v759 = vld [vmem:[%s4] sm:$0x1]
    %v761 = vlaneseq
    %v762 = vshrl.u32 %v761, 7
    %v763 = vsub.s32 0, %v762
    %v764 = vrot.slane %v759, %v763
    %v766 = vmul.f32 %v754, %v764
    %v767 = vld [vmem:[%s5] sm:$0x1]
    %v769 = vlaneseq
    %v770 = vshrl.u32 %v769, 7
    %v771 = vsub.s32 0, %v770
    %v772 = vrot.slane %v767, %v771
    %v774 = vadd.f32 %v766, %v772
    %v775 = vmax.f32 %v774, 0.0
    %v776 = vpack.c.bf16 %v775, %v775
    %v777 = vld [vmem:[%s6] sm:$0xf]
    %v778 = vld [vmem:[%s6 + $0x4] sm:$0x3]
    %v779 = vld [vmem:[%s7] sm:$0x1]
    %v781 = vlaneseq
    %v782 = vshrl.u32 %v781, 7
    %v783 = vsub.s32 0, %v782
    %v784 = vrot.slane %v779, %v783
    %v788 = vunpack.c.l.b16 %v777
    %v789 = vunpack.c.l.b16 %v778
    %v790 = vpack.c.b16 %v789, %v788
    %vm791 = vcmask 97280
    %v793 = vsel %vm791, %v776, 0
    %vm795 = vcmask 1045504
    %v797 = vsel %vm795, %v790, 0
    %799 = vmatprep.subr.bf16.mxu0 0
    %800 = vmatpush1.bf16.msra.mxu0 %v797
    %801 = vmatprep.subr.bf16.mxu0 0
    %802 = vmatpush1.bf16.msra.mxu0 0
    %803 = vmatprep.subr.bf16.mxu0 0
    %804 = vmatpush1.bf16.msra.mxu0 0
    %805 = vmatprep.subr.bf16.mxu0 0
    %806 = vmatpush1.bf16.msra.mxu0 0
    %807 = vmatprep.subr.bf16.mxu0 0
    %808 = vmatpush1.bf16.msra.mxu0 0
    %809 = vmatprep.subr.bf16.mxu0 0
    %810 = vmatpush1.bf16.msra.mxu0 0
    %811 = vmatprep.subr.bf16.mxu0 0
    %812 = vmatpush1.bf16.msra.mxu0 0
    %813 = vmatprep.subr.bf16.mxu0 0
    %814 = vmatpush1.bf16.msra.mxu0 0
    %815 = vmatprep.subr.bf16.mxu0 0
    %816 = vmatpush1.bf16.msra.mxu0 0
    %817 = vmatprep.subr.bf16.mxu0 0
    %818 = vmatpush1.bf16.msra.mxu0 0
    %819 = vmatprep.subr.bf16.mxu0 0
    %820 = vmatpush1.bf16.msra.mxu0 0
    %821 = vmatprep.subr.bf16.mxu0 0
    %822 = vmatpush1.bf16.msra.mxu0 0
    %823 = vmatprep.subr.bf16.mxu0 0
    %824 = vmatpush1.bf16.msra.mxu0 0
    %825 = vmatprep.subr.bf16.mxu0 0
    %826 = vmatpush1.bf16.msra.mxu0 0
    %827 = vmatprep.subr.bf16.mxu0 0
    %828 = vmatpush1.bf16.msra.mxu0 0
    %829 = vmatprep.subr.bf16.mxu0 0
    %830 = vmatpush1.bf16.msra.mxu0 0
    %831 = vmatprep.mubr.bf16.mxu0 0
    %832 = vmatmul.mubr.bf16.gmra.mrb[0].mxu0 %v793
    %v833 = vpop.f32.mrb[0].mxu0
    %v834 = vadd.f32 %v784, %v833
    %v835 = vpop.f32.mrb[0].mxu0
    %v836 = vpop.f32.mrb[0].mxu0
    %v837 = vpop.f32.mrb[0].mxu0
    %838 = vdwg.mxu0
    %v839 = vsub.f32 0.0, %v834
    %v840 = vmul.f32 %v839, 1.442695
    %v841 = vpow.pop %v840
    %v842 = vadd.f32 %v841, 1.0
    %v843 = vrcp.pop %v842
    %v844 = vadd.f32 %v843, 0.0
    %v845 = vmul.f32 %v843, 2.0
    %847 = vrot.lane.b32.xlu0 %v845, 112
    %v848 = vpop.permute.xlu0 %847
    %v850 = vadd.f32 %v844, %v848
    %852 = vrot.lane.b32.xlu0 %v843, 96
    %v853 = vpop.permute.xlu0 %852
    %v855 = vadd.f32 %v850, %v853
    %v856 = vmul.f32 %v855, 0.25
    %v857 = vadd.f32 %v856, 1.0
    %v860 = vunpack.c.l.s4 1966171168
    %v861 = vunpack.c.0.s8 %v860
    %v862 = vlaneseq
    %v863 = vshrl.u32 %v862, 7
    %v864 = vsub.s32 %v861, %v863
    %v865 = vrot.slane %v857, %v864
    %v866 = vcombine.high %v865, %v865
    %v868 = vunpack.c.l.s4 1966171168
    %v869 = vunpack.c.0.s8 %v868
    %v870 = vlaneseq
    %v871 = vshrl.u32 %v870, 7
    %v872 = vsub.s32 %v869, %v871
    %v873 = vrot.slane %v865, %v872
    %v875 = vunpack.c.l.s4 1966171168
    %v876 = vunpack.c.0.s8 %v875
    %v877 = vlaneseq
    %v878 = vshrl.u32 %v877, 7
    %v879 = vsub.s32 %v876, %v878
    %v880 = vrot.slane %v866, %v879
    %v881 = vlaneseq
    %v882 = vshrl.u32 %v881, 7
    %v883 = vsub.s32 0, %v882
    %v884 = vrot.slane %v873, %v883
    %v885 = vlaneseq
    %v886 = vshrl.u32 %v885, 7
    %v887 = vsub.s32 0, %v886
    %v888 = vrot.slane %v880, %v887
    %907 = vrot.lane.b32.xlu0 %v524, 4
    %v908 = vpop.permute.xlu0 %907
    %909 = vrot.lane.b32.xlu0 %v527, 4
    %v910 = vpop.permute.xlu0 %909
    %911 = vrot.lane.b32.xlu0 %v532, 4
    %v912 = vpop.permute.xlu0 %911
    %913 = vrot.lane.b32.xlu0 %v535, 4
    %v914 = vpop.permute.xlu0 %913
    %915 = vrot.lane.b32.xlu0 %v540, 4
    %v916 = vpop.permute.xlu0 %915
    %917 = vrot.lane.b32.xlu0 %v543, 4
    %v918 = vpop.permute.xlu0 %917
    %919 = vrot.lane.b32.xlu0 %v548, 4
    %v920 = vpop.permute.xlu0 %919
    %921 = vrot.lane.b32.xlu0 %v551, 4
    %v922 = vpop.permute.xlu0 %921
    %923 = vrot.lane.b32.xlu0 %v556, 4
    %v924 = vpop.permute.xlu0 %923
    %925 = vrot.lane.b32.xlu0 %v559, 4
    %v926 = vpop.permute.xlu0 %925
    %927 = vrot.lane.b32.xlu0 %v564, 4
    %v928 = vpop.permute.xlu0 %927
    %929 = vrot.lane.b32.xlu0 %v567, 4
    %v930 = vpop.permute.xlu0 %929
    %931 = vrot.lane.b32.xlu0 %v572, 4
    %v932 = vpop.permute.xlu0 %931
    %933 = vrot.lane.b32.xlu0 %v575, 4
    %v934 = vpop.permute.xlu0 %933
    %935 = vrot.lane.b32.xlu0 %v580, 4
    %v936 = vpop.permute.xlu0 %935
    %937 = vrot.lane.b32.xlu0 %v583, 4
    %v938 = vpop.permute.xlu0 %937
    %v955 = vmul.f32 %v884, %v908
    %v956 = vmul.f32 %v884, %v910
    %v957 = vmul.f32 %v884, %v912
    %v958 = vmul.f32 %v884, %v914
    %v959 = vmul.f32 %v884, %v916
    %v960 = vmul.f32 %v884, %v918
    %v961 = vmul.f32 %v884, %v920
    %v962 = vmul.f32 %v884, %v922
    %v963 = vmul.f32 %v888, %v924
    %v964 = vmul.f32 %v888, %v926
    %v965 = vmul.f32 %v888, %v928
    %v966 = vmul.f32 %v888, %v930
    %v967 = vmul.f32 %v888, %v932
    %v968 = vmul.f32 %v888, %v934
    %v969 = vmul.f32 %v888, %v936
    %v970 = vmul.f32 %v888, %v938
    %987 = vrot.lane.b32.xlu0 %v630, 8
    %v988 = vpop.permute.xlu0 %987
    %989 = vrot.lane.b32.xlu0 %v633, 8
    %v990 = vpop.permute.xlu0 %989
    %991 = vrot.lane.b32.xlu0 %v638, 8
    %v992 = vpop.permute.xlu0 %991
    %993 = vrot.lane.b32.xlu0 %v641, 8
    %v994 = vpop.permute.xlu0 %993
    %995 = vrot.lane.b32.xlu0 %v646, 8
    %v996 = vpop.permute.xlu0 %995
    %997 = vrot.lane.b32.xlu0 %v649, 8
    %v998 = vpop.permute.xlu0 %997
    %999 = vrot.lane.b32.xlu0 %v654, 8
    %v1000 = vpop.permute.xlu0 %999
    %1001 = vrot.lane.b32.xlu0 %v657, 8
    %v1002 = vpop.permute.xlu0 %1001
    %1003 = vrot.lane.b32.xlu0 %v662, 8
    %v1004 = vpop.permute.xlu0 %1003
    %1005 = vrot.lane.b32.xlu0 %v665, 8
    %v1006 = vpop.permute.xlu0 %1005
    %1007 = vrot.lane.b32.xlu0 %v670, 8
    %v1008 = vpop.permute.xlu0 %1007
    %1009 = vrot.lane.b32.xlu0 %v673, 8
    %v1010 = vpop.permute.xlu0 %1009
    %1011 = vrot.lane.b32.xlu0 %v678, 8
    %v1012 = vpop.permute.xlu0 %1011
    %1013 = vrot.lane.b32.xlu0 %v681, 8
    %v1014 = vpop.permute.xlu0 %1013
    %1015 = vrot.lane.b32.xlu0 %v686, 8
    %v1016 = vpop.permute.xlu0 %1015
    %1017 = vrot.lane.b32.xlu0 %v689, 8
    %v1018 = vpop.permute.xlu0 %1017
    %v1035 = vmul.f32 %v884, %v988
    %v1036 = vmul.f32 %v884, %v990
    %v1037 = vmul.f32 %v884, %v992
    %v1038 = vmul.f32 %v884, %v994
    %v1039 = vmul.f32 %v884, %v996
    %v1040 = vmul.f32 %v884, %v998
    %v1041 = vmul.f32 %v884, %v1000
    %v1042 = vmul.f32 %v884, %v1002
    %v1043 = vmul.f32 %v888, %v1004
    %v1044 = vmul.f32 %v888, %v1006
    %v1045 = vmul.f32 %v888, %v1008
    %v1046 = vmul.f32 %v888, %v1010
    %v1047 = vmul.f32 %v888, %v1012
    %v1048 = vmul.f32 %v888, %v1014
    %v1049 = vmul.f32 %v888, %v1016
    %v1050 = vmul.f32 %v888, %v1018
    %1067 = vrot.lane.b32.xlu0 %v955, 124
    %v1068 = vpop.permute.xlu0 %1067
    %1069 = vrot.lane.b32.xlu0 %v956, 124
    %v1070 = vpop.permute.xlu0 %1069
    %1071 = vrot.lane.b32.xlu0 %v957, 124
    %v1072 = vpop.permute.xlu0 %1071
    %1073 = vrot.lane.b32.xlu0 %v958, 124
    %v1074 = vpop.permute.xlu0 %1073
    %1075 = vrot.lane.b32.xlu0 %v959, 124
    %v1076 = vpop.permute.xlu0 %1075
    %1077 = vrot.lane.b32.xlu0 %v960, 124
    %v1078 = vpop.permute.xlu0 %1077
    %1079 = vrot.lane.b32.xlu0 %v961, 124
    %v1080 = vpop.permute.xlu0 %1079
    %1081 = vrot.lane.b32.xlu0 %v962, 124
    %v1082 = vpop.permute.xlu0 %1081
    %1083 = vrot.lane.b32.xlu0 %v963, 124
    %v1084 = vpop.permute.xlu0 %1083
    %1085 = vrot.lane.b32.xlu0 %v964, 124
    %v1086 = vpop.permute.xlu0 %1085
    %1087 = vrot.lane.b32.xlu0 %v965, 124
    %v1088 = vpop.permute.xlu0 %1087
    %1089 = vrot.lane.b32.xlu0 %v966, 124
    %v1090 = vpop.permute.xlu0 %1089
    %1091 = vrot.lane.b32.xlu0 %v967, 124
    %v1092 = vpop.permute.xlu0 %1091
    %1093 = vrot.lane.b32.xlu0 %v968, 124
    %v1094 = vpop.permute.xlu0 %1093
    %1095 = vrot.lane.b32.xlu0 %v969, 124
    %v1096 = vpop.permute.xlu0 %1095
    %1097 = vrot.lane.b32.xlu0 %v970, 124
    %v1098 = vpop.permute.xlu0 %1097
    %s1115 = scalar_lea.vmem [#allocation2], 24
    %1116 = vst.msk [vmem:[%s1115 + $0x8] sm:$0xff] %vm43, %v1068
    %1117 = vst.msk [vmem:[%s1115 + $0x20] sm:$0xff] %vm43, %v1070
    %1118 = vst.msk [vmem:[%s1115 + $0x38] sm:$0xff] %vm43, %v1072
    %1119 = vst.msk [vmem:[%s1115 + $0x50] sm:$0xff] %vm43, %v1074
    %1120 = vst.msk [vmem:[%s1115 + $0x68] sm:$0xff] %vm43, %v1076
    %1121 = vst.msk [vmem:[%s1115 + $0x80] sm:$0xff] %vm43, %v1078
    %1122 = vst.msk [vmem:[%s1115 + $0x98] sm:$0xff] %vm43, %v1080
    %1123 = vst.msk [vmem:[%s1115 + $0xb0] sm:$0xff] %vm43, %v1082
    %1124 = vst.msk [vmem:[%s1115 + $0xf8] sm:$0xff] %vm43, %v1084
    %1125 = vst.msk [vmem:[%s1115 + $0x110] sm:$0xff] %vm43, %v1086
    %1126 = vst.msk [vmem:[%s1115 + $0x128] sm:$0xff] %vm43, %v1088
    %1127 = vst.msk [vmem:[%s1115 + $0x140] sm:$0xff] %vm43, %v1090
    %1128 = vst.msk [vmem:[%s1115 + $0x158] sm:$0xff] %vm43, %v1092
    %1129 = vst.msk [vmem:[%s1115 + $0x170] sm:$0xff] %vm43, %v1094
    %1130 = vst.msk [vmem:[%s1115 + $0x188] sm:$0xff] %vm43, %v1096
    %1131 = vst.msk [vmem:[%s1115 + $0x1a0] sm:$0xff] %vm43, %v1098
    %v1132 = vld [vmem:[#allocation2] sm:$0xff]
    %v1133 = vld [vmem:[#allocation2 + $0x8] sm:$0xff]
    %v1134 = vld [vmem:[#allocation2 + $0x10] sm:$0xff]
    %v1135 = vld [vmem:[#allocation2 + $0x18] sm:$0xff]
    %v1136 = vld [vmem:[#allocation2 + $0x20] sm:$0xff]
    %v1137 = vld [vmem:[#allocation2 + $0x28] sm:$0xff]
    %v1138 = vld [vmem:[#allocation2 + $0x30] sm:$0xff]
    %v1139 = vld [vmem:[#allocation2 + $0x38] sm:$0xff]
    %v1140 = vld [vmem:[#allocation2 + $0x40] sm:$0xff]
    %v1141 = vld [vmem:[#allocation2 + $0x48] sm:$0xff]
    %v1142 = vld [vmem:[#allocation2 + $0x50] sm:$0xff]
    %v1143 = vld [vmem:[#allocation2 + $0x58] sm:$0xff]
    %v1144 = vld [vmem:[#allocation2 + $0x60] sm:$0xff]
    %v1145 = vld [vmem:[#allocation2 + $0x68] sm:$0xff]
    %v1146 = vld [vmem:[#allocation2 + $0x70] sm:$0xff]
    %v1147 = vld [vmem:[#allocation2 + $0x78] sm:$0xff]
    %v1148 = vld [vmem:[#allocation2 + $0x80] sm:$0xff]
    %v1149 = vld [vmem:[#allocation2 + $0x88] sm:$0xff]
    %v1150 = vld [vmem:[#allocation2 + $0x90] sm:$0xff]
    %v1151 = vld [vmem:[#allocation2 + $0x98] sm:$0xff]
    %v1152 = vld [vmem:[#allocation2 + $0xa0] sm:$0xff]
    %v1153 = vld [vmem:[#allocation2 + $0xa8] sm:$0xff]
    %v1154 = vld [vmem:[#allocation2 + $0xb0] sm:$0xff]
    %v1155 = vld [vmem:[#allocation2 + $0xb8] sm:$0xff]
    %v1156 = vld [vmem:[#allocation2 + $0xc0] sm:$0xff]
    %v1157 = vld [vmem:[#allocation2 + $0xc8] sm:$0xff]
    %v1158 = vld [vmem:[#allocation2 + $0xd0] sm:$0xff]
    %v1159 = vld [vmem:[#allocation2 + $0xd8] sm:$0xff]
    %v1160 = vld [vmem:[#allocation2 + $0xe0] sm:$0xff]
    %v1161 = vld [vmem:[#allocation2 + $0xe8] sm:$0xff]
    %v1162 = vld [vmem:[#allocation2 + $0xf0] sm:$0xff]
    %v1163 = vld [vmem:[#allocation2 + $0xf8] sm:$0xff]
    %v1164 = vld [vmem:[#allocation2 + $0x100] sm:$0xff]
    %v1165 = vld [vmem:[#allocation2 + $0x108] sm:$0xff]
    %v1166 = vld [vmem:[#allocation2 + $0x110] sm:$0xff]
    %v1167 = vld [vmem:[#allocation2 + $0x118] sm:$0xff]
    %v1168 = vld [vmem:[#allocation2 + $0x120] sm:$0xff]
    %v1169 = vld [vmem:[#allocation2 + $0x128] sm:$0xff]
    %v1170 = vld [vmem:[#allocation2 + $0x130] sm:$0xff]
    %v1171 = vld [vmem:[#allocation2 + $0x138] sm:$0xff]
    %v1172 = vld [vmem:[#allocation2 + $0x140] sm:$0xff]
    %v1173 = vld [vmem:[#allocation2 + $0x148] sm:$0xff]
    %v1174 = vld [vmem:[#allocation2 + $0x150] sm:$0xff]
    %v1175 = vld [vmem:[#allocation2 + $0x158] sm:$0xff]
    %v1176 = vld [vmem:[#allocation2 + $0x160] sm:$0xff]
    %v1177 = vld [vmem:[#allocation2 + $0x168] sm:$0xff]
    %v1178 = vld [vmem:[#allocation2 + $0x170] sm:$0xff]
    %v1179 = vld [vmem:[#allocation2 + $0x178] sm:$0xff]
    %v1180 = vld [vmem:[#allocation2 + $0x180] sm:$0xff]
    %v1181 = vld [vmem:[#allocation2 + $0x188] sm:$0xff]
    %v1182 = vld [vmem:[#allocation2 + $0x190] sm:$0xff]
    %v1183 = vld [vmem:[#allocation2 + $0x198] sm:$0xff]
    %v1184 = vld [vmem:[#allocation2 + $0x1a0] sm:$0xff]
    %v1185 = vld [vmem:[#allocation2 + $0x1a8] sm:$0xff]
    %v1186 = vld [vmem:[#allocation2 + $0x1b0] sm:$0xff]
    %v1187 = vld [vmem:[#allocation2 + $0x1b8] sm:$0xff]
    %v1188 = vld [vmem:[#allocation2 + $0x1c0] sm:$0xff]
    %v1189 = vld [vmem:[#allocation2 + $0x1c8] sm:$0xff]
    %v1190 = vld [vmem:[#allocation2 + $0x1d0] sm:$0xff]
    %v1191 = vld [vmem:[#allocation2 + $0x1d8] sm:$0xff]
    %v1208 = vrot.slane %v1133, 1
    %v1209 = vrot.slane %v1136, 1
    %v1210 = vrot.slane %v1139, 1
    %v1211 = vrot.slane %v1142, 1
    %v1212 = vrot.slane %v1145, 1
    %v1213 = vrot.slane %v1148, 1
    %v1214 = vrot.slane %v1151, 1
    %v1215 = vrot.slane %v1154, 1
    %v1216 = vrot.slane %v1163, 1
    %v1217 = vrot.slane %v1166, 1
    %v1218 = vrot.slane %v1169, 1
    %v1219 = vrot.slane %v1172, 1
    %v1220 = vrot.slane %v1175, 1
    %v1221 = vrot.slane %v1178, 1
    %v1222 = vrot.slane %v1181, 1
    %v1223 = vrot.slane %v1184, 1
    %1224 = vrot.lane.b32.xlu0 %v1208, 4
    %v1225 = vpop.permute.xlu0 %1224
    %1226 = vrot.lane.b32.xlu0 %v1209, 4
    %v1227 = vpop.permute.xlu0 %1226
    %1228 = vrot.lane.b32.xlu0 %v1210, 4
    %v1229 = vpop.permute.xlu0 %1228
    %1230 = vrot.lane.b32.xlu0 %v1211, 4
    %v1231 = vpop.permute.xlu0 %1230
    %1232 = vrot.lane.b32.xlu0 %v1212, 4
    %v1233 = vpop.permute.xlu0 %1232
    %1234 = vrot.lane.b32.xlu0 %v1213, 4
    %v1235 = vpop.permute.xlu0 %1234
    %1236 = vrot.lane.b32.xlu0 %v1214, 4
    %v1237 = vpop.permute.xlu0 %1236
    %1238 = vrot.lane.b32.xlu0 %v1215, 4
    %v1239 = vpop.permute.xlu0 %1238
    %1240 = vrot.lane.b32.xlu0 %v1216, 4
    %v1241 = vpop.permute.xlu0 %1240
    %1242 = vrot.lane.b32.xlu0 %v1217, 4
    %v1243 = vpop.permute.xlu0 %1242
    %1244 = vrot.lane.b32.xlu0 %v1218, 4
    %v1245 = vpop.permute.xlu0 %1244
    %1246 = vrot.lane.b32.xlu0 %v1219, 4
    %v1247 = vpop.permute.xlu0 %1246
    %1248 = vrot.lane.b32.xlu0 %v1220, 4
    %v1249 = vpop.permute.xlu0 %1248
    %1250 = vrot.lane.b32.xlu0 %v1221, 4
    %v1251 = vpop.permute.xlu0 %1250
    %1252 = vrot.lane.b32.xlu0 %v1222, 4
    %v1253 = vpop.permute.xlu0 %1252
    %1254 = vrot.lane.b32.xlu0 %v1223, 4
    %v1255 = vpop.permute.xlu0 %1254
    %v1288 = vrot.slane %v1133, 2
    %v1289 = vrot.slane %v1134, 2
    %v1290 = vsel %vm795, %v1288, %v1289
    %v1291 = vrot.slane %v1136, 2
    %v1292 = vrot.slane %v1137, 2
    %v1293 = vsel %vm795, %v1291, %v1292
    %v1294 = vrot.slane %v1139, 2
    %v1295 = vrot.slane %v1140, 2
    %v1296 = vsel %vm795, %v1294, %v1295
    %v1297 = vrot.slane %v1142, 2
    %v1298 = vrot.slane %v1143, 2
    %v1299 = vsel %vm795, %v1297, %v1298
    %v1300 = vrot.slane %v1145, 2
    %v1301 = vrot.slane %v1146, 2
    %v1302 = vsel %vm795, %v1300, %v1301
    %v1303 = vrot.slane %v1148, 2
    %v1304 = vrot.slane %v1149, 2
    %v1305 = vsel %vm795, %v1303, %v1304
    %v1306 = vrot.slane %v1151, 2
    %v1307 = vrot.slane %v1152, 2
    %v1308 = vsel %vm795, %v1306, %v1307
    %v1309 = vrot.slane %v1154, 2
    %v1310 = vrot.slane %v1155, 2
    %v1311 = vsel %vm795, %v1309, %v1310
    %v1312 = vrot.slane %v1163, 2
    %v1313 = vrot.slane %v1164, 2
    %v1314 = vsel %vm795, %v1312, %v1313
    %v1315 = vrot.slane %v1166, 2
    %v1316 = vrot.slane %v1167, 2
    %v1317 = vsel %vm795, %v1315, %v1316
    %v1318 = vrot.slane %v1169, 2
    %v1319 = vrot.slane %v1170, 2
    %v1320 = vsel %vm795, %v1318, %v1319
    %v1321 = vrot.slane %v1172, 2
    %v1322 = vrot.slane %v1173, 2
    %v1323 = vsel %vm795, %v1321, %v1322
    %v1324 = vrot.slane %v1175, 2
    %v1325 = vrot.slane %v1176, 2
    %v1326 = vsel %vm795, %v1324, %v1325
    %v1327 = vrot.slane %v1178, 2
    %v1328 = vrot.slane %v1179, 2
    %v1329 = vsel %vm795, %v1327, %v1328
    %v1330 = vrot.slane %v1181, 2
    %v1331 = vrot.slane %v1182, 2
    %v1332 = vsel %vm795, %v1330, %v1331
    %v1333 = vrot.slane %v1184, 2
    %v1334 = vrot.slane %v1185, 2
    %v1335 = vsel %vm795, %v1333, %v1334
    %1336 = vrot.lane.b32.xlu0 %v1288, 8
    %v1337 = vpop.permute.xlu0 %1336
    %1338 = vrot.lane.b32.xlu0 %v1290, 8
    %v1339 = vpop.permute.xlu0 %1338
    %1340 = vrot.lane.b32.xlu0 %v1291, 8
    %v1341 = vpop.permute.xlu0 %1340
    %1342 = vrot.lane.b32.xlu0 %v1293, 8
    %v1343 = vpop.permute.xlu0 %1342
    %1344 = vrot.lane.b32.xlu0 %v1294, 8
    %v1345 = vpop.permute.xlu0 %1344
    %1346 = vrot.lane.b32.xlu0 %v1296, 8
    %v1347 = vpop.permute.xlu0 %1346
    %1348 = vrot.lane.b32.xlu0 %v1297, 8
    %v1349 = vpop.permute.xlu0 %1348
    %1350 = vrot.lane.b32.xlu0 %v1299, 8
    %v1351 = vpop.permute.xlu0 %1350
    %1352 = vrot.lane.b32.xlu0 %v1300, 8
    %v1353 = vpop.permute.xlu0 %1352
    %1354 = vrot.lane.b32.xlu0 %v1302, 8
    %v1355 = vpop.permute.xlu0 %1354
    %1356 = vrot.lane.b32.xlu0 %v1303, 8
    %v1357 = vpop.permute.xlu0 %1356
    %1358 = vrot.lane.b32.xlu0 %v1305, 8
    %v1359 = vpop.permute.xlu0 %1358
    %1360 = vrot.lane.b32.xlu0 %v1306, 8
    %v1361 = vpop.permute.xlu0 %1360
    %1362 = vrot.lane.b32.xlu0 %v1308, 8
    %v1363 = vpop.permute.xlu0 %1362
    %1364 = vrot.lane.b32.xlu0 %v1309, 8
    %v1365 = vpop.permute.xlu0 %1364
    %1366 = vrot.lane.b32.xlu0 %v1311, 8
    %v1367 = vpop.permute.xlu0 %1366
    %1368 = vrot.lane.b32.xlu0 %v1312, 8
    %v1369 = vpop.permute.xlu0 %1368
    %1370 = vrot.lane.b32.xlu0 %v1314, 8
    %v1371 = vpop.permute.xlu0 %1370
    %1372 = vrot.lane.b32.xlu0 %v1315, 8
    %v1373 = vpop.permute.xlu0 %1372
    %1374 = vrot.lane.b32.xlu0 %v1317, 8
    %v1375 = vpop.permute.xlu0 %1374
    %1376 = vrot.lane.b32.xlu0 %v1318, 8
    %v1377 = vpop.permute.xlu0 %1376
    %1378 = vrot.lane.b32.xlu0 %v1320, 8
    %v1379 = vpop.permute.xlu0 %1378
    %1380 = vrot.lane.b32.xlu0 %v1321, 8
    %v1381 = vpop.permute.xlu0 %1380
    %1382 = vrot.lane.b32.xlu0 %v1323, 8
    %v1383 = vpop.permute.xlu0 %1382
    %1384 = vrot.lane.b32.xlu0 %v1324, 8
    %v1385 = vpop.permute.xlu0 %1384
    %1386 = vrot.lane.b32.xlu0 %v1326, 8
    %v1387 = vpop.permute.xlu0 %1386
    %1388 = vrot.lane.b32.xlu0 %v1327, 8
    %v1389 = vpop.permute.xlu0 %1388
    %1390 = vrot.lane.b32.xlu0 %v1329, 8
    %v1391 = vpop.permute.xlu0 %1390
    %1392 = vrot.lane.b32.xlu0 %v1330, 8
    %v1393 = vpop.permute.xlu0 %1392
    %1394 = vrot.lane.b32.xlu0 %v1332, 8
    %v1395 = vpop.permute.xlu0 %1394
    %1396 = vrot.lane.b32.xlu0 %v1333, 8
    %v1397 = vpop.permute.xlu0 %1396
    %1398 = vrot.lane.b32.xlu0 %v1335, 8
    %v1399 = vpop.permute.xlu0 %1398
    %1450 = vrot.lane.b32.xlu0 %v1135, 12
    %v1451 = vpop.permute.xlu0 %1450
    %1452 = vrot.lane.b32.xlu0 %v1136, 12
    %v1453 = vpop.permute.xlu0 %1452
    %1454 = vrot.lane.b32.xlu0 %v1138, 12
    %v1455 = vpop.permute.xlu0 %1454
    %1456 = vrot.lane.b32.xlu0 %v1139, 12
    %v1457 = vpop.permute.xlu0 %1456
    %1458 = vrot.lane.b32.xlu0 %v1141, 12
    %v1459 = vpop.permute.xlu0 %1458
    %1460 = vrot.lane.b32.xlu0 %v1142, 12
    %v1461 = vpop.permute.xlu0 %1460
    %1462 = vrot.lane.b32.xlu0 %v1144, 12
    %v1463 = vpop.permute.xlu0 %1462
    %1464 = vrot.lane.b32.xlu0 %v1145, 12
    %v1465 = vpop.permute.xlu0 %1464
    %1466 = vrot.lane.b32.xlu0 %v1147, 12
    %v1467 = vpop.permute.xlu0 %1466
    %1468 = vrot.lane.b32.xlu0 %v1148, 12
    %v1469 = vpop.permute.xlu0 %1468
    %1470 = vrot.lane.b32.xlu0 %v1150, 12
    %v1471 = vpop.permute.xlu0 %1470
    %1472 = vrot.lane.b32.xlu0 %v1151, 12
    %v1473 = vpop.permute.xlu0 %1472
    %1474 = vrot.lane.b32.xlu0 %v1153, 12
    %v1475 = vpop.permute.xlu0 %1474
    %1476 = vrot.lane.b32.xlu0 %v1154, 12
    %v1477 = vpop.permute.xlu0 %1476
    %1478 = vrot.lane.b32.xlu0 %v1156, 12
    %v1479 = vpop.permute.xlu0 %1478
    %1480 = vrot.lane.b32.xlu0 %v1157, 12
    %v1481 = vpop.permute.xlu0 %1480
    %1482 = vrot.lane.b32.xlu0 %v1165, 12
    %v1483 = vpop.permute.xlu0 %1482
    %1484 = vrot.lane.b32.xlu0 %v1166, 12
    %v1485 = vpop.permute.xlu0 %1484
    %1486 = vrot.lane.b32.xlu0 %v1168, 12
    %v1487 = vpop.permute.xlu0 %1486
    %1488 = vrot.lane.b32.xlu0 %v1169, 12
    %v1489 = vpop.permute.xlu0 %1488
    %1490 = vrot.lane.b32.xlu0 %v1171, 12
    %v1491 = vpop.permute.xlu0 %1490
    %1492 = vrot.lane.b32.xlu0 %v1172, 12
    %v1493 = vpop.permute.xlu0 %1492
    %1494 = vrot.lane.b32.xlu0 %v1174, 12
    %v1495 = vpop.permute.xlu0 %1494
    %1496 = vrot.lane.b32.xlu0 %v1175, 12
    %v1497 = vpop.permute.xlu0 %1496
    %1498 = vrot.lane.b32.xlu0 %v1177, 12
    %v1499 = vpop.permute.xlu0 %1498
    %1500 = vrot.lane.b32.xlu0 %v1178, 12
    %v1501 = vpop.permute.xlu0 %1500
    %1502 = vrot.lane.b32.xlu0 %v1180, 12
    %v1503 = vpop.permute.xlu0 %1502
    %1504 = vrot.lane.b32.xlu0 %v1181, 12
    %v1505 = vpop.permute.xlu0 %1504
    %1506 = vrot.lane.b32.xlu0 %v1183, 12
    %v1507 = vpop.permute.xlu0 %1506
    %1508 = vrot.lane.b32.xlu0 %v1184, 12
    %v1509 = vpop.permute.xlu0 %1508
    %1510 = vrot.lane.b32.xlu0 %v1186, 12
    %v1511 = vpop.permute.xlu0 %1510
    %1512 = vrot.lane.b32.xlu0 %v1187, 12
    %v1513 = vpop.permute.xlu0 %1512
    %v1546 = vrot.slane %v1157, 1
    %v1547 = vrot.slane %v1187, 1
    %1548 = vrot.lane.b32.xlu0 %v1209, 16
    %v1549 = vpop.permute.xlu0 %1548
    %1550 = vrot.lane.b32.xlu0 %v1210, 16
    %v1551 = vpop.permute.xlu0 %1550
    %1552 = vrot.lane.b32.xlu0 %v1211, 16
    %v1553 = vpop.permute.xlu0 %1552
    %1554 = vrot.lane.b32.xlu0 %v1212, 16
    %v1555 = vpop.permute.xlu0 %1554
    %1556 = vrot.lane.b32.xlu0 %v1213, 16
    %v1557 = vpop.permute.xlu0 %1556
    %1558 = vrot.lane.b32.xlu0 %v1214, 16
    %v1559 = vpop.permute.xlu0 %1558
    %1560 = vrot.lane.b32.xlu0 %v1215, 16
    %v1561 = vpop.permute.xlu0 %1560
    %1562 = vrot.lane.b32.xlu0 %v1546, 16
    %v1563 = vpop.permute.xlu0 %1562
    %1564 = vrot.lane.b32.xlu0 %v1217, 16
    %v1565 = vpop.permute.xlu0 %1564
    %1566 = vrot.lane.b32.xlu0 %v1218, 16
    %v1567 = vpop.permute.xlu0 %1566
    %1568 = vrot.lane.b32.xlu0 %v1219, 16
    %v1569 = vpop.permute.xlu0 %1568
    %1570 = vrot.lane.b32.xlu0 %v1220, 16
    %v1571 = vpop.permute.xlu0 %1570
    %1572 = vrot.lane.b32.xlu0 %v1221, 16
    %v1573 = vpop.permute.xlu0 %1572
    %1574 = vrot.lane.b32.xlu0 %v1222, 16
    %v1575 = vpop.permute.xlu0 %1574
    %1576 = vrot.lane.b32.xlu0 %v1223, 16
    %v1577 = vpop.permute.xlu0 %1576
    %1578 = vrot.lane.b32.xlu0 %v1547, 16
    %v1579 = vpop.permute.xlu0 %1578
    %v1598 = vrot.slane %v1157, 2
    %v1599 = vrot.slane %v1158, 2
    %v1600 = vsel %vm795, %v1598, %v1599
    %v1601 = vrot.slane %v1187, 2
    %v1602 = vrot.slane %v1188, 2
    %v1603 = vsel %vm795, %v1601, %v1602
    %1604 = vrot.lane.b32.xlu0 %v1291, 20
    %v1605 = vpop.permute.xlu0 %1604
    %1606 = vrot.lane.b32.xlu0 %v1293, 20
    %v1607 = vpop.permute.xlu0 %1606
    %1608 = vrot.lane.b32.xlu0 %v1294, 20
    %v1609 = vpop.permute.xlu0 %1608
    %1610 = vrot.lane.b32.xlu0 %v1296, 20
    %v1611 = vpop.permute.xlu0 %1610
    %1612 = vrot.lane.b32.xlu0 %v1297, 20
    %v1613 = vpop.permute.xlu0 %1612
    %1614 = vrot.lane.b32.xlu0 %v1299, 20
    %v1615 = vpop.permute.xlu0 %1614
    %1616 = vrot.lane.b32.xlu0 %v1300, 20
    %v1617 = vpop.permute.xlu0 %1616
    %1618 = vrot.lane.b32.xlu0 %v1302, 20
    %v1619 = vpop.permute.xlu0 %1618
    %1620 = vrot.lane.b32.xlu0 %v1303, 20
    %v1621 = vpop.permute.xlu0 %1620
    %1622 = vrot.lane.b32.xlu0 %v1305, 20
    %v1623 = vpop.permute.xlu0 %1622
    %1624 = vrot.lane.b32.xlu0 %v1306, 20
    %v1625 = vpop.permute.xlu0 %1624
    %1626 = vrot.lane.b32.xlu0 %v1308, 20
    %v1627 = vpop.permute.xlu0 %1626
    %1628 = vrot.lane.b32.xlu0 %v1309, 20
    %v1629 = vpop.permute.xlu0 %1628
    %1630 = vrot.lane.b32.xlu0 %v1311, 20
    %v1631 = vpop.permute.xlu0 %1630
    %1632 = vrot.lane.b32.xlu0 %v1598, 20
    %v1633 = vpop.permute.xlu0 %1632
    %1634 = vrot.lane.b32.xlu0 %v1600, 20
    %v1635 = vpop.permute.xlu0 %1634
    %1636 = vrot.lane.b32.xlu0 %v1315, 20
    %v1637 = vpop.permute.xlu0 %1636
    %1638 = vrot.lane.b32.xlu0 %v1317, 20
    %v1639 = vpop.permute.xlu0 %1638
    %1640 = vrot.lane.b32.xlu0 %v1318, 20
    %v1641 = vpop.permute.xlu0 %1640
    %1642 = vrot.lane.b32.xlu0 %v1320, 20
    %v1643 = vpop.permute.xlu0 %1642
    %1644 = vrot.lane.b32.xlu0 %v1321, 20
    %v1645 = vpop.permute.xlu0 %1644
    %1646 = vrot.lane.b32.xlu0 %v1323, 20
    %v1647 = vpop.permute.xlu0 %1646
    %1648 = vrot.lane.b32.xlu0 %v1324, 20
    %v1649 = vpop.permute.xlu0 %1648
    %1650 = vrot.lane.b32.xlu0 %v1326, 20
    %v1651 = vpop.permute.xlu0 %1650
    %1652 = vrot.lane.b32.xlu0 %v1327, 20
    %v1653 = vpop.permute.xlu0 %1652
    %1654 = vrot.lane.b32.xlu0 %v1329, 20
    %v1655 = vpop.permute.xlu0 %1654
    %1656 = vrot.lane.b32.xlu0 %v1330, 20
    %v1657 = vpop.permute.xlu0 %1656
    %1658 = vrot.lane.b32.xlu0 %v1332, 20
    %v1659 = vpop.permute.xlu0 %1658
    %1660 = vrot.lane.b32.xlu0 %v1333, 20
    %v1661 = vpop.permute.xlu0 %1660
    %1662 = vrot.lane.b32.xlu0 %v1335, 20
    %v1663 = vpop.permute.xlu0 %1662
    %1664 = vrot.lane.b32.xlu0 %v1601, 20
    %v1665 = vpop.permute.xlu0 %1664
    %1666 = vrot.lane.b32.xlu0 %v1603, 20
    %v1667 = vpop.permute.xlu0 %1666
    %1704 = vrot.lane.b32.xlu0 %v1138, 24
    %v1705 = vpop.permute.xlu0 %1704
    %1706 = vrot.lane.b32.xlu0 %v1139, 24
    %v1707 = vpop.permute.xlu0 %1706
    %1708 = vrot.lane.b32.xlu0 %v1141, 24
    %v1709 = vpop.permute.xlu0 %1708
    %1710 = vrot.lane.b32.xlu0 %v1142, 24
    %v1711 = vpop.permute.xlu0 %1710
    %1712 = vrot.lane.b32.xlu0 %v1144, 24
    %v1713 = vpop.permute.xlu0 %1712
    %1714 = vrot.lane.b32.xlu0 %v1145, 24
    %v1715 = vpop.permute.xlu0 %1714
    %1716 = vrot.lane.b32.xlu0 %v1147, 24
    %v1717 = vpop.permute.xlu0 %1716
    %1718 = vrot.lane.b32.xlu0 %v1148, 24
    %v1719 = vpop.permute.xlu0 %1718
    %1720 = vrot.lane.b32.xlu0 %v1150, 24
    %v1721 = vpop.permute.xlu0 %1720
    %1722 = vrot.lane.b32.xlu0 %v1151, 24
    %v1723 = vpop.permute.xlu0 %1722
    %1724 = vrot.lane.b32.xlu0 %v1153, 24
    %v1725 = vpop.permute.xlu0 %1724
    %1726 = vrot.lane.b32.xlu0 %v1154, 24
    %v1727 = vpop.permute.xlu0 %1726
    %1728 = vrot.lane.b32.xlu0 %v1156, 24
    %v1729 = vpop.permute.xlu0 %1728
    %1730 = vrot.lane.b32.xlu0 %v1157, 24
    %v1731 = vpop.permute.xlu0 %1730
    %1732 = vrot.lane.b32.xlu0 %v1159, 24
    %v1733 = vpop.permute.xlu0 %1732
    %1734 = vrot.lane.b32.xlu0 %v1160, 24
    %v1735 = vpop.permute.xlu0 %1734
    %1736 = vrot.lane.b32.xlu0 %v1168, 24
    %v1737 = vpop.permute.xlu0 %1736
    %1738 = vrot.lane.b32.xlu0 %v1169, 24
    %v1739 = vpop.permute.xlu0 %1738
    %1740 = vrot.lane.b32.xlu0 %v1171, 24
    %v1741 = vpop.permute.xlu0 %1740
    %1742 = vrot.lane.b32.xlu0 %v1172, 24
    %v1743 = vpop.permute.xlu0 %1742
    %1744 = vrot.lane.b32.xlu0 %v1174, 24
    %v1745 = vpop.permute.xlu0 %1744
    %1746 = vrot.lane.b32.xlu0 %v1175, 24
    %v1747 = vpop.permute.xlu0 %1746
    %1748 = vrot.lane.b32.xlu0 %v1177, 24
    %v1749 = vpop.permute.xlu0 %1748
    %1750 = vrot.lane.b32.xlu0 %v1178, 24
    %v1751 = vpop.permute.xlu0 %1750
    %1752 = vrot.lane.b32.xlu0 %v1180, 24
    %v1753 = vpop.permute.xlu0 %1752
    %1754 = vrot.lane.b32.xlu0 %v1181, 24
    %v1755 = vpop.permute.xlu0 %1754
    %1756 = vrot.lane.b32.xlu0 %v1183, 24
    %v1757 = vpop.permute.xlu0 %1756
    %1758 = vrot.lane.b32.xlu0 %v1184, 24
    %v1759 = vpop.permute.xlu0 %1758
    %1760 = vrot.lane.b32.xlu0 %v1186, 24
    %v1761 = vpop.permute.xlu0 %1760
    %1762 = vrot.lane.b32.xlu0 %v1187, 24
    %v1763 = vpop.permute.xlu0 %1762
    %1764 = vrot.lane.b32.xlu0 %v1189, 24
    %v1765 = vpop.permute.xlu0 %1764
    %1766 = vrot.lane.b32.xlu0 %v1190, 24
    %v1767 = vpop.permute.xlu0 %1766
    %v1800 = vrot.slane %v1160, 1
    %v1801 = vrot.slane %v1190, 1
    %1802 = vrot.lane.b32.xlu0 %v1210, 28
    %v1803 = vpop.permute.xlu0 %1802
    %1804 = vrot.lane.b32.xlu0 %v1211, 28
    %v1805 = vpop.permute.xlu0 %1804
    %1806 = vrot.lane.b32.xlu0 %v1212, 28
    %v1807 = vpop.permute.xlu0 %1806
    %1808 = vrot.lane.b32.xlu0 %v1213, 28
    %v1809 = vpop.permute.xlu0 %1808
    %1810 = vrot.lane.b32.xlu0 %v1214, 28
    %v1811 = vpop.permute.xlu0 %1810
    %1812 = vrot.lane.b32.xlu0 %v1215, 28
    %v1813 = vpop.permute.xlu0 %1812
    %1814 = vrot.lane.b32.xlu0 %v1546, 28
    %v1815 = vpop.permute.xlu0 %1814
    %1816 = vrot.lane.b32.xlu0 %v1800, 28
    %v1817 = vpop.permute.xlu0 %1816
    %1818 = vrot.lane.b32.xlu0 %v1218, 28
    %v1819 = vpop.permute.xlu0 %1818
    %1820 = vrot.lane.b32.xlu0 %v1219, 28
    %v1821 = vpop.permute.xlu0 %1820
    %1822 = vrot.lane.b32.xlu0 %v1220, 28
    %v1823 = vpop.permute.xlu0 %1822
    %1824 = vrot.lane.b32.xlu0 %v1221, 28
    %v1825 = vpop.permute.xlu0 %1824
    %1826 = vrot.lane.b32.xlu0 %v1222, 28
    %v1827 = vpop.permute.xlu0 %1826
    %1828 = vrot.lane.b32.xlu0 %v1223, 28
    %v1829 = vpop.permute.xlu0 %1828
    %1830 = vrot.lane.b32.xlu0 %v1547, 28
    %v1831 = vpop.permute.xlu0 %1830
    %1832 = vrot.lane.b32.xlu0 %v1801, 28
    %v1833 = vpop.permute.xlu0 %1832
    %v1852 = vrot.slane %v1160, 2
    %v1853 = vrot.slane %v1161, 2
    %v1854 = vsel %vm795, %v1852, %v1853
    %v1855 = vrot.slane %v1190, 2
    %v1856 = vrot.slane %v1191, 2
    %v1857 = vsel %vm795, %v1855, %v1856
    %1858 = vrot.lane.b32.xlu0 %v1294, 32
    %v1859 = vpop.permute.xlu0 %1858
    %1860 = vrot.lane.b32.xlu0 %v1296, 32
    %v1861 = vpop.permute.xlu0 %1860
    %1862 = vrot.lane.b32.xlu0 %v1297, 32
    %v1863 = vpop.permute.xlu0 %1862
    %1864 = vrot.lane.b32.xlu0 %v1299, 32
    %v1865 = vpop.permute.xlu0 %1864
    %1866 = vrot.lane.b32.xlu0 %v1300, 32
    %v1867 = vpop.permute.xlu0 %1866
    %1868 = vrot.lane.b32.xlu0 %v1302, 32
    %v1869 = vpop.permute.xlu0 %1868
    %1870 = vrot.lane.b32.xlu0 %v1303, 32
    %v1871 = vpop.permute.xlu0 %1870
    %1872 = vrot.lane.b32.xlu0 %v1305, 32
    %v1873 = vpop.permute.xlu0 %1872
    %1874 = vrot.lane.b32.xlu0 %v1306, 32
    %v1875 = vpop.permute.xlu0 %1874
    %1876 = vrot.lane.b32.xlu0 %v1308, 32
    %v1877 = vpop.permute.xlu0 %1876
    %1878 = vrot.lane.b32.xlu0 %v1309, 32
    %v1879 = vpop.permute.xlu0 %1878
    %1880 = vrot.lane.b32.xlu0 %v1311, 32
    %v1881 = vpop.permute.xlu0 %1880
    %1882 = vrot.lane.b32.xlu0 %v1598, 32
    %v1883 = vpop.permute.xlu0 %1882
    %1884 = vrot.lane.b32.xlu0 %v1600, 32
    %v1885 = vpop.permute.xlu0 %1884
    %1886 = vrot.lane.b32.xlu0 %v1852, 32
    %v1887 = vpop.permute.xlu0 %1886
    %1888 = vrot.lane.b32.xlu0 %v1854, 32
    %v1889 = vpop.permute.xlu0 %1888
    %1890 = vrot.lane.b32.xlu0 %v1318, 32
    %v1891 = vpop.permute.xlu0 %1890
    %1892 = vrot.lane.b32.xlu0 %v1320, 32
    %v1893 = vpop.permute.xlu0 %1892
    %1894 = vrot.lane.b32.xlu0 %v1321, 32
    %v1895 = vpop.permute.xlu0 %1894
    %1896 = vrot.lane.b32.xlu0 %v1323, 32
    %v1897 = vpop.permute.xlu0 %1896
    %1898 = vrot.lane.b32.xlu0 %v1324, 32
    %v1899 = vpop.permute.xlu0 %1898
    %1900 = vrot.lane.b32.xlu0 %v1326, 32
    %v1901 = vpop.permute.xlu0 %1900
    %1902 = vrot.lane.b32.xlu0 %v1327, 32
    %v1903 = vpop.permute.xlu0 %1902
    %1904 = vrot.lane.b32.xlu0 %v1329, 32
    %v1905 = vpop.permute.xlu0 %1904
    %1906 = vrot.lane.b32.xlu0 %v1330, 32
    %v1907 = vpop.permute.xlu0 %1906
    %1908 = vrot.lane.b32.xlu0 %v1332, 32
    %v1909 = vpop.permute.xlu0 %1908
    %1910 = vrot.lane.b32.xlu0 %v1333, 32
    %v1911 = vpop.permute.xlu0 %1910
    %1912 = vrot.lane.b32.xlu0 %v1335, 32
    %v1913 = vpop.permute.xlu0 %1912
    %1914 = vrot.lane.b32.xlu0 %v1601, 32
    %v1915 = vpop.permute.xlu0 %1914
    %1916 = vrot.lane.b32.xlu0 %v1603, 32
    %v1917 = vpop.permute.xlu0 %1916
    %1918 = vrot.lane.b32.xlu0 %v1855, 32
    %v1919 = vpop.permute.xlu0 %1918
    %1920 = vrot.lane.b32.xlu0 %v1857, 32
    %v1921 = vpop.permute.xlu0 %1920
    %v1954 = vsel %vm43, %v1132, %v1225
    %v1955 = vsel %vm43, %v1133, %v1225
    %v1956 = vsel %vm43, %v1135, %v1227
    %v1957 = vsel %vm43, %v1136, %v1227
    %v1958 = vsel %vm43, %v1138, %v1229
    %v1959 = vsel %vm43, %v1139, %v1229
    %v1960 = vsel %vm43, %v1141, %v1231
    %v1961 = vsel %vm43, %v1142, %v1231
    %v1962 = vsel %vm43, %v1144, %v1233
    %v1963 = vsel %vm43, %v1145, %v1233
    %v1964 = vsel %vm43, %v1147, %v1235
    %v1965 = vsel %vm43, %v1148, %v1235
    %v1966 = vsel %vm43, %v1150, %v1237
    %v1967 = vsel %vm43, %v1151, %v1237
    %v1968 = vsel %vm43, %v1153, %v1239
    %v1969 = vsel %vm43, %v1154, %v1239
    %v1970 = vsel %vm43, %v1162, %v1241
    %v1971 = vsel %vm43, %v1163, %v1241
    %v1972 = vsel %vm43, %v1165, %v1243
    %v1973 = vsel %vm43, %v1166, %v1243
    %v1974 = vsel %vm43, %v1168, %v1245
    %v1975 = vsel %vm43, %v1169, %v1245
    %v1976 = vsel %vm43, %v1171, %v1247
    %v1977 = vsel %vm43, %v1172, %v1247
    %v1978 = vsel %vm43, %v1174, %v1249
    %v1979 = vsel %vm43, %v1175, %v1249
    %v1980 = vsel %vm43, %v1177, %v1251
    %v1981 = vsel %vm43, %v1178, %v1251
    %v1982 = vsel %vm43, %v1180, %v1253
    %v1983 = vsel %vm43, %v1181, %v1253
    %v1984 = vsel %vm43, %v1183, %v1255
    %v1985 = vsel %vm43, %v1184, %v1255
    %vm1986 = vcmask 64512
    %v1987 = vsel %vm1986, %v1954, %v1337
    %v1988 = vsel %vm1986, %v1955, %v1339
    %v1989 = vsel %vm1986, %v1956, %v1341
    %v1990 = vsel %vm1986, %v1957, %v1343
    %v1991 = vsel %vm1986, %v1958, %v1345
    %v1992 = vsel %vm1986, %v1959, %v1347
    %v1993 = vsel %vm1986, %v1960, %v1349
    %v1994 = vsel %vm1986, %v1961, %v1351
    %v1995 = vsel %vm1986, %v1962, %v1353
    %v1996 = vsel %vm1986, %v1963, %v1355
    %v1997 = vsel %vm1986, %v1964, %v1357
    %v1998 = vsel %vm1986, %v1965, %v1359
    %v1999 = vsel %vm1986, %v1966, %v1361
    %v2000 = vsel %vm1986, %v1967, %v1363
    %v2001 = vsel %vm1986, %v1968, %v1365
    %v2002 = vsel %vm1986, %v1969, %v1367
    %v2003 = vsel %vm1986, %v1970, %v1369
    %v2004 = vsel %vm1986, %v1971, %v1371
    %v2005 = vsel %vm1986, %v1972, %v1373
    %v2006 = vsel %vm1986, %v1973, %v1375
    %v2007 = vsel %vm1986, %v1974, %v1377
    %v2008 = vsel %vm1986, %v1975, %v1379
    %v2009 = vsel %vm1986, %v1976, %v1381
    %v2010 = vsel %vm1986, %v1977, %v1383
    %v2011 = vsel %vm1986, %v1978, %v1385
    %v2012 = vsel %vm1986, %v1979, %v1387
    %v2013 = vsel %vm1986, %v1980, %v1389
    %v2014 = vsel %vm1986, %v1981, %v1391
    %v2015 = vsel %vm1986, %v1982, %v1393
    %v2016 = vsel %vm1986, %v1983, %v1395
    %v2017 = vsel %vm1986, %v1984, %v1397
    %v2018 = vsel %vm1986, %v1985, %v1399
    %v2019 = vsel %vm791, %v1987, %v1451
    %v2020 = vsel %vm791, %v1988, %v1453
    %v2021 = vsel %vm791, %v1989, %v1455
    %v2022 = vsel %vm791, %v1990, %v1457
    %v2023 = vsel %vm791, %v1991, %v1459
    %v2024 = vsel %vm791, %v1992, %v1461
    %v2025 = vsel %vm791, %v1993, %v1463
    %v2026 = vsel %vm791, %v1994, %v1465
    %v2027 = vsel %vm791, %v1995, %v1467
    %v2028 = vsel %vm791, %v1996, %v1469
    %v2029 = vsel %vm791, %v1997, %v1471
    %v2030 = vsel %vm791, %v1998, %v1473
    %v2031 = vsel %vm791, %v1999, %v1475
    %v2032 = vsel %vm791, %v2000, %v1477
    %v2033 = vsel %vm791, %v2001, %v1479
    %v2034 = vsel %vm791, %v2002, %v1481
    %v2035 = vsel %vm791, %v2003, %v1483
    %v2036 = vsel %vm791, %v2004, %v1485
    %v2037 = vsel %vm791, %v2005, %v1487
    %v2038 = vsel %vm791, %v2006, %v1489
    %v2039 = vsel %vm791, %v2007, %v1491
    %v2040 = vsel %vm791, %v2008, %v1493
    %v2041 = vsel %vm791, %v2009, %v1495
    %v2042 = vsel %vm791, %v2010, %v1497
    %v2043 = vsel %vm791, %v2011, %v1499
    %v2044 = vsel %vm791, %v2012, %v1501
    %v2045 = vsel %vm791, %v2013, %v1503
    %v2046 = vsel %vm791, %v2014, %v1505
    %v2047 = vsel %vm791, %v2015, %v1507
    %v2048 = vsel %vm791, %v2016, %v1509
    %v2049 = vsel %vm791, %v2017, %v1511
    %v2050 = vsel %vm791, %v2018, %v1513
    %v2051 = vsel %vm168, %v2019, %v1549
    %v2052 = vsel %vm168, %v2020, %v1549
    %v2053 = vsel %vm168, %v2021, %v1551
    %v2054 = vsel %vm168, %v2022, %v1551
    %v2055 = vsel %vm168, %v2023, %v1553
    %v2056 = vsel %vm168, %v2024, %v1553
    %v2057 = vsel %vm168, %v2025, %v1555
    %v2058 = vsel %vm168, %v2026, %v1555
    %v2059 = vsel %vm168, %v2027, %v1557
    %v2060 = vsel %vm168, %v2028, %v1557
    %v2061 = vsel %vm168, %v2029, %v1559
    %v2062 = vsel %vm168, %v2030, %v1559
    %v2063 = vsel %vm168, %v2031, %v1561
    %v2064 = vsel %vm168, %v2032, %v1561
    %v2065 = vsel %vm168, %v2033, %v1563
    %v2066 = vsel %vm168, %v2034, %v1563
    %v2067 = vsel %vm168, %v2035, %v1565
    %v2068 = vsel %vm168, %v2036, %v1565
    %v2069 = vsel %vm168, %v2037, %v1567
    %v2070 = vsel %vm168, %v2038, %v1567
    %v2071 = vsel %vm168, %v2039, %v1569
    %v2072 = vsel %vm168, %v2040, %v1569
    %v2073 = vsel %vm168, %v2041, %v1571
    %v2074 = vsel %vm168, %v2042, %v1571
    %v2075 = vsel %vm168, %v2043, %v1573
    %v2076 = vsel %vm168, %v2044, %v1573
    %v2077 = vsel %vm168, %v2045, %v1575
    %v2078 = vsel %vm168, %v2046, %v1575
    %v2079 = vsel %vm168, %v2047, %v1577
    %v2080 = vsel %vm168, %v2048, %v1577
    %v2081 = vsel %vm168, %v2049, %v1579
    %v2082 = vsel %vm168, %v2050, %v1579
    %vm2083 = vcmask 162816
    %v2084 = vsel %vm2083, %v2051, %v1605
    %v2085 = vsel %vm2083, %v2052, %v1607
    %v2086 = vsel %vm2083, %v2053, %v1609
    %v2087 = vsel %vm2083, %v2054, %v1611
    %v2088 = vsel %vm2083, %v2055, %v1613
    %v2089 = vsel %vm2083, %v2056, %v1615
    %v2090 = vsel %vm2083, %v2057, %v1617
    %v2091 = vsel %vm2083, %v2058, %v1619
    %v2092 = vsel %vm2083, %v2059, %v1621
    %v2093 = vsel %vm2083, %v2060, %v1623
    %v2094 = vsel %vm2083, %v2061, %v1625
    %v2095 = vsel %vm2083, %v2062, %v1627
    %v2096 = vsel %vm2083, %v2063, %v1629
    %v2097 = vsel %vm2083, %v2064, %v1631
    %v2098 = vsel %vm2083, %v2065, %v1633
    %v2099 = vsel %vm2083, %v2066, %v1635
    %v2100 = vsel %vm2083, %v2067, %v1637
    %v2101 = vsel %vm2083, %v2068, %v1639
    %v2102 = vsel %vm2083, %v2069, %v1641
    %v2103 = vsel %vm2083, %v2070, %v1643
    %v2104 = vsel %vm2083, %v2071, %v1645
    %v2105 = vsel %vm2083, %v2072, %v1647
    %v2106 = vsel %vm2083, %v2073, %v1649
    %v2107 = vsel %vm2083, %v2074, %v1651
    %v2108 = vsel %vm2083, %v2075, %v1653
    %v2109 = vsel %vm2083, %v2076, %v1655
    %v2110 = vsel %vm2083, %v2077, %v1657
    %v2111 = vsel %vm2083, %v2078, %v1659
    %v2112 = vsel %vm2083, %v2079, %v1661
    %v2113 = vsel %vm2083, %v2080, %v1663
    %v2114 = vsel %vm2083, %v2081, %v1665
    %v2115 = vsel %vm2083, %v2082, %v1667
    %vm2116 = vcmask 195584
    %v2117 = vsel %vm2116, %v2084, %v1705
    %v2118 = vsel %vm2116, %v2085, %v1707
    %v2119 = vsel %vm2116, %v2086, %v1709
    %v2120 = vsel %vm2116, %v2087, %v1711
    %v2121 = vsel %vm2116, %v2088, %v1713
    %v2122 = vsel %vm2116, %v2089, %v1715
    %v2123 = vsel %vm2116, %v2090, %v1717
    %v2124 = vsel %vm2116, %v2091, %v1719
    %v2125 = vsel %vm2116, %v2092, %v1721
    %v2126 = vsel %vm2116, %v2093, %v1723
    %v2127 = vsel %vm2116, %v2094, %v1725
    %v2128 = vsel %vm2116, %v2095, %v1727
    %v2129 = vsel %vm2116, %v2096, %v1729
    %v2130 = vsel %vm2116, %v2097, %v1731
    %v2131 = vsel %vm2116, %v2098, %v1733
    %v2132 = vsel %vm2116, %v2099, %v1735
    %v2133 = vsel %vm2116, %v2100, %v1737
    %v2134 = vsel %vm2116, %v2101, %v1739
    %v2135 = vsel %vm2116, %v2102, %v1741
    %v2136 = vsel %vm2116, %v2103, %v1743
    %v2137 = vsel %vm2116, %v2104, %v1745
    %v2138 = vsel %vm2116, %v2105, %v1747
    %v2139 = vsel %vm2116, %v2106, %v1749
    %v2140 = vsel %vm2116, %v2107, %v1751
    %v2141 = vsel %vm2116, %v2108, %v1753
    %v2142 = vsel %vm2116, %v2109, %v1755
    %v2143 = vsel %vm2116, %v2110, %v1757
    %v2144 = vsel %vm2116, %v2111, %v1759
    %v2145 = vsel %vm2116, %v2112, %v1761
    %v2146 = vsel %vm2116, %v2113, %v1763
    %v2147 = vsel %vm2116, %v2114, %v1765
    %v2148 = vsel %vm2116, %v2115, %v1767
    %vm2149 = vcmask 228352
    %v2150 = vsel %vm2149, %v2117, %v1803
    %v2151 = vsel %vm2149, %v2118, %v1803
    %v2152 = vsel %vm2149, %v2119, %v1805
    %v2153 = vsel %vm2149, %v2120, %v1805
    %v2154 = vsel %vm2149, %v2121, %v1807
    %v2155 = vsel %vm2149, %v2122, %v1807
    %v2156 = vsel %vm2149, %v2123, %v1809
    %v2157 = vsel %vm2149, %v2124, %v1809
    %v2158 = vsel %vm2149, %v2125, %v1811
    %v2159 = vsel %vm2149, %v2126, %v1811
    %v2160 = vsel %vm2149, %v2127, %v1813
    %v2161 = vsel %vm2149, %v2128, %v1813
    %v2162 = vsel %vm2149, %v2129, %v1815
    %v2163 = vsel %vm2149, %v2130, %v1815
    %v2164 = vsel %vm2149, %v2131, %v1817
    %v2165 = vsel %vm2149, %v2132, %v1817
    %v2166 = vsel %vm2149, %v2133, %v1819
    %v2167 = vsel %vm2149, %v2134, %v1819
    %v2168 = vsel %vm2149, %v2135, %v1821
    %v2169 = vsel %vm2149, %v2136, %v1821
    %v2170 = vsel %vm2149, %v2137, %v1823
    %v2171 = vsel %vm2149, %v2138, %v1823
    %v2172 = vsel %vm2149, %v2139, %v1825
    %v2173 = vsel %vm2149, %v2140, %v1825
    %v2174 = vsel %vm2149, %v2141, %v1827
    %v2175 = vsel %vm2149, %v2142, %v1827
    %v2176 = vsel %vm2149, %v2143, %v1829
    %v2177 = vsel %vm2149, %v2144, %v1829
    %v2178 = vsel %vm2149, %v2145, %v1831
    %v2179 = vsel %vm2149, %v2146, %v1831
    %v2180 = vsel %vm2149, %v2147, %v1833
    %v2181 = vsel %vm2149, %v2148, %v1833
    %vm2182 = vcmask 261120
    %v2183 = vsel %vm2182, %v2150, %v1859
    %v2184 = vsel %vm2182, %v2151, %v1861
    %v2185 = vsel %vm2182, %v2152, %v1863
    %v2186 = vsel %vm2182, %v2153, %v1865
    %v2187 = vsel %vm2182, %v2154, %v1867
    %v2188 = vsel %vm2182, %v2155, %v1869
    %v2189 = vsel %vm2182, %v2156, %v1871
    %v2190 = vsel %vm2182, %v2157, %v1873
    %v2191 = vsel %vm2182, %v2158, %v1875
    %v2192 = vsel %vm2182, %v2159, %v1877
    %v2193 = vsel %vm2182, %v2160, %v1879
    %v2194 = vsel %vm2182, %v2161, %v1881
    %v2195 = vsel %vm2182, %v2162, %v1883
    %v2196 = vsel %vm2182, %v2163, %v1885
    %v2197 = vsel %vm2182, %v2164, %v1887
    %v2198 = vsel %vm2182, %v2165, %v1889
    %v2199 = vsel %vm2182, %v2166, %v1891
    %v2200 = vsel %vm2182, %v2167, %v1893
    %v2201 = vsel %vm2182, %v2168, %v1895
    %v2202 = vsel %vm2182, %v2169, %v1897
    %v2203 = vsel %vm2182, %v2170, %v1899
    %v2204 = vsel %vm2182, %v2171, %v1901
    %v2205 = vsel %vm2182, %v2172, %v1903
    %v2206 = vsel %vm2182, %v2173, %v1905
    %v2207 = vsel %vm2182, %v2174, %v1907
    %v2208 = vsel %vm2182, %v2175, %v1909
    %v2209 = vsel %vm2182, %v2176, %v1911
    %v2210 = vsel %vm2182, %v2177, %v1913
    %v2211 = vsel %vm2182, %v2178, %v1915
    %v2212 = vsel %vm2182, %v2179, %v1917
    %v2213 = vsel %vm2182, %v2180, %v1919
    %v2214 = vsel %vm2182, %v2181, %v1921
    %vm2247 = vcmask 1040384
    %v2248 = vrot.slane %v2183, 7
    %v2249 = vrot.slane %v2184, 7
    %v2250 = vsel %vm2247, %v2248, %v2249
    %v2251 = vrot.slane %v2185, 7
    %v2252 = vrot.slane %v2186, 7
    %v2253 = vsel %vm2247, %v2251, %v2252
    %v2254 = vrot.slane %v2187, 7
    %v2255 = vrot.slane %v2188, 7
    %v2256 = vsel %vm2247, %v2254, %v2255
    %v2257 = vrot.slane %v2189, 7
    %v2258 = vrot.slane %v2190, 7
    %v2259 = vsel %vm2247, %v2257, %v2258
    %v2260 = vrot.slane %v2191, 7
    %v2261 = vrot.slane %v2192, 7
    %v2262 = vsel %vm2247, %v2260, %v2261
    %v2263 = vrot.slane %v2193, 7
    %v2264 = vrot.slane %v2194, 7
    %v2265 = vsel %vm2247, %v2263, %v2264
    %v2266 = vrot.slane %v2195, 7
    %v2267 = vrot.slane %v2196, 7
    %v2268 = vsel %vm2247, %v2266, %v2267
    %v2269 = vrot.slane %v2197, 7
    %v2270 = vrot.slane %v2198, 7
    %v2271 = vsel %vm2247, %v2269, %v2270
    %v2272 = vrot.slane %v2199, 7
    %v2273 = vrot.slane %v2200, 7
    %v2274 = vsel %vm2247, %v2272, %v2273
    %v2275 = vrot.slane %v2201, 7
    %v2276 = vrot.slane %v2202, 7
    %v2277 = vsel %vm2247, %v2275, %v2276
    %v2278 = vrot.slane %v2203, 7
    %v2279 = vrot.slane %v2204, 7
    %v2280 = vsel %vm2247, %v2278, %v2279
    %v2281 = vrot.slane %v2205, 7
    %v2282 = vrot.slane %v2206, 7
    %v2283 = vsel %vm2247, %v2281, %v2282
    %v2284 = vrot.slane %v2207, 7
    %v2285 = vrot.slane %v2208, 7
    %v2286 = vsel %vm2247, %v2284, %v2285
    %v2287 = vrot.slane %v2209, 7
    %v2288 = vrot.slane %v2210, 7
    %v2289 = vsel %vm2247, %v2287, %v2288
    %v2290 = vrot.slane %v2211, 7
    %v2291 = vrot.slane %v2212, 7
    %v2292 = vsel %vm2247, %v2290, %v2291
    %v2293 = vrot.slane %v2213, 7
    %v2294 = vrot.slane %v2214, 7
    %v2295 = vsel %vm2247, %v2293, %v2294
    %v2312 = vpack.c.bf16 %v2253, %v2250
    %v2313 = vpack.c.bf16 %v2259, %v2256
    %v2314 = vpack.c.bf16 %v2265, %v2262
    %v2315 = vpack.c.bf16 %v2271, %v2268
    %v2316 = vpack.c.bf16 %v2277, %v2274
    %v2317 = vpack.c.bf16 %v2283, %v2280
    %v2318 = vpack.c.bf16 %v2289, %v2286
    %v2319 = vpack.c.bf16 %v2295, %v2292
    %v2320 = vld [vmem:[%s8] sm:$0xf]
    %v2321 = vld [vmem:[%s8 + $0x4] sm:$0xf]
    %v2322 = vld [vmem:[%s8 + $0x8] sm:$0xf]
    %v2323 = vld [vmem:[%s8 + $0xc] sm:$0xf]
    %v2324 = vld [vmem:[%s8 + $0x10] sm:$0x3]
    %v2330 = vunpack.c.l.b16 %v2320
    %v2331 = vunpack.c.l.b16 %v2321
    %v2332 = vunpack.c.l.b16 %v2322
    %v2333 = vunpack.c.l.b16 %v2323
    %v2334 = vunpack.c.l.b16 %v2324
    %v2335 = vpack.c.b16 %v2331, %v2330
    %v2336 = vpack.c.b16 %v2333, %v2332
    %v2337 = vpack.c.b16 %v2334, %v2334
    %vm2340 = vcmask 293888
    %v2342 = vsel %vm2340, %v2312, 0
    %v2345 = vsel %vm2340, %v2313, 0
    %v2348 = vsel %vm2340, %v2314, 0
    %v2351 = vsel %vm2340, %v2315, 0
    %v2354 = vsel %vm2340, %v2316, 0
    %v2357 = vsel %vm2340, %v2317, 0
    %v2360 = vsel %vm2340, %v2318, 0
    %v2363 = vsel %vm2340, %v2319, 0
    %vm2365 = vcmask 1041408
    %v2367 = vsel %vm2365, %v2337, 0
    %2369 = vmatprep.subr.bf16.mxu0 0
    %2370 = vmatpush1.bf16.msra.mxu0 %v2335
    %2371 = vmatprep.subr.bf16.mxu0 0
    %2372 = vmatpush1.bf16.msra.mxu0 %v2336
    %2373 = vmatprep.subr.bf16.mxu0 0
    %2374 = vmatpush1.bf16.msra.mxu0 %v2367
    %2375 = vmatprep.subr.bf16.mxu0 0
    %2376 = vmatpush1.bf16.msra.mxu0 0
    %2377 = vmatprep.subr.bf16.mxu0 0
    %2378 = vmatpush1.bf16.msra.mxu0 0
    %2379 = vmatprep.subr.bf16.mxu0 0
    %2380 = vmatpush1.bf16.msra.mxu0 0
    %2381 = vmatprep.subr.bf16.mxu0 0
    %2382 = vmatpush1.bf16.msra.mxu0 0
    %2383 = vmatprep.subr.bf16.mxu0 0
    %2384 = vmatpush1.bf16.msra.mxu0 0
    %2385 = vmatprep.subr.bf16.mxu0 0
    %2386 = vmatpush1.bf16.msra.mxu0 0
    %2387 = vmatprep.subr.bf16.mxu0 0
    %2388 = vmatpush1.bf16.msra.mxu0 0
    %2389 = vmatprep.subr.bf16.mxu0 0
    %2390 = vmatpush1.bf16.msra.mxu0 0
    %2391 = vmatprep.subr.bf16.mxu0 0
    %2392 = vmatpush1.bf16.msra.mxu0 0
    %2393 = vmatprep.subr.bf16.mxu0 0
    %2394 = vmatpush1.bf16.msra.mxu0 0
    %2395 = vmatprep.subr.bf16.mxu0 0
    %2396 = vmatpush1.bf16.msra.mxu0 0
    %2397 = vmatprep.subr.bf16.mxu0 0
    %2398 = vmatpush1.bf16.msra.mxu0 0
    %2399 = vmatprep.subr.bf16.mxu0 0
    %2400 = vmatpush1.bf16.msra.mxu0 0
    %2401 = vmatprep.mubr.bf16.mxu0 0
    %2402 = vmatmul.mubr.bf16.gmra.mrb[0].mxu0 %v2342
    %v2403 = vpop.f32.mrb[0].mxu0
    %v2404 = vadd.f32 0.0, %v2403
    %v2405 = vpop.f32.mrb[0].mxu0
    %v2406 = vpop.f32.mrb[0].mxu0
    %v2407 = vadd.f32 0.0, %v2406
    %v2408 = vpop.f32.mrb[0].mxu0
    %2409 = vmatprep.mubr.bf16.mxu0 0
    %2410 = vmatmul.mubr.bf16.gmra.mrb[0].mxu0 %v2345
    %v2411 = vpop.f32.mrb[0].mxu0
    %v2412 = vadd.f32 0.0, %v2411
    %v2413 = vpop.f32.mrb[0].mxu0
    %v2414 = vpop.f32.mrb[0].mxu0
    %v2415 = vadd.f32 0.0, %v2414
    %v2416 = vpop.f32.mrb[0].mxu0
    %2417 = vmatprep.mubr.bf16.mxu0 0
    %2418 = vmatmul.mubr.bf16.gmra.mrb[0].mxu0 %v2348
    %v2419 = vpop.f32.mrb[0].mxu0
    %v2420 = vadd.f32 0.0, %v2419
    %v2421 = vpop.f32.mrb[0].mxu0
    %v2422 = vpop.f32.mrb[0].mxu0
    %v2423 = vadd.f32 0.0, %v2422
    %v2424 = vpop.f32.mrb[0].mxu0
    %2425 = vmatprep.mubr.bf16.mxu0 0
    %2426 = vmatmul.mubr.bf16.gmra.mrb[0].mxu0 %v2351
    %v2427 = vpop.f32.mrb[0].mxu0
    %v2428 = vadd.f32 0.0, %v2427
    %v2429 = vpop.f32.mrb[0].mxu0
    %v2430 = vpop.f32.mrb[0].mxu0
    %v2431 = vadd.f32 0.0, %v2430
    %v2432 = vpop.f32.mrb[0].mxu0
    %2433 = vmatprep.mubr.bf16.mxu0 0
    %2434 = vmatmul.mubr.bf16.gmra.mrb[0].mxu0 %v2354
    %v2435 = vpop.f32.mrb[0].mxu0
    %v2436 = vadd.f32 0.0, %v2435
    %v2437 = vpop.f32.mrb[0].mxu0
    %v2438 = vpop.f32.mrb[0].mxu0
    %v2439 = vadd.f32 0.0, %v2438
    %v2440 = vpop.f32.mrb[0].mxu0
    %2441 = vmatprep.mubr.bf16.mxu0 0
    %2442 = vmatmul.mubr.bf16.gmra.mrb[0].mxu0 %v2357
    %v2443 = vpop.f32.mrb[0].mxu0
    %v2444 = vadd.f32 0.0, %v2443
    %v2445 = vpop.f32.mrb[0].mxu0
    %v2446 = vpop.f32.mrb[0].mxu0
    %v2447 = vadd.f32 0.0, %v2446
    %v2448 = vpop.f32.mrb[0].mxu0
    %2449 = vmatprep.mubr.bf16.mxu0 0
    %2450 = vmatmul.mubr.bf16.gmra.mrb[0].mxu0 %v2360
    %v2451 = vpop.f32.mrb[0].mxu0
    %v2452 = vadd.f32 0.0, %v2451
    %v2453 = vpop.f32.mrb[0].mxu0
    %v2454 = vpop.f32.mrb[0].mxu0
    %v2455 = vadd.f32 0.0, %v2454
    %v2456 = vpop.f32.mrb[0].mxu0
    %2457 = vmatprep.mubr.bf16.mxu0 0
    %2458 = vmatmul.mubr.bf16.gmra.mrb[0].mxu0 %v2363
    %v2459 = vpop.f32.mrb[0].mxu0
    %v2460 = vadd.f32 0.0, %v2459
    %v2461 = vpop.f32.mrb[0].mxu0
    %v2462 = vpop.f32.mrb[0].mxu0
    %v2463 = vadd.f32 0.0, %v2462
    %v2464 = vpop.f32.mrb[0].mxu0
    %2465 = vdwg.mxu0
    %2482 = vrot.lane.b32.xlu0 %v2404, 4
    %v2483 = vpop.permute.xlu0 %2482
    %2484 = vrot.lane.b32.xlu0 %v2407, 4
    %v2485 = vpop.permute.xlu0 %2484
    %2486 = vrot.lane.b32.xlu0 %v2412, 4
    %v2487 = vpop.permute.xlu0 %2486
    %2488 = vrot.lane.b32.xlu0 %v2415, 4
    %v2489 = vpop.permute.xlu0 %2488
    %2490 = vrot.lane.b32.xlu0 %v2420, 4
    %v2491 = vpop.permute.xlu0 %2490
    %2492 = vrot.lane.b32.xlu0 %v2423, 4
    %v2493 = vpop.permute.xlu0 %2492
    %2494 = vrot.lane.b32.xlu0 %v2428, 4
    %v2495 = vpop.permute.xlu0 %2494
    %2496 = vrot.lane.b32.xlu0 %v2431, 4
    %v2497 = vpop.permute.xlu0 %2496
    %2498 = vrot.lane.b32.xlu0 %v2436, 4
    %v2499 = vpop.permute.xlu0 %2498
    %2500 = vrot.lane.b32.xlu0 %v2439, 4
    %v2501 = vpop.permute.xlu0 %2500
    %2502 = vrot.lane.b32.xlu0 %v2444, 4
    %v2503 = vpop.permute.xlu0 %2502
    %2504 = vrot.lane.b32.xlu0 %v2447, 4
    %v2505 = vpop.permute.xlu0 %2504
    %2506 = vrot.lane.b32.xlu0 %v2452, 4
    %v2507 = vpop.permute.xlu0 %2506
    %2508 = vrot.lane.b32.xlu0 %v2455, 4
    %v2509 = vpop.permute.xlu0 %2508
    %2510 = vrot.lane.b32.xlu0 %v2460, 4
    %v2511 = vpop.permute.xlu0 %2510
    %2512 = vrot.lane.b32.xlu0 %v2463, 4
    %v2513 = vpop.permute.xlu0 %2512
    %v2530 = vadd.f32 %v955, %v2483
    %v2531 = vadd.f32 %v956, %v2485
    %v2532 = vadd.f32 %v957, %v2487
    %v2533 = vadd.f32 %v958, %v2489
    %v2534 = vadd.f32 %v959, %v2491
    %v2535 = vadd.f32 %v960, %v2493
    %v2536 = vadd.f32 %v961, %v2495
    %v2537 = vadd.f32 %v962, %v2497
    %v2538 = vadd.f32 %v963, %v2499
    %v2539 = vadd.f32 %v964, %v2501
    %v2540 = vadd.f32 %v965, %v2503
    %v2541 = vadd.f32 %v966, %v2505
    %v2542 = vadd.f32 %v967, %v2507
    %v2543 = vadd.f32 %v968, %v2509
    %v2544 = vadd.f32 %v969, %v2511
    %v2545 = vadd.f32 %v970, %v2513
    %2562 = vrot.lane.b32.xlu0 %v2530, 124
    %v2563 = vpop.permute.xlu0 %2562
    %2564 = vrot.lane.b32.xlu0 %v2531, 124
    %v2565 = vpop.permute.xlu0 %2564
    %2566 = vrot.lane.b32.xlu0 %v2532, 124
    %v2567 = vpop.permute.xlu0 %2566
    %2568 = vrot.lane.b32.xlu0 %v2533, 124
    %v2569 = vpop.permute.xlu0 %2568
    %2570 = vrot.lane.b32.xlu0 %v2534, 124
    %v2571 = vpop.permute.xlu0 %2570
    %2572 = vrot.lane.b32.xlu0 %v2535, 124
    %v2573 = vpop.permute.xlu0 %2572
    %2574 = vrot.lane.b32.xlu0 %v2536, 124
    %v2575 = vpop.permute.xlu0 %2574
    %2576 = vrot.lane.b32.xlu0 %v2537, 124
    %v2577 = vpop.permute.xlu0 %2576
    %2578 = vrot.lane.b32.xlu0 %v2538, 124
    %v2579 = vpop.permute.xlu0 %2578
    %2580 = vrot.lane.b32.xlu0 %v2539, 124
    %v2581 = vpop.permute.xlu0 %2580
    %2582 = vrot.lane.b32.xlu0 %v2540, 124
    %v2583 = vpop.permute.xlu0 %2582
    %2584 = vrot.lane.b32.xlu0 %v2541, 124
    %v2585 = vpop.permute.xlu0 %2584
    %2586 = vrot.lane.b32.xlu0 %v2542, 124
    %v2587 = vpop.permute.xlu0 %2586
    %2588 = vrot.lane.b32.xlu0 %v2543, 124
    %v2589 = vpop.permute.xlu0 %2588
    %2590 = vrot.lane.b32.xlu0 %v2544, 124
    %v2591 = vpop.permute.xlu0 %2590
    %2592 = vrot.lane.b32.xlu0 %v2545, 124
    %v2593 = vpop.permute.xlu0 %2592
    %2610 = vst.msk [vmem:[%s1115 + $0x8] sm:$0xff] %vm43, %v2563
    %2611 = vst.msk [vmem:[%s1115 + $0x20] sm:$0xff] %vm43, %v2565
    %2612 = vst.msk [vmem:[%s1115 + $0x38] sm:$0xff] %vm43, %v2567
    %2613 = vst.msk [vmem:[%s1115 + $0x50] sm:$0xff] %vm43, %v2569
    %2614 = vst.msk [vmem:[%s1115 + $0x68] sm:$0xff] %vm43, %v2571
    %2615 = vst.msk [vmem:[%s1115 + $0x80] sm:$0xff] %vm43, %v2573
    %2616 = vst.msk [vmem:[%s1115 + $0x98] sm:$0xff] %vm43, %v2575
    %2617 = vst.msk [vmem:[%s1115 + $0xb0] sm:$0xff] %vm43, %v2577
    %2618 = vst.msk [vmem:[%s1115 + $0xf8] sm:$0xff] %vm43, %v2579
    %2619 = vst.msk [vmem:[%s1115 + $0x110] sm:$0xff] %vm43, %v2581
    %2620 = vst.msk [vmem:[%s1115 + $0x128] sm:$0xff] %vm43, %v2583
    %2621 = vst.msk [vmem:[%s1115 + $0x140] sm:$0xff] %vm43, %v2585
    %2622 = vst.msk [vmem:[%s1115 + $0x158] sm:$0xff] %vm43, %v2587
    %2623 = vst.msk [vmem:[%s1115 + $0x170] sm:$0xff] %vm43, %v2589
    %2624 = vst.msk [vmem:[%s1115 + $0x188] sm:$0xff] %vm43, %v2591
    %2625 = vst.msk [vmem:[%s1115 + $0x1a0] sm:$0xff] %vm43, %v2593
    %v2626 = vld [vmem:[#allocation2] sm:$0xff]
    %v2627 = vld [vmem:[#allocation2 + $0x8] sm:$0xff]
    %v2628 = vld [vmem:[#allocation2 + $0x10] sm:$0xff]
    %v2629 = vld [vmem:[#allocation2 + $0x18] sm:$0xff]
    %v2630 = vld [vmem:[#allocation2 + $0x20] sm:$0xff]
    %v2631 = vld [vmem:[#allocation2 + $0x28] sm:$0xff]
    %v2632 = vld [vmem:[#allocation2 + $0x30] sm:$0xff]
    %v2633 = vld [vmem:[#allocation2 + $0x38] sm:$0xff]
    %v2634 = vld [vmem:[#allocation2 + $0x40] sm:$0xff]
    %v2635 = vld [vmem:[#allocation2 + $0x48] sm:$0xff]
    %v2636 = vld [vmem:[#allocation2 + $0x50] sm:$0xff]
    %v2637 = vld [vmem:[#allocation2 + $0x58] sm:$0xff]
    %v2638 = vld [vmem:[#allocation2 + $0x60] sm:$0xff]
    %v2639 = vld [vmem:[#allocation2 + $0x68] sm:$0xff]
    %v2640 = vld [vmem:[#allocation2 + $0x70] sm:$0xff]
    %v2641 = vld [vmem:[#allocation2 + $0x78] sm:$0xff]
    %v2642 = vld [vmem:[#allocation2 + $0x80] sm:$0xff]
    %v2643 = vld [vmem:[#allocation2 + $0x88] sm:$0xff]
    %v2644 = vld [vmem:[#allocation2 + $0x90] sm:$0xff]
    %v2645 = vld [vmem:[#allocation2 + $0x98] sm:$0xff]
    %v2646 = vld [vmem:[#allocation2 + $0xa0] sm:$0xff]
    %v2647 = vld [vmem:[#allocation2 + $0xa8] sm:$0xff]
    %v2648 = vld [vmem:[#allocation2 + $0xb0] sm:$0xff]
    %v2649 = vld [vmem:[#allocation2 + $0xb8] sm:$0xff]
    %v2650 = vld [vmem:[#allocation2 + $0xc0] sm:$0xff]
    %v2651 = vld [vmem:[#allocation2 + $0xc8] sm:$0xff]
    %v2652 = vld [vmem:[#allocation2 + $0xd0] sm:$0xff]
    %v2653 = vld [vmem:[#allocation2 + $0xd8] sm:$0xff]
    %v2654 = vld [vmem:[#allocation2 + $0xe0] sm:$0xff]
    %v2655 = vld [vmem:[#allocation2 + $0xe8] sm:$0xff]
    %v2656 = vld [vmem:[#allocation2 + $0xf0] sm:$0xff]
    %v2657 = vld [vmem:[#allocation2 + $0xf8] sm:$0xff]
    %v2658 = vld [vmem:[#allocation2 + $0x100] sm:$0xff]
    %v2659 = vld [vmem:[#allocation2 + $0x108] sm:$0xff]
    %v2660 = vld [vmem:[#allocation2 + $0x110] sm:$0xff]
    %v2661 = vld [vmem:[#allocation2 + $0x118] sm:$0xff]
    %v2662 = vld [vmem:[#allocation2 + $0x120] sm:$0xff]
    %v2663 = vld [vmem:[#allocation2 + $0x128] sm:$0xff]
    %v2664 = vld [vmem:[#allocation2 + $0x130] sm:$0xff]
    %v2665 = vld [vmem:[#allocation2 + $0x138] sm:$0xff]
    %v2666 = vld [vmem:[#allocation2 + $0x140] sm:$0xff]
    %v2667 = vld [vmem:[#allocation2 + $0x148] sm:$0xff]
    %v2668 = vld [vmem:[#allocation2 + $0x150] sm:$0xff]
    %v2669 = vld [vmem:[#allocation2 + $0x158] sm:$0xff]
    %v2670 = vld [vmem:[#allocation2 + $0x160] sm:$0xff]
    %v2671 = vld [vmem:[#allocation2 + $0x168] sm:$0xff]
    %v2672 = vld [vmem:[#allocation2 + $0x170] sm:$0xff]
    %v2673 = vld [vmem:[#allocation2 + $0x178] sm:$0xff]
    %v2674 = vld [vmem:[#allocation2 + $0x180] sm:$0xff]
    %v2675 = vld [vmem:[#allocation2 + $0x188] sm:$0xff]
    %v2676 = vld [vmem:[#allocation2 + $0x190] sm:$0xff]
    %v2677 = vld [vmem:[#allocation2 + $0x198] sm:$0xff]
    %v2678 = vld [vmem:[#allocation2 + $0x1a0] sm:$0xff]
    %v2679 = vld [vmem:[#allocation2 + $0x1a8] sm:$0xff]
    %v2680 = vld [vmem:[#allocation2 + $0x1b0] sm:$0xff]
    %v2681 = vld [vmem:[#allocation2 + $0x1b8] sm:$0xff]
    %v2682 = vld [vmem:[#allocation2 + $0x1c0] sm:$0xff]
    %v2683 = vld [vmem:[#allocation2 + $0x1c8] sm:$0xff]
    %v2684 = vld [vmem:[#allocation2 + $0x1d0] sm:$0xff]
    %v2685 = vld [vmem:[#allocation2 + $0x1d8] sm:$0xff]
    %v2702 = vrot.slane %v2627, 1
    %v2703 = vrot.slane %v2630, 1
    %v2704 = vrot.slane %v2633, 1
    %v2705 = vrot.slane %v2636, 1
    %v2706 = vrot.slane %v2639, 1
    %v2707 = vrot.slane %v2642, 1
    %v2708 = vrot.slane %v2645, 1
    %v2709 = vrot.slane %v2648, 1
    %v2710 = vrot.slane %v2657, 1
    %v2711 = vrot.slane %v2660, 1
    %v2712 = vrot.slane %v2663, 1
    %v2713 = vrot.slane %v2666, 1
    %v2714 = vrot.slane %v2669, 1
    %v2715 = vrot.slane %v2672, 1
    %v2716 = vrot.slane %v2675, 1
    %v2717 = vrot.slane %v2678, 1
    %2718 = vrot.lane.b32.xlu0 %v2702, 4
    %v2719 = vpop.permute.xlu0 %2718
    %2720 = vrot.lane.b32.xlu0 %v2703, 4
    %v2721 = vpop.permute.xlu0 %2720
    %2722 = vrot.lane.b32.xlu0 %v2704, 4
    %v2723 = vpop.permute.xlu0 %2722
    %2724 = vrot.lane.b32.xlu0 %v2705, 4
    %v2725 = vpop.permute.xlu0 %2724
    %2726 = vrot.lane.b32.xlu0 %v2706, 4
    %v2727 = vpop.permute.xlu0 %2726
    %2728 = vrot.lane.b32.xlu0 %v2707, 4
    %v2729 = vpop.permute.xlu0 %2728
    %2730 = vrot.lane.b32.xlu0 %v2708, 4
    %v2731 = vpop.permute.xlu0 %2730
    %2732 = vrot.lane.b32.xlu0 %v2709, 4
    %v2733 = vpop.permute.xlu0 %2732
    %2734 = vrot.lane.b32.xlu0 %v2710, 4
    %v2735 = vpop.permute.xlu0 %2734
    %2736 = vrot.lane.b32.xlu0 %v2711, 4
    %v2737 = vpop.permute.xlu0 %2736
    %2738 = vrot.lane.b32.xlu0 %v2712, 4
    %v2739 = vpop.permute.xlu0 %2738
    %2740 = vrot.lane.b32.xlu0 %v2713, 4
    %v2741 = vpop.permute.xlu0 %2740
    %2742 = vrot.lane.b32.xlu0 %v2714, 4
    %v2743 = vpop.permute.xlu0 %2742
    %2744 = vrot.lane.b32.xlu0 %v2715, 4
    %v2745 = vpop.permute.xlu0 %2744
    %2746 = vrot.lane.b32.xlu0 %v2716, 4
    %v2747 = vpop.permute.xlu0 %2746
    %2748 = vrot.lane.b32.xlu0 %v2717, 4
    %v2749 = vpop.permute.xlu0 %2748
    %v2782 = vrot.slane %v2627, 2
    %v2783 = vrot.slane %v2628, 2
    %v2784 = vsel %vm795, %v2782, %v2783
    %v2785 = vrot.slane %v2630, 2
    %v2786 = vrot.slane %v2631, 2
    %v2787 = vsel %vm795, %v2785, %v2786
    %v2788 = vrot.slane %v2633, 2
    %v2789 = vrot.slane %v2634, 2
    %v2790 = vsel %vm795, %v2788, %v2789
    %v2791 = vrot.slane %v2636, 2
    %v2792 = vrot.slane %v2637, 2
    %v2793 = vsel %vm795, %v2791, %v2792
    %v2794 = vrot.slane %v2639, 2
    %v2795 = vrot.slane %v2640, 2
    %v2796 = vsel %vm795, %v2794, %v2795
    %v2797 = vrot.slane %v2642, 2
    %v2798 = vrot.slane %v2643, 2
    %v2799 = vsel %vm795, %v2797, %v2798
    %v2800 = vrot.slane %v2645, 2
    %v2801 = vrot.slane %v2646, 2
    %v2802 = vsel %vm795, %v2800, %v2801
    %v2803 = vrot.slane %v2648, 2
    %v2804 = vrot.slane %v2649, 2
    %v2805 = vsel %vm795, %v2803, %v2804
    %v2806 = vrot.slane %v2657, 2
    %v2807 = vrot.slane %v2658, 2
    %v2808 = vsel %vm795, %v2806, %v2807
    %v2809 = vrot.slane %v2660, 2
    %v2810 = vrot.slane %v2661, 2
    %v2811 = vsel %vm795, %v2809, %v2810
    %v2812 = vrot.slane %v2663, 2
    %v2813 = vrot.slane %v2664, 2
    %v2814 = vsel %vm795, %v2812, %v2813
    %v2815 = vrot.slane %v2666, 2
    %v2816 = vrot.slane %v2667, 2
    %v2817 = vsel %vm795, %v2815, %v2816
    %v2818 = vrot.slane %v2669, 2
    %v2819 = vrot.slane %v2670, 2
    %v2820 = vsel %vm795, %v2818, %v2819
    %v2821 = vrot.slane %v2672, 2
    %v2822 = vrot.slane %v2673, 2
    %v2823 = vsel %vm795, %v2821, %v2822
    %v2824 = vrot.slane %v2675, 2
    %v2825 = vrot.slane %v2676, 2
    %v2826 = vsel %vm795, %v2824, %v2825
    %v2827 = vrot.slane %v2678, 2
    %v2828 = vrot.slane %v2679, 2
    %v2829 = vsel %vm795, %v2827, %v2828
    %2830 = vrot.lane.b32.xlu0 %v2782, 8
    %v2831 = vpop.permute.xlu0 %2830
    %2832 = vrot.lane.b32.xlu0 %v2784, 8
    %v2833 = vpop.permute.xlu0 %2832
    %2834 = vrot.lane.b32.xlu0 %v2785, 8
    %v2835 = vpop.permute.xlu0 %2834
    %2836 = vrot.lane.b32.xlu0 %v2787, 8
    %v2837 = vpop.permute.xlu0 %2836
    %2838 = vrot.lane.b32.xlu0 %v2788, 8
    %v2839 = vpop.permute.xlu0 %2838
    %2840 = vrot.lane.b32.xlu0 %v2790, 8
    %v2841 = vpop.permute.xlu0 %2840
    %2842 = vrot.lane.b32.xlu0 %v2791, 8
    %v2843 = vpop.permute.xlu0 %2842
    %2844 = vrot.lane.b32.xlu0 %v2793, 8
    %v2845 = vpop.permute.xlu0 %2844
    %2846 = vrot.lane.b32.xlu0 %v2794, 8
    %v2847 = vpop.permute.xlu0 %2846
    %2848 = vrot.lane.b32.xlu0 %v2796, 8
    %v2849 = vpop.permute.xlu0 %2848
    %2850 = vrot.lane.b32.xlu0 %v2797, 8
    %v2851 = vpop.permute.xlu0 %2850
    %2852 = vrot.lane.b32.xlu0 %v2799, 8
    %v2853 = vpop.permute.xlu0 %2852
    %2854 = vrot.lane.b32.xlu0 %v2800, 8
    %v2855 = vpop.permute.xlu0 %2854
    %2856 = vrot.lane.b32.xlu0 %v2802, 8
    %v2857 = vpop.permute.xlu0 %2856
    %2858 = vrot.lane.b32.xlu0 %v2803, 8
    %v2859 = vpop.permute.xlu0 %2858
    %2860 = vrot.lane.b32.xlu0 %v2805, 8
    %v2861 = vpop.permute.xlu0 %2860
    %2862 = vrot.lane.b32.xlu0 %v2806, 8
    %v2863 = vpop.permute.xlu0 %2862
    %2864 = vrot.lane.b32.xlu0 %v2808, 8
    %v2865 = vpop.permute.xlu0 %2864
    %2866 = vrot.lane.b32.xlu0 %v2809, 8
    %v2867 = vpop.permute.xlu0 %2866
    %2868 = vrot.lane.b32.xlu0 %v2811, 8
    %v2869 = vpop.permute.xlu0 %2868
    %2870 = vrot.lane.b32.xlu0 %v2812, 8
    %v2871 = vpop.permute.xlu0 %2870
    %2872 = vrot.lane.b32.xlu0 %v2814, 8
    %v2873 = vpop.permute.xlu0 %2872
    %2874 = vrot.lane.b32.xlu0 %v2815, 8
    %v2875 = vpop.permute.xlu0 %2874
    %2876 = vrot.lane.b32.xlu0 %v2817, 8
    %v2877 = vpop.permute.xlu0 %2876
    %2878 = vrot.lane.b32.xlu0 %v2818, 8
    %v2879 = vpop.permute.xlu0 %2878
    %2880 = vrot.lane.b32.xlu0 %v2820, 8
    %v2881 = vpop.permute.xlu0 %2880
    %2882 = vrot.lane.b32.xlu0 %v2821, 8
    %v2883 = vpop.permute.xlu0 %2882
    %2884 = vrot.lane.b32.xlu0 %v2823, 8
    %v2885 = vpop.permute.xlu0 %2884
    %2886 = vrot.lane.b32.xlu0 %v2824, 8
    %v2887 = vpop.permute.xlu0 %2886
    %2888 = vrot.lane.b32.xlu0 %v2826, 8
    %v2889 = vpop.permute.xlu0 %2888
    %2890 = vrot.lane.b32.xlu0 %v2827, 8
    %v2891 = vpop.permute.xlu0 %2890
    %2892 = vrot.lane.b32.xlu0 %v2829, 8
    %v2893 = vpop.permute.xlu0 %2892
    %2944 = vrot.lane.b32.xlu0 %v2629, 12
    %v2945 = vpop.permute.xlu0 %2944
    %2946 = vrot.lane.b32.xlu0 %v2630, 12
    %v2947 = vpop.permute.xlu0 %2946
    %2948 = vrot.lane.b32.xlu0 %v2632, 12
    %v2949 = vpop.permute.xlu0 %2948
    %2950 = vrot.lane.b32.xlu0 %v2633, 12
    %v2951 = vpop.permute.xlu0 %2950
    %2952 = vrot.lane.b32.xlu0 %v2635, 12
    %v2953 = vpop.permute.xlu0 %2952
    %2954 = vrot.lane.b32.xlu0 %v2636, 12
    %v2955 = vpop.permute.xlu0 %2954
    %2956 = vrot.lane.b32.xlu0 %v2638, 12
    %v2957 = vpop.permute.xlu0 %2956
    %2958 = vrot.lane.b32.xlu0 %v2639, 12
    %v2959 = vpop.permute.xlu0 %2958
    %2960 = vrot.lane.b32.xlu0 %v2641, 12
    %v2961 = vpop.permute.xlu0 %2960
    %2962 = vrot.lane.b32.xlu0 %v2642, 12
    %v2963 = vpop.permute.xlu0 %2962
    %2964 = vrot.lane.b32.xlu0 %v2644, 12
    %v2965 = vpop.permute.xlu0 %2964
    %2966 = vrot.lane.b32.xlu0 %v2645, 12
    %v2967 = vpop.permute.xlu0 %2966
    %2968 = vrot.lane.b32.xlu0 %v2647, 12
    %v2969 = vpop.permute.xlu0 %2968
    %2970 = vrot.lane.b32.xlu0 %v2648, 12
    %v2971 = vpop.permute.xlu0 %2970
    %2972 = vrot.lane.b32.xlu0 %v2650, 12
    %v2973 = vpop.permute.xlu0 %2972
    %2974 = vrot.lane.b32.xlu0 %v2651, 12
    %v2975 = vpop.permute.xlu0 %2974
    %2976 = vrot.lane.b32.xlu0 %v2659, 12
    %v2977 = vpop.permute.xlu0 %2976
    %2978 = vrot.lane.b32.xlu0 %v2660, 12
    %v2979 = vpop.permute.xlu0 %2978
    %2980 = vrot.lane.b32.xlu0 %v2662, 12
    %v2981 = vpop.permute.xlu0 %2980
    %2982 = vrot.lane.b32.xlu0 %v2663, 12
    %v2983 = vpop.permute.xlu0 %2982
    %2984 = vrot.lane.b32.xlu0 %v2665, 12
    %v2985 = vpop.permute.xlu0 %2984
    %2986 = vrot.lane.b32.xlu0 %v2666, 12
    %v2987 = vpop.permute.xlu0 %2986
    %2988 = vrot.lane.b32.xlu0 %v2668, 12
    %v2989 = vpop.permute.xlu0 %2988
    %2990 = vrot.lane.b32.xlu0 %v2669, 12
    %v2991 = vpop.permute.xlu0 %2990
    %2992 = vrot.lane.b32.xlu0 %v2671, 12
    %v2993 = vpop.permute.xlu0 %2992
    %2994 = vrot.lane.b32.xlu0 %v2672, 12
    %v2995 = vpop.permute.xlu0 %2994
    %2996 = vrot.lane.b32.xlu0 %v2674, 12
    %v2997 = vpop.permute.xlu0 %2996
    %2998 = vrot.lane.b32.xlu0 %v2675, 12
    %v2999 = vpop.permute.xlu0 %2998
    %3000 = vrot.lane.b32.xlu0 %v2677, 12
    %v3001 = vpop.permute.xlu0 %3000
    %3002 = vrot.lane.b32.xlu0 %v2678, 12
    %v3003 = vpop.permute.xlu0 %3002
    %3004 = vrot.lane.b32.xlu0 %v2680, 12
    %v3005 = vpop.permute.xlu0 %3004
    %3006 = vrot.lane.b32.xlu0 %v2681, 12
    %v3007 = vpop.permute.xlu0 %3006
    %v3040 = vrot.slane %v2651, 1
    %v3041 = vrot.slane %v2681, 1
    %3042 = vrot.lane.b32.xlu0 %v2703, 16
    %v3043 = vpop.permute.xlu0 %3042
    %3044 = vrot.lane.b32.xlu0 %v2704, 16
    %v3045 = vpop.permute.xlu0 %3044
    %3046 = vrot.lane.b32.xlu0 %v2705, 16
    %v3047 = vpop.permute.xlu0 %3046
    %3048 = vrot.lane.b32.xlu0 %v2706, 16
    %v3049 = vpop.permute.xlu0 %3048
    %3050 = vrot.lane.b32.xlu0 %v2707, 16
    %v3051 = vpop.permute.xlu0 %3050
    %3052 = vrot.lane.b32.xlu0 %v2708, 16
    %v3053 = vpop.permute.xlu0 %3052
    %3054 = vrot.lane.b32.xlu0 %v2709, 16
    %v3055 = vpop.permute.xlu0 %3054
    %3056 = vrot.lane.b32.xlu0 %v3040, 16
    %v3057 = vpop.permute.xlu0 %3056
    %3058 = vrot.lane.b32.xlu0 %v2711, 16
    %v3059 = vpop.permute.xlu0 %3058
    %3060 = vrot.lane.b32.xlu0 %v2712, 16
    %v3061 = vpop.permute.xlu0 %3060
    %3062 = vrot.lane.b32.xlu0 %v2713, 16
    %v3063 = vpop.permute.xlu0 %3062
    %3064 = vrot.lane.b32.xlu0 %v2714, 16
    %v3065 = vpop.permute.xlu0 %3064
    %3066 = vrot.lane.b32.xlu0 %v2715, 16
    %v3067 = vpop.permute.xlu0 %3066
    %3068 = vrot.lane.b32.xlu0 %v2716, 16
    %v3069 = vpop.permute.xlu0 %3068
    %3070 = vrot.lane.b32.xlu0 %v2717, 16
    %v3071 = vpop.permute.xlu0 %3070
    %3072 = vrot.lane.b32.xlu0 %v3041, 16
    %v3073 = vpop.permute.xlu0 %3072
    %v3092 = vrot.slane %v2651, 2
    %v3093 = vrot.slane %v2652, 2
    %v3094 = vsel %vm795, %v3092, %v3093
    %v3095 = vrot.slane %v2681, 2
    %v3096 = vrot.slane %v2682, 2
    %v3097 = vsel %vm795, %v3095, %v3096
    %3098 = vrot.lane.b32.xlu0 %v2785, 20
    %v3099 = vpop.permute.xlu0 %3098
    %3100 = vrot.lane.b32.xlu0 %v2787, 20
    %v3101 = vpop.permute.xlu0 %3100
    %3102 = vrot.lane.b32.xlu0 %v2788, 20
    %v3103 = vpop.permute.xlu0 %3102
    %3104 = vrot.lane.b32.xlu0 %v2790, 20
    %v3105 = vpop.permute.xlu0 %3104
    %3106 = vrot.lane.b32.xlu0 %v2791, 20
    %v3107 = vpop.permute.xlu0 %3106
    %3108 = vrot.lane.b32.xlu0 %v2793, 20
    %v3109 = vpop.permute.xlu0 %3108
    %3110 = vrot.lane.b32.xlu0 %v2794, 20
    %v3111 = vpop.permute.xlu0 %3110
    %3112 = vrot.lane.b32.xlu0 %v2796, 20
    %v3113 = vpop.permute.xlu0 %3112
    %3114 = vrot.lane.b32.xlu0 %v2797, 20
    %v3115 = vpop.permute.xlu0 %3114
    %3116 = vrot.lane.b32.xlu0 %v2799, 20
    %v3117 = vpop.permute.xlu0 %3116
    %3118 = vrot.lane.b32.xlu0 %v2800, 20
    %v3119 = vpop.permute.xlu0 %3118
    %3120 = vrot.lane.b32.xlu0 %v2802, 20
    %v3121 = vpop.permute.xlu0 %3120
    %3122 = vrot.lane.b32.xlu0 %v2803, 20
    %v3123 = vpop.permute.xlu0 %3122
    %3124 = vrot.lane.b32.xlu0 %v2805, 20
    %v3125 = vpop.permute.xlu0 %3124
    %3126 = vrot.lane.b32.xlu0 %v3092, 20
    %v3127 = vpop.permute.xlu0 %3126
    %3128 = vrot.lane.b32.xlu0 %v3094, 20
    %v3129 = vpop.permute.xlu0 %3128
    %3130 = vrot.lane.b32.xlu0 %v2809, 20
    %v3131 = vpop.permute.xlu0 %3130
    %3132 = vrot.lane.b32.xlu0 %v2811, 20
    %v3133 = vpop.permute.xlu0 %3132
    %3134 = vrot.lane.b32.xlu0 %v2812, 20
    %v3135 = vpop.permute.xlu0 %3134
    %3136 = vrot.lane.b32.xlu0 %v2814, 20
    %v3137 = vpop.permute.xlu0 %3136
    %3138 = vrot.lane.b32.xlu0 %v2815, 20
    %v3139 = vpop.permute.xlu0 %3138
    %3140 = vrot.lane.b32.xlu0 %v2817, 20
    %v3141 = vpop.permute.xlu0 %3140
    %3142 = vrot.lane.b32.xlu0 %v2818, 20
    %v3143 = vpop.permute.xlu0 %3142
    %3144 = vrot.lane.b32.xlu0 %v2820, 20
    %v3145 = vpop.permute.xlu0 %3144
    %3146 = vrot.lane.b32.xlu0 %v2821, 20
    %v3147 = vpop.permute.xlu0 %3146
    %3148 = vrot.lane.b32.xlu0 %v2823, 20
    %v3149 = vpop.permute.xlu0 %3148
    %3150 = vrot.lane.b32.xlu0 %v2824, 20
    %v3151 = vpop.permute.xlu0 %3150
    %3152 = vrot.lane.b32.xlu0 %v2826, 20
    %v3153 = vpop.permute.xlu0 %3152
    %3154 = vrot.lane.b32.xlu0 %v2827, 20
    %v3155 = vpop.permute.xlu0 %3154
    %3156 = vrot.lane.b32.xlu0 %v2829, 20
    %v3157 = vpop.permute.xlu0 %3156
    %3158 = vrot.lane.b32.xlu0 %v3095, 20
    %v3159 = vpop.permute.xlu0 %3158
    %3160 = vrot.lane.b32.xlu0 %v3097, 20
    %v3161 = vpop.permute.xlu0 %3160
    %3198 = vrot.lane.b32.xlu0 %v2632, 24
    %v3199 = vpop.permute.xlu0 %3198
    %3200 = vrot.lane.b32.xlu0 %v2633, 24
    %v3201 = vpop.permute.xlu0 %3200
    %3202 = vrot.lane.b32.xlu0 %v2635, 24
    %v3203 = vpop.permute.xlu0 %3202
    %3204 = vrot.lane.b32.xlu0 %v2636, 24
    %v3205 = vpop.permute.xlu0 %3204
    %3206 = vrot.lane.b32.xlu0 %v2638, 24
    %v3207 = vpop.permute.xlu0 %3206
    %3208 = vrot.lane.b32.xlu0 %v2639, 24
    %v3209 = vpop.permute.xlu0 %3208
    %3210 = vrot.lane.b32.xlu0 %v2641, 24
    %v3211 = vpop.permute.xlu0 %3210
    %3212 = vrot.lane.b32.xlu0 %v2642, 24
    %v3213 = vpop.permute.xlu0 %3212
    %3214 = vrot.lane.b32.xlu0 %v2644, 24
    %v3215 = vpop.permute.xlu0 %3214
    %3216 = vrot.lane.b32.xlu0 %v2645, 24
    %v3217 = vpop.permute.xlu0 %3216
    %3218 = vrot.lane.b32.xlu0 %v2647, 24
    %v3219 = vpop.permute.xlu0 %3218
    %3220 = vrot.lane.b32.xlu0 %v2648, 24
    %v3221 = vpop.permute.xlu0 %3220
    %3222 = vrot.lane.b32.xlu0 %v2650, 24
    %v3223 = vpop.permute.xlu0 %3222
    %3224 = vrot.lane.b32.xlu0 %v2651, 24
    %v3225 = vpop.permute.xlu0 %3224
    %3226 = vrot.lane.b32.xlu0 %v2653, 24
    %v3227 = vpop.permute.xlu0 %3226
    %3228 = vrot.lane.b32.xlu0 %v2654, 24
    %v3229 = vpop.permute.xlu0 %3228
    %3230 = vrot.lane.b32.xlu0 %v2662, 24
    %v3231 = vpop.permute.xlu0 %3230
    %3232 = vrot.lane.b32.xlu0 %v2663, 24
    %v3233 = vpop.permute.xlu0 %3232
    %3234 = vrot.lane.b32.xlu0 %v2665, 24
    %v3235 = vpop.permute.xlu0 %3234
    %3236 = vrot.lane.b32.xlu0 %v2666, 24
    %v3237 = vpop.permute.xlu0 %3236
    %3238 = vrot.lane.b32.xlu0 %v2668, 24
    %v3239 = vpop.permute.xlu0 %3238
    %3240 = vrot.lane.b32.xlu0 %v2669, 24
    %v3241 = vpop.permute.xlu0 %3240
    %3242 = vrot.lane.b32.xlu0 %v2671, 24
    %v3243 = vpop.permute.xlu0 %3242
    %3244 = vrot.lane.b32.xlu0 %v2672, 24
    %v3245 = vpop.permute.xlu0 %3244
    %3246 = vrot.lane.b32.xlu0 %v2674, 24
    %v3247 = vpop.permute.xlu0 %3246
    %3248 = vrot.lane.b32.xlu0 %v2675, 24
    %v3249 = vpop.permute.xlu0 %3248
    %3250 = vrot.lane.b32.xlu0 %v2677, 24
    %v3251 = vpop.permute.xlu0 %3250
    %3252 = vrot.lane.b32.xlu0 %v2678, 24
    %v3253 = vpop.permute.xlu0 %3252
    %3254 = vrot.lane.b32.xlu0 %v2680, 24
    %v3255 = vpop.permute.xlu0 %3254
    %3256 = vrot.lane.b32.xlu0 %v2681, 24
    %v3257 = vpop.permute.xlu0 %3256
    %3258 = vrot.lane.b32.xlu0 %v2683, 24
    %v3259 = vpop.permute.xlu0 %3258
    %3260 = vrot.lane.b32.xlu0 %v2684, 24
    %v3261 = vpop.permute.xlu0 %3260
    %v3294 = vrot.slane %v2654, 1
    %v3295 = vrot.slane %v2684, 1
    %3296 = vrot.lane.b32.xlu0 %v2704, 28
    %v3297 = vpop.permute.xlu0 %3296
    %3298 = vrot.lane.b32.xlu0 %v2705, 28
    %v3299 = vpop.permute.xlu0 %3298
    %3300 = vrot.lane.b32.xlu0 %v2706, 28
    %v3301 = vpop.permute.xlu0 %3300
    %3302 = vrot.lane.b32.xlu0 %v2707, 28
    %v3303 = vpop.permute.xlu0 %3302
    %3304 = vrot.lane.b32.xlu0 %v2708, 28
    %v3305 = vpop.permute.xlu0 %3304
    %3306 = vrot.lane.b32.xlu0 %v2709, 28
    %v3307 = vpop.permute.xlu0 %3306
    %3308 = vrot.lane.b32.xlu0 %v3040, 28
    %v3309 = vpop.permute.xlu0 %3308
    %3310 = vrot.lane.b32.xlu0 %v3294, 28
    %v3311 = vpop.permute.xlu0 %3310
    %3312 = vrot.lane.b32.xlu0 %v2712, 28
    %v3313 = vpop.permute.xlu0 %3312
    %3314 = vrot.lane.b32.xlu0 %v2713, 28
    %v3315 = vpop.permute.xlu0 %3314
    %3316 = vrot.lane.b32.xlu0 %v2714, 28
    %v3317 = vpop.permute.xlu0 %3316
    %3318 = vrot.lane.b32.xlu0 %v2715, 28
    %v3319 = vpop.permute.xlu0 %3318
    %3320 = vrot.lane.b32.xlu0 %v2716, 28
    %v3321 = vpop.permute.xlu0 %3320
    %3322 = vrot.lane.b32.xlu0 %v2717, 28
    %v3323 = vpop.permute.xlu0 %3322
    %3324 = vrot.lane.b32.xlu0 %v3041, 28
    %v3325 = vpop.permute.xlu0 %3324
    %3326 = vrot.lane.b32.xlu0 %v3295, 28
    %v3327 = vpop.permute.xlu0 %3326
    %v3346 = vrot.slane %v2654, 2
    %v3347 = vrot.slane %v2655, 2
    %v3348 = vsel %vm795, %v3346, %v3347
    %v3349 = vrot.slane %v2684, 2
    %v3350 = vrot.slane %v2685, 2
    %v3351 = vsel %vm795, %v3349, %v3350
    %3352 = vrot.lane.b32.xlu0 %v2788, 32
    %v3353 = vpop.permute.xlu0 %3352
    %3354 = vrot.lane.b32.xlu0 %v2790, 32
    %v3355 = vpop.permute.xlu0 %3354
    %3356 = vrot.lane.b32.xlu0 %v2791, 32
    %v3357 = vpop.permute.xlu0 %3356
    %3358 = vrot.lane.b32.xlu0 %v2793, 32
    %v3359 = vpop.permute.xlu0 %3358
    %3360 = vrot.lane.b32.xlu0 %v2794, 32
    %v3361 = vpop.permute.xlu0 %3360
    %3362 = vrot.lane.b32.xlu0 %v2796, 32
    %v3363 = vpop.permute.xlu0 %3362
    %3364 = vrot.lane.b32.xlu0 %v2797, 32
    %v3365 = vpop.permute.xlu0 %3364
    %3366 = vrot.lane.b32.xlu0 %v2799, 32
    %v3367 = vpop.permute.xlu0 %3366
    %3368 = vrot.lane.b32.xlu0 %v2800, 32
    %v3369 = vpop.permute.xlu0 %3368
    %3370 = vrot.lane.b32.xlu0 %v2802, 32
    %v3371 = vpop.permute.xlu0 %3370
    %3372 = vrot.lane.b32.xlu0 %v2803, 32
    %v3373 = vpop.permute.xlu0 %3372
    %3374 = vrot.lane.b32.xlu0 %v2805, 32
    %v3375 = vpop.permute.xlu0 %3374
    %3376 = vrot.lane.b32.xlu0 %v3092, 32
    %v3377 = vpop.permute.xlu0 %3376
    %3378 = vrot.lane.b32.xlu0 %v3094, 32
    %v3379 = vpop.permute.xlu0 %3378
    %3380 = vrot.lane.b32.xlu0 %v3346, 32
    %v3381 = vpop.permute.xlu0 %3380
    %3382 = vrot.lane.b32.xlu0 %v3348, 32
    %v3383 = vpop.permute.xlu0 %3382
    %3384 = vrot.lane.b32.xlu0 %v2812, 32
    %v3385 = vpop.permute.xlu0 %3384
    %3386 = vrot.lane.b32.xlu0 %v2814, 32
    %v3387 = vpop.permute.xlu0 %3386
    %3388 = vrot.lane.b32.xlu0 %v2815, 32
    %v3389 = vpop.permute.xlu0 %3388
    %3390 = vrot.lane.b32.xlu0 %v2817, 32
    %v3391 = vpop.permute.xlu0 %3390
    %3392 = vrot.lane.b32.xlu0 %v2818, 32
    %v3393 = vpop.permute.xlu0 %3392
    %3394 = vrot.lane.b32.xlu0 %v2820, 32
    %v3395 = vpop.permute.xlu0 %3394
    %3396 = vrot.lane.b32.xlu0 %v2821, 32
    %v3397 = vpop.permute.xlu0 %3396
    %3398 = vrot.lane.b32.xlu0 %v2823, 32
    %v3399 = vpop.permute.xlu0 %3398
    %3400 = vrot.lane.b32.xlu0 %v2824, 32
    %v3401 = vpop.permute.xlu0 %3400
    %3402 = vrot.lane.b32.xlu0 %v2826, 32
    %v3403 = vpop.permute.xlu0 %3402
    %3404 = vrot.lane.b32.xlu0 %v2827, 32
    %v3405 = vpop.permute.xlu0 %3404
    %3406 = vrot.lane.b32.xlu0 %v2829, 32
    %v3407 = vpop.permute.xlu0 %3406
    %3408 = vrot.lane.b32.xlu0 %v3095, 32
    %v3409 = vpop.permute.xlu0 %3408
    %3410 = vrot.lane.b32.xlu0 %v3097, 32
    %v3411 = vpop.permute.xlu0 %3410
    %3412 = vrot.lane.b32.xlu0 %v3349, 32
    %v3413 = vpop.permute.xlu0 %3412
    %3414 = vrot.lane.b32.xlu0 %v3351, 32
    %v3415 = vpop.permute.xlu0 %3414
    %v3448 = vsel %vm43, %v2626, %v2719
    %v3449 = vsel %vm43, %v2627, %v2719
    %v3450 = vsel %vm43, %v2629, %v2721
    %v3451 = vsel %vm43, %v2630, %v2721
    %v3452 = vsel %vm43, %v2632, %v2723
    %v3453 = vsel %vm43, %v2633, %v2723
    %v3454 = vsel %vm43, %v2635, %v2725
    %v3455 = vsel %vm43, %v2636, %v2725
    %v3456 = vsel %vm43, %v2638, %v2727
    %v3457 = vsel %vm43, %v2639, %v2727
    %v3458 = vsel %vm43, %v2641, %v2729
    %v3459 = vsel %vm43, %v2642, %v2729
    %v3460 = vsel %vm43, %v2644, %v2731
    %v3461 = vsel %vm43, %v2645, %v2731
    %v3462 = vsel %vm43, %v2647, %v2733
    %v3463 = vsel %vm43, %v2648, %v2733
    %v3464 = vsel %vm43, %v2656, %v2735
    %v3465 = vsel %vm43, %v2657, %v2735
    %v3466 = vsel %vm43, %v2659, %v2737
    %v3467 = vsel %vm43, %v2660, %v2737
    %v3468 = vsel %vm43, %v2662, %v2739
    %v3469 = vsel %vm43, %v2663, %v2739
    %v3470 = vsel %vm43, %v2665, %v2741
    %v3471 = vsel %vm43, %v2666, %v2741
    %v3472 = vsel %vm43, %v2668, %v2743
    %v3473 = vsel %vm43, %v2669, %v2743
    %v3474 = vsel %vm43, %v2671, %v2745
    %v3475 = vsel %vm43, %v2672, %v2745
    %v3476 = vsel %vm43, %v2674, %v2747
    %v3477 = vsel %vm43, %v2675, %v2747
    %v3478 = vsel %vm43, %v2677, %v2749
    %v3479 = vsel %vm43, %v2678, %v2749
    %v3480 = vsel %vm1986, %v3448, %v2831
    %v3481 = vsel %vm1986, %v3449, %v2833
    %v3482 = vsel %vm1986, %v3450, %v2835
    %v3483 = vsel %vm1986, %v3451, %v2837
    %v3484 = vsel %vm1986, %v3452, %v2839
    %v3485 = vsel %vm1986, %v3453, %v2841
    %v3486 = vsel %vm1986, %v3454, %v2843
    %v3487 = vsel %vm1986, %v3455, %v2845
    %v3488 = vsel %vm1986, %v3456, %v2847
    %v3489 = vsel %vm1986, %v3457, %v2849
    %v3490 = vsel %vm1986, %v3458, %v2851
    %v3491 = vsel %vm1986, %v3459, %v2853
    %v3492 = vsel %vm1986, %v3460, %v2855
    %v3493 = vsel %vm1986, %v3461, %v2857
    %v3494 = vsel %vm1986, %v3462, %v2859
    %v3495 = vsel %vm1986, %v3463, %v2861
    %v3496 = vsel %vm1986, %v3464, %v2863
    %v3497 = vsel %vm1986, %v3465, %v2865
    %v3498 = vsel %vm1986, %v3466, %v2867
    %v3499 = vsel %vm1986, %v3467, %v2869
    %v3500 = vsel %vm1986, %v3468, %v2871
    %v3501 = vsel %vm1986, %v3469, %v2873
    %v3502 = vsel %vm1986, %v3470, %v2875
    %v3503 = vsel %vm1986, %v3471, %v2877
    %v3504 = vsel %vm1986, %v3472, %v2879
    %v3505 = vsel %vm1986, %v3473, %v2881
    %v3506 = vsel %vm1986, %v3474, %v2883
    %v3507 = vsel %vm1986, %v3475, %v2885
    %v3508 = vsel %vm1986, %v3476, %v2887
    %v3509 = vsel %vm1986, %v3477, %v2889
    %v3510 = vsel %vm1986, %v3478, %v2891
    %v3511 = vsel %vm1986, %v3479, %v2893
    %v3512 = vsel %vm791, %v3480, %v2945
    %v3513 = vsel %vm791, %v3481, %v2947
    %v3514 = vsel %vm791, %v3482, %v2949
    %v3515 = vsel %vm791, %v3483, %v2951
    %v3516 = vsel %vm791, %v3484, %v2953
    %v3517 = vsel %vm791, %v3485, %v2955
    %v3518 = vsel %vm791, %v3486, %v2957
    %v3519 = vsel %vm791, %v3487, %v2959
    %v3520 = vsel %vm791, %v3488, %v2961
    %v3521 = vsel %vm791, %v3489, %v2963
    %v3522 = vsel %vm791, %v3490, %v2965
    %v3523 = vsel %vm791, %v3491, %v2967
    %v3524 = vsel %vm791, %v3492, %v2969
    %v3525 = vsel %vm791, %v3493, %v2971
    %v3526 = vsel %vm791, %v3494, %v2973
    %v3527 = vsel %vm791, %v3495, %v2975
    %v3528 = vsel %vm791, %v3496, %v2977
    %v3529 = vsel %vm791, %v3497, %v2979
    %v3530 = vsel %vm791, %v3498, %v2981
    %v3531 = vsel %vm791, %v3499, %v2983
    %v3532 = vsel %vm791, %v3500, %v2985
    %v3533 = vsel %vm791, %v3501, %v2987
    %v3534 = vsel %vm791, %v3502, %v2989
    %v3535 = vsel %vm791, %v3503, %v2991
    %v3536 = vsel %vm791, %v3504, %v2993
    %v3537 = vsel %vm791, %v3505, %v2995
    %v3538 = vsel %vm791, %v3506, %v2997
    %v3539 = vsel %vm791, %v3507, %v2999
    %v3540 = vsel %vm791, %v3508, %v3001
    %v3541 = vsel %vm791, %v3509, %v3003
    %v3542 = vsel %vm791, %v3510, %v3005
    %v3543 = vsel %vm791, %v3511, %v3007
    %v3544 = vsel %vm168, %v3512, %v3043
    %v3545 = vsel %vm168, %v3513, %v3043
    %v3546 = vsel %vm168, %v3514, %v3045
    %v3547 = vsel %vm168, %v3515, %v3045
    %v3548 = vsel %vm168, %v3516, %v3047
    %v3549 = vsel %vm168, %v3517, %v3047
    %v3550 = vsel %vm168, %v3518, %v3049
    %v3551 = vsel %vm168, %v3519, %v3049
    %v3552 = vsel %vm168, %v3520, %v3051
    %v3553 = vsel %vm168, %v3521, %v3051
    %v3554 = vsel %vm168, %v3522, %v3053
    %v3555 = vsel %vm168, %v3523, %v3053
    %v3556 = vsel %vm168, %v3524, %v3055
    %v3557 = vsel %vm168, %v3525, %v3055
    %v3558 = vsel %vm168, %v3526, %v3057
    %v3559 = vsel %vm168, %v3527, %v3057
    %v3560 = vsel %vm168, %v3528, %v3059
    %v3561 = vsel %vm168, %v3529, %v3059
    %v3562 = vsel %vm168, %v3530, %v3061
    %v3563 = vsel %vm168, %v3531, %v3061
    %v3564 = vsel %vm168, %v3532, %v3063
    %v3565 = vsel %vm168, %v3533, %v3063
    %v3566 = vsel %vm168, %v3534, %v3065
    %v3567 = vsel %vm168, %v3535, %v3065
    %v3568 = vsel %vm168, %v3536, %v3067
    %v3569 = vsel %vm168, %v3537, %v3067
    %v3570 = vsel %vm168, %v3538, %v3069
    %v3571 = vsel %vm168, %v3539, %v3069
    %v3572 = vsel %vm168, %v3540, %v3071
    %v3573 = vsel %vm168, %v3541, %v3071
    %v3574 = vsel %vm168, %v3542, %v3073
    %v3575 = vsel %vm168, %v3543, %v3073
    %v3576 = vsel %vm2083, %v3544, %v3099
    %v3577 = vsel %vm2083, %v3545, %v3101
    %v3578 = vsel %vm2083, %v3546, %v3103
    %v3579 = vsel %vm2083, %v3547, %v3105
    %v3580 = vsel %vm2083, %v3548, %v3107
    %v3581 = vsel %vm2083, %v3549, %v3109
    %v3582 = vsel %vm2083, %v3550, %v3111
    %v3583 = vsel %vm2083, %v3551, %v3113
    %v3584 = vsel %vm2083, %v3552, %v3115
    %v3585 = vsel %vm2083, %v3553, %v3117
    %v3586 = vsel %vm2083, %v3554, %v3119
    %v3587 = vsel %vm2083, %v3555, %v3121
    %v3588 = vsel %vm2083, %v3556, %v3123
    %v3589 = vsel %vm2083, %v3557, %v3125
    %v3590 = vsel %vm2083, %v3558, %v3127
    %v3591 = vsel %vm2083, %v3559, %v3129
    %v3592 = vsel %vm2083, %v3560, %v3131
    %v3593 = vsel %vm2083, %v3561, %v3133
    %v3594 = vsel %vm2083, %v3562, %v3135
    %v3595 = vsel %vm2083, %v3563, %v3137
    %v3596 = vsel %vm2083, %v3564, %v3139
    %v3597 = vsel %vm2083, %v3565, %v3141
    %v3598 = vsel %vm2083, %v3566, %v3143
    %v3599 = vsel %vm2083, %v3567, %v3145
    %v3600 = vsel %vm2083, %v3568, %v3147
    %v3601 = vsel %vm2083, %v3569, %v3149
    %v3602 = vsel %vm2083, %v3570, %v3151
    %v3603 = vsel %vm2083, %v3571, %v3153
    %v3604 = vsel %vm2083, %v3572, %v3155
    %v3605 = vsel %vm2083, %v3573, %v3157
    %v3606 = vsel %vm2083, %v3574, %v3159
    %v3607 = vsel %vm2083, %v3575, %v3161
    %v3608 = vsel %vm2116, %v3576, %v3199
    %v3609 = vsel %vm2116, %v3577, %v3201
    %v3610 = vsel %vm2116, %v3578, %v3203
    %v3611 = vsel %vm2116, %v3579, %v3205
    %v3612 = vsel %vm2116, %v3580, %v3207
    %v3613 = vsel %vm2116, %v3581, %v3209
    %v3614 = vsel %vm2116, %v3582, %v3211
    %v3615 = vsel %vm2116, %v3583, %v3213
    %v3616 = vsel %vm2116, %v3584, %v3215
    %v3617 = vsel %vm2116, %v3585, %v3217
    %v3618 = vsel %vm2116, %v3586, %v3219
    %v3619 = vsel %vm2116, %v3587, %v3221
    %v3620 = vsel %vm2116, %v3588, %v3223
    %v3621 = vsel %vm2116, %v3589, %v3225
    %v3622 = vsel %vm2116, %v3590, %v3227
    %v3623 = vsel %vm2116, %v3591, %v3229
    %v3624 = vsel %vm2116, %v3592, %v3231
    %v3625 = vsel %vm2116, %v3593, %v3233
    %v3626 = vsel %vm2116, %v3594, %v3235
    %v3627 = vsel %vm2116, %v3595, %v3237
    %v3628 = vsel %vm2116, %v3596, %v3239
    %v3629 = vsel %vm2116, %v3597, %v3241
    %v3630 = vsel %vm2116, %v3598, %v3243
    %v3631 = vsel %vm2116, %v3599, %v3245
    %v3632 = vsel %vm2116, %v3600, %v3247
    %v3633 = vsel %vm2116, %v3601, %v3249
    %v3634 = vsel %vm2116, %v3602, %v3251
    %v3635 = vsel %vm2116, %v3603, %v3253
    %v3636 = vsel %vm2116, %v3604, %v3255
    %v3637 = vsel %vm2116, %v3605, %v3257
    %v3638 = vsel %vm2116, %v3606, %v3259
    %v3639 = vsel %vm2116, %v3607, %v3261
    %v3640 = vsel %vm2149, %v3608, %v3297
    %v3641 = vsel %vm2149, %v3609, %v3297
    %v3642 = vsel %vm2149, %v3610, %v3299
    %v3643 = vsel %vm2149, %v3611, %v3299
    %v3644 = vsel %vm2149, %v3612, %v3301
    %v3645 = vsel %vm2149, %v3613, %v3301
    %v3646 = vsel %vm2149, %v3614, %v3303
    %v3647 = vsel %vm2149, %v3615, %v3303
    %v3648 = vsel %vm2149, %v3616, %v3305
    %v3649 = vsel %vm2149, %v3617, %v3305
    %v3650 = vsel %vm2149, %v3618, %v3307
    %v3651 = vsel %vm2149, %v3619, %v3307
    %v3652 = vsel %vm2149, %v3620, %v3309
    %v3653 = vsel %vm2149, %v3621, %v3309
    %v3654 = vsel %vm2149, %v3622, %v3311
    %v3655 = vsel %vm2149, %v3623, %v3311
    %v3656 = vsel %vm2149, %v3624, %v3313
    %v3657 = vsel %vm2149, %v3625, %v3313
    %v3658 = vsel %vm2149, %v3626, %v3315
    %v3659 = vsel %vm2149, %v3627, %v3315
    %v3660 = vsel %vm2149, %v3628, %v3317
    %v3661 = vsel %vm2149, %v3629, %v3317
    %v3662 = vsel %vm2149, %v3630, %v3319
    %v3663 = vsel %vm2149, %v3631, %v3319
    %v3664 = vsel %vm2149, %v3632, %v3321
    %v3665 = vsel %vm2149, %v3633, %v3321
    %v3666 = vsel %vm2149, %v3634, %v3323
    %v3667 = vsel %vm2149, %v3635, %v3323
    %v3668 = vsel %vm2149, %v3636, %v3325
    %v3669 = vsel %vm2149, %v3637, %v3325
    %v3670 = vsel %vm2149, %v3638, %v3327
    %v3671 = vsel %vm2149, %v3639, %v3327
    %v3672 = vsel %vm2182, %v3640, %v3353
    %v3673 = vsel %vm2182, %v3641, %v3355
    %v3674 = vsel %vm2182, %v3642, %v3357
    %v3675 = vsel %vm2182, %v3643, %v3359
    %v3676 = vsel %vm2182, %v3644, %v3361
    %v3677 = vsel %vm2182, %v3645, %v3363
    %v3678 = vsel %vm2182, %v3646, %v3365
    %v3679 = vsel %vm2182, %v3647, %v3367
    %v3680 = vsel %vm2182, %v3648, %v3369
    %v3681 = vsel %vm2182, %v3649, %v3371
    %v3682 = vsel %vm2182, %v3650, %v3373
    %v3683 = vsel %vm2182, %v3651, %v3375
    %v3684 = vsel %vm2182, %v3652, %v3377
    %v3685 = vsel %vm2182, %v3653, %v3379
    %v3686 = vsel %vm2182, %v3654, %v3381
    %v3687 = vsel %vm2182, %v3655, %v3383
    %v3688 = vsel %vm2182, %v3656, %v3385
    %v3689 = vsel %vm2182, %v3657, %v3387
    %v3690 = vsel %vm2182, %v3658, %v3389
    %v3691 = vsel %vm2182, %v3659, %v3391
    %v3692 = vsel %vm2182, %v3660, %v3393
    %v3693 = vsel %vm2182, %v3661, %v3395
    %v3694 = vsel %vm2182, %v3662, %v3397
    %v3695 = vsel %vm2182, %v3663, %v3399
    %v3696 = vsel %vm2182, %v3664, %v3401
    %v3697 = vsel %vm2182, %v3665, %v3403
    %v3698 = vsel %vm2182, %v3666, %v3405
    %v3699 = vsel %vm2182, %v3667, %v3407
    %v3700 = vsel %vm2182, %v3668, %v3409
    %v3701 = vsel %vm2182, %v3669, %v3411
    %v3702 = vsel %vm2182, %v3670, %v3413
    %v3703 = vsel %vm2182, %v3671, %v3415
    %v3736 = vrot.slane %v3672, 7
    %v3737 = vrot.slane %v3673, 7
    %v3738 = vsel %vm2247, %v3736, %v3737
    %v3739 = vrot.slane %v3674, 7
    %v3740 = vrot.slane %v3675, 7
    %v3741 = vsel %vm2247, %v3739, %v3740
    %v3742 = vrot.slane %v3676, 7
    %v3743 = vrot.slane %v3677, 7
    %v3744 = vsel %vm2247, %v3742, %v3743
    %v3745 = vrot.slane %v3678, 7
    %v3746 = vrot.slane %v3679, 7
    %v3747 = vsel %vm2247, %v3745, %v3746
    %v3748 = vrot.slane %v3680, 7
    %v3749 = vrot.slane %v3681, 7
    %v3750 = vsel %vm2247, %v3748, %v3749
    %v3751 = vrot.slane %v3682, 7
    %v3752 = vrot.slane %v3683, 7
    %v3753 = vsel %vm2247, %v3751, %v3752
    %v3754 = vrot.slane %v3684, 7
    %v3755 = vrot.slane %v3685, 7
    %v3756 = vsel %vm2247, %v3754, %v3755
    %v3757 = vrot.slane %v3686, 7
    %v3758 = vrot.slane %v3687, 7
    %v3759 = vsel %vm2247, %v3757, %v3758
    %v3760 = vrot.slane %v3688, 7
    %v3761 = vrot.slane %v3689, 7
    %v3762 = vsel %vm2247, %v3760, %v3761
    %v3763 = vrot.slane %v3690, 7
    %v3764 = vrot.slane %v3691, 7
    %v3765 = vsel %vm2247, %v3763, %v3764
    %v3766 = vrot.slane %v3692, 7
    %v3767 = vrot.slane %v3693, 7
    %v3768 = vsel %vm2247, %v3766, %v3767
    %v3769 = vrot.slane %v3694, 7
    %v3770 = vrot.slane %v3695, 7
    %v3771 = vsel %vm2247, %v3769, %v3770
    %v3772 = vrot.slane %v3696, 7
    %v3773 = vrot.slane %v3697, 7
    %v3774 = vsel %vm2247, %v3772, %v3773
    %v3775 = vrot.slane %v3698, 7
    %v3776 = vrot.slane %v3699, 7
    %v3777 = vsel %vm2247, %v3775, %v3776
    %v3778 = vrot.slane %v3700, 7
    %v3779 = vrot.slane %v3701, 7
    %v3780 = vsel %vm2247, %v3778, %v3779
    %v3781 = vrot.slane %v3702, 7
    %v3782 = vrot.slane %v3703, 7
    %v3783 = vsel %vm2247, %v3781, %v3782
    %v3800 = vpack.c.bf16 %v3741, %v3738
    %v3801 = vpack.c.bf16 %v3747, %v3744
    %v3802 = vpack.c.bf16 %v3753, %v3750
    %v3803 = vpack.c.bf16 %v3759, %v3756
    %v3804 = vpack.c.bf16 %v3765, %v3762
    %v3805 = vpack.c.bf16 %v3771, %v3768
    %v3806 = vpack.c.bf16 %v3777, %v3774
    %v3807 = vpack.c.bf16 %v3783, %v3780
    %s3808 = scalar_lea.vmem %s8, 20
    %v3809 = vld [vmem:[%s3808] sm:$0xf]
    %v3810 = vld [vmem:[%s3808 + $0x4] sm:$0xf]
    %v3811 = vld [vmem:[%s3808 + $0x8] sm:$0xf]
    %v3812 = vld [vmem:[%s3808 + $0xc] sm:$0xf]
    %v3813 = vld [vmem:[%s3808 + $0x10] sm:$0x3]
    %v3819 = vunpack.c.l.b16 %v3809
    %v3820 = vunpack.c.l.b16 %v3810
    %v3821 = vunpack.c.l.b16 %v3811
    %v3822 = vunpack.c.l.b16 %v3812
    %v3823 = vunpack.c.l.b16 %v3813
    %v3824 = vpack.c.b16 %v3820, %v3819
    %v3825 = vpack.c.b16 %v3822, %v3821
    %v3826 = vpack.c.b16 %v3823, %v3823
    %v3830 = vsel %vm2340, %v3800, 0
    %v3833 = vsel %vm2340, %v3801, 0
    %v3836 = vsel %vm2340, %v3802, 0
    %v3839 = vsel %vm2340, %v3803, 0
    %v3842 = vsel %vm2340, %v3804, 0
    %v3845 = vsel %vm2340, %v3805, 0
    %v3848 = vsel %vm2340, %v3806, 0
    %v3851 = vsel %vm2340, %v3807, 0
    %v3854 = vsel %vm2365, %v3826, 0
    %3856 = vmatprep.subr.bf16.mxu0 0
    %3857 = vmatpush1.bf16.msra.mxu0 %v3824
    %3858 = vmatprep.subr.bf16.mxu0 0
    %3859 = vmatpush1.bf16.msra.mxu0 %v3825
    %3860 = vmatprep.subr.bf16.mxu0 0
    %3861 = vmatpush1.bf16.msra.mxu0 %v3854
    %3862 = vmatprep.subr.bf16.mxu0 0
    %3863 = vmatpush1.bf16.msra.mxu0 0
    %3864 = vmatprep.subr.bf16.mxu0 0
    %3865 = vmatpush1.bf16.msra.mxu0 0
    %3866 = vmatprep.subr.bf16.mxu0 0
    %3867 = vmatpush1.bf16.msra.mxu0 0
    %3868 = vmatprep.subr.bf16.mxu0 0
    %3869 = vmatpush1.bf16.msra.mxu0 0
    %3870 = vmatprep.subr.bf16.mxu0 0
    %3871 = vmatpush1.bf16.msra.mxu0 0
    %3872 = vmatprep.subr.bf16.mxu0 0
    %3873 = vmatpush1.bf16.msra.mxu0 0
    %3874 = vmatprep.subr.bf16.mxu0 0
    %3875 = vmatpush1.bf16.msra.mxu0 0
    %3876 = vmatprep.subr.bf16.mxu0 0
    %3877 = vmatpush1.bf16.msra.mxu0 0
    %3878 = vmatprep.subr.bf16.mxu0 0
    %3879 = vmatpush1.bf16.msra.mxu0 0
    %3880 = vmatprep.subr.bf16.mxu0 0
    %3881 = vmatpush1.bf16.msra.mxu0 0
    %3882 = vmatprep.subr.bf16.mxu0 0
    %3883 = vmatpush1.bf16.msra.mxu0 0
    %3884 = vmatprep.subr.bf16.mxu0 0
    %3885 = vmatpush1.bf16.msra.mxu0 0
    %3886 = vmatprep.subr.bf16.mxu0 0
    %3887 = vmatpush1.bf16.msra.mxu0 0
    %3888 = vmatprep.mubr.bf16.mxu0 0
    %3889 = vmatmul.mubr.bf16.gmra.mrb[0].mxu0 %v3830
    %v3890 = vpop.f32.mrb[0].mxu0
    %v3891 = vadd.f32 0.0, %v3890
    %v3892 = vpop.f32.mrb[0].mxu0
    %v3893 = vpop.f32.mrb[0].mxu0
    %v3894 = vadd.f32 0.0, %v3893
    %v3895 = vpop.f32.mrb[0].mxu0
    %3896 = vmatprep.mubr.bf16.mxu0 0
    %3897 = vmatmul.mubr.bf16.gmra.mrb[0].mxu0 %v3833
    %v3898 = vpop.f32.mrb[0].mxu0
    %v3899 = vadd.f32 0.0, %v3898
    %v3900 = vpop.f32.mrb[0].mxu0
    %v3901 = vpop.f32.mrb[0].mxu0
    %v3902 = vadd.f32 0.0, %v3901
    %v3903 = vpop.f32.mrb[0].mxu0
    %3904 = vmatprep.mubr.bf16.mxu0 0
    %3905 = vmatmul.mubr.bf16.gmra.mrb[0].mxu0 %v3836
    %v3906 = vpop.f32.mrb[0].mxu0
    %v3907 = vadd.f32 0.0, %v3906
    %v3908 = vpop.f32.mrb[0].mxu0
    %v3909 = vpop.f32.mrb[0].mxu0
    %v3910 = vadd.f32 0.0, %v3909
    %v3911 = vpop.f32.mrb[0].mxu0
    %3912 = vmatprep.mubr.bf16.mxu0 0
    %3913 = vmatmul.mubr.bf16.gmra.mrb[0].mxu0 %v3839
    %v3914 = vpop.f32.mrb[0].mxu0
    %v3915 = vadd.f32 0.0, %v3914
    %v3916 = vpop.f32.mrb[0].mxu0
    %v3917 = vpop.f32.mrb[0].mxu0
    %v3918 = vadd.f32 0.0, %v3917
    %v3919 = vpop.f32.mrb[0].mxu0
    %3920 = vmatprep.mubr.bf16.mxu0 0
    %3921 = vmatmul.mubr.bf16.gmra.mrb[0].mxu0 %v3842
    %v3922 = vpop.f32.mrb[0].mxu0
    %v3923 = vadd.f32 0.0, %v3922
    %v3924 = vpop.f32.mrb[0].mxu0
    %v3925 = vpop.f32.mrb[0].mxu0
    %v3926 = vadd.f32 0.0, %v3925
    %v3927 = vpop.f32.mrb[0].mxu0
    %3928 = vmatprep.mubr.bf16.mxu0 0
    %3929 = vmatmul.mubr.bf16.gmra.mrb[0].mxu0 %v3845
    %v3930 = vpop.f32.mrb[0].mxu0
    %v3931 = vadd.f32 0.0, %v3930
    %v3932 = vpop.f32.mrb[0].mxu0
    %v3933 = vpop.f32.mrb[0].mxu0
    %v3934 = vadd.f32 0.0, %v3933
    %v3935 = vpop.f32.mrb[0].mxu0
    %3936 = vmatprep.mubr.bf16.mxu0 0
    %3937 = vmatmul.mubr.bf16.gmra.mrb[0].mxu0 %v3848
    %v3938 = vpop.f32.mrb[0].mxu0
    %v3939 = vadd.f32 0.0, %v3938
    %v3940 = vpop.f32.mrb[0].mxu0
    %v3941 = vpop.f32.mrb[0].mxu0
    %v3942 = vadd.f32 0.0, %v3941
    %v3943 = vpop.f32.mrb[0].mxu0
    %3944 = vmatprep.mubr.bf16.mxu0 0
    %3945 = vmatmul.mubr.bf16.gmra.mrb[0].mxu0 %v3851
    %v3946 = vpop.f32.mrb[0].mxu0
    %v3947 = vadd.f32 0.0, %v3946
    %v3948 = vpop.f32.mrb[0].mxu0
    %v3949 = vpop.f32.mrb[0].mxu0
    %v3950 = vadd.f32 0.0, %v3949
    %v3951 = vpop.f32.mrb[0].mxu0
    %3952 = vdwg.mxu0
    %3969 = vrot.lane.b32.xlu0 %v3891, 8
    %v3970 = vpop.permute.xlu0 %3969
    %3971 = vrot.lane.b32.xlu0 %v3894, 8
    %v3972 = vpop.permute.xlu0 %3971
    %3973 = vrot.lane.b32.xlu0 %v3899, 8
    %v3974 = vpop.permute.xlu0 %3973
    %3975 = vrot.lane.b32.xlu0 %v3902, 8
    %v3976 = vpop.permute.xlu0 %3975
    %3977 = vrot.lane.b32.xlu0 %v3907, 8
    %v3978 = vpop.permute.xlu0 %3977
    %3979 = vrot.lane.b32.xlu0 %v3910, 8
    %v3980 = vpop.permute.xlu0 %3979
    %3981 = vrot.lane.b32.xlu0 %v3915, 8
    %v3982 = vpop.permute.xlu0 %3981
    %3983 = vrot.lane.b32.xlu0 %v3918, 8
    %v3984 = vpop.permute.xlu0 %3983
    %3985 = vrot.lane.b32.xlu0 %v3923, 8
    %v3986 = vpop.permute.xlu0 %3985
    %3987 = vrot.lane.b32.xlu0 %v3926, 8
    %v3988 = vpop.permute.xlu0 %3987
    %3989 = vrot.lane.b32.xlu0 %v3931, 8
    %v3990 = vpop.permute.xlu0 %3989
    %3991 = vrot.lane.b32.xlu0 %v3934, 8
    %v3992 = vpop.permute.xlu0 %3991
    %3993 = vrot.lane.b32.xlu0 %v3939, 8
    %v3994 = vpop.permute.xlu0 %3993
    %3995 = vrot.lane.b32.xlu0 %v3942, 8
    %v3996 = vpop.permute.xlu0 %3995
    %3997 = vrot.lane.b32.xlu0 %v3947, 8
    %v3998 = vpop.permute.xlu0 %3997
    %3999 = vrot.lane.b32.xlu0 %v3950, 8
    %v4000 = vpop.permute.xlu0 %3999
    %v4017 = vadd.f32 %v1035, %v3970
    %v4018 = vadd.f32 %v1036, %v3972
    %v4019 = vadd.f32 %v1037, %v3974
    %v4020 = vadd.f32 %v1038, %v3976
    %v4021 = vadd.f32 %v1039, %v3978
    %v4022 = vadd.f32 %v1040, %v3980
    %v4023 = vadd.f32 %v1041, %v3982
    %v4024 = vadd.f32 %v1042, %v3984
    %v4025 = vadd.f32 %v1043, %v3986
    %v4026 = vadd.f32 %v1044, %v3988
    %v4027 = vadd.f32 %v1045, %v3990
    %v4028 = vadd.f32 %v1046, %v3992
    %v4029 = vadd.f32 %v1047, %v3994
    %v4030 = vadd.f32 %v1048, %v3996
    %v4031 = vadd.f32 %v1049, %v3998
    %v4032 = vadd.f32 %v1050, %v4000
    %4049 = vrot.lane.b32.xlu0 %v4017, 120
    %v4050 = vpop.permute.xlu0 %4049
    %4051 = vrot.lane.b32.xlu0 %v4018, 120
    %v4052 = vpop.permute.xlu0 %4051
    %4053 = vrot.lane.b32.xlu0 %v4019, 120
    %v4054 = vpop.permute.xlu0 %4053
    %4055 = vrot.lane.b32.xlu0 %v4020, 120
    %v4056 = vpop.permute.xlu0 %4055
    %4057 = vrot.lane.b32.xlu0 %v4021, 120
    %v4058 = vpop.permute.xlu0 %4057
    %4059 = vrot.lane.b32.xlu0 %v4022, 120
    %v4060 = vpop.permute.xlu0 %4059
    %4061 = vrot.lane.b32.xlu0 %v4023, 120
    %v4062 = vpop.permute.xlu0 %4061
    %4063 = vrot.lane.b32.xlu0 %v4024, 120
    %v4064 = vpop.permute.xlu0 %4063
    %4065 = vrot.lane.b32.xlu0 %v4025, 120
    %v4066 = vpop.permute.xlu0 %4065
    %4067 = vrot.lane.b32.xlu0 %v4026, 120
    %v4068 = vpop.permute.xlu0 %4067
    %4069 = vrot.lane.b32.xlu0 %v4027, 120
    %v4070 = vpop.permute.xlu0 %4069
    %4071 = vrot.lane.b32.xlu0 %v4028, 120
    %v4072 = vpop.permute.xlu0 %4071
    %4073 = vrot.lane.b32.xlu0 %v4029, 120
    %v4074 = vpop.permute.xlu0 %4073
    %4075 = vrot.lane.b32.xlu0 %v4030, 120
    %v4076 = vpop.permute.xlu0 %4075
    %4077 = vrot.lane.b32.xlu0 %v4031, 120
    %v4078 = vpop.permute.xlu0 %4077
    %4079 = vrot.lane.b32.xlu0 %v4032, 120
    %v4080 = vpop.permute.xlu0 %4079
    %4097 = vst.msk [vmem:[%s1115 + $0x8] sm:$0xff] %vm43, %v4050
    %4098 = vst.msk [vmem:[%s1115 + $0x20] sm:$0xff] %vm43, %v4052
    %4099 = vst.msk [vmem:[%s1115 + $0x38] sm:$0xff] %vm43, %v4054
    %4100 = vst.msk [vmem:[%s1115 + $0x50] sm:$0xff] %vm43, %v4056
    %4101 = vst.msk [vmem:[%s1115 + $0x68] sm:$0xff] %vm43, %v4058
    %4102 = vst.msk [vmem:[%s1115 + $0x80] sm:$0xff] %vm43, %v4060
    %4103 = vst.msk [vmem:[%s1115 + $0x98] sm:$0xff] %vm43, %v4062
    %4104 = vst.msk [vmem:[%s1115 + $0xb0] sm:$0xff] %vm43, %v4064
    %4105 = vst.msk [vmem:[%s1115 + $0xf8] sm:$0xff] %vm43, %v4066
    %4106 = vst.msk [vmem:[%s1115 + $0x110] sm:$0xff] %vm43, %v4068
    %4107 = vst.msk [vmem:[%s1115 + $0x128] sm:$0xff] %vm43, %v4070
    %4108 = vst.msk [vmem:[%s1115 + $0x140] sm:$0xff] %vm43, %v4072
    %4109 = vst.msk [vmem:[%s1115 + $0x158] sm:$0xff] %vm43, %v4074
    %4110 = vst.msk [vmem:[%s1115 + $0x170] sm:$0xff] %vm43, %v4076
    %4111 = vst.msk [vmem:[%s1115 + $0x188] sm:$0xff] %vm43, %v4078
    %4112 = vst.msk [vmem:[%s1115 + $0x1a0] sm:$0xff] %vm43, %v4080
    %v4113 = vld [vmem:[#allocation2] sm:$0xff]
    %v4114 = vld [vmem:[#allocation2 + $0x8] sm:$0xff]
    %v4115 = vld [vmem:[#allocation2 + $0x10] sm:$0xff]
    %v4116 = vld [vmem:[#allocation2 + $0x18] sm:$0xff]
    %v4117 = vld [vmem:[#allocation2 + $0x20] sm:$0xff]
    %v4118 = vld [vmem:[#allocation2 + $0x28] sm:$0xff]
    %v4119 = vld [vmem:[#allocation2 + $0x30] sm:$0xff]
    %v4120 = vld [vmem:[#allocation2 + $0x38] sm:$0xff]
    %v4121 = vld [vmem:[#allocation2 + $0x40] sm:$0xff]
    %v4122 = vld [vmem:[#allocation2 + $0x48] sm:$0xff]
    %v4123 = vld [vmem:[#allocation2 + $0x50] sm:$0xff]
    %v4124 = vld [vmem:[#allocation2 + $0x58] sm:$0xff]
    %v4125 = vld [vmem:[#allocation2 + $0x60] sm:$0xff]
    %v4126 = vld [vmem:[#allocation2 + $0x68] sm:$0xff]
    %v4127 = vld [vmem:[#allocation2 + $0x70] sm:$0xff]
    %v4128 = vld [vmem:[#allocation2 + $0x78] sm:$0xff]
    %v4129 = vld [vmem:[#allocation2 + $0x80] sm:$0xff]
    %v4130 = vld [vmem:[#allocation2 + $0x88] sm:$0xff]
    %v4131 = vld [vmem:[#allocation2 + $0x90] sm:$0xff]
    %v4132 = vld [vmem:[#allocation2 + $0x98] sm:$0xff]
    %v4133 = vld [vmem:[#allocation2 + $0xa0] sm:$0xff]
    %v4134 = vld [vmem:[#allocation2 + $0xa8] sm:$0xff]
    %v4135 = vld [vmem:[#allocation2 + $0xb0] sm:$0xff]
    %v4136 = vld [vmem:[#allocation2 + $0xb8] sm:$0xff]
    %v4137 = vld [vmem:[#allocation2 + $0xc0] sm:$0xff]
    %v4138 = vld [vmem:[#allocation2 + $0xc8] sm:$0xff]
    %v4139 = vld [vmem:[#allocation2 + $0xd0] sm:$0xff]
    %v4140 = vld [vmem:[#allocation2 + $0xd8] sm:$0xff]
    %v4141 = vld [vmem:[#allocation2 + $0xe0] sm:$0xff]
    %v4142 = vld [vmem:[#allocation2 + $0xe8] sm:$0xff]
    %v4143 = vld [vmem:[#allocation2 + $0xf0] sm:$0xff]
    %v4144 = vld [vmem:[#allocation2 + $0xf8] sm:$0xff]
    %v4145 = vld [vmem:[#allocation2 + $0x100] sm:$0xff]
    %v4146 = vld [vmem:[#allocation2 + $0x108] sm:$0xff]
    %v4147 = vld [vmem:[#allocation2 + $0x110] sm:$0xff]
    %v4148 = vld [vmem:[#allocation2 + $0x118] sm:$0xff]
    %v4149 = vld [vmem:[#allocation2 + $0x120] sm:$0xff]
    %v4150 = vld [vmem:[#allocation2 + $0x128] sm:$0xff]
    %v4151 = vld [vmem:[#allocation2 + $0x130] sm:$0xff]
    %v4152 = vld [vmem:[#allocation2 + $0x138] sm:$0xff]
    %v4153 = vld [vmem:[#allocation2 + $0x140] sm:$0xff]
    %v4154 = vld [vmem:[#allocation2 + $0x148] sm:$0xff]
    %v4155 = vld [vmem:[#allocation2 + $0x150] sm:$0xff]
    %v4156 = vld [vmem:[#allocation2 + $0x158] sm:$0xff]
    %v4157 = vld [vmem:[#allocation2 + $0x160] sm:$0xff]
    %v4158 = vld [vmem:[#allocation2 + $0x168] sm:$0xff]
    %v4159 = vld [vmem:[#allocation2 + $0x170] sm:$0xff]
    %v4160 = vld [vmem:[#allocation2 + $0x178] sm:$0xff]
    %v4161 = vld [vmem:[#allocation2 + $0x180] sm:$0xff]
    %v4162 = vld [vmem:[#allocation2 + $0x188] sm:$0xff]
    %v4163 = vld [vmem:[#allocation2 + $0x190] sm:$0xff]
    %v4164 = vld [vmem:[#allocation2 + $0x198] sm:$0xff]
    %v4165 = vld [vmem:[#allocation2 + $0x1a0] sm:$0xff]
    %v4166 = vld [vmem:[#allocation2 + $0x1a8] sm:$0xff]
    %v4167 = vld [vmem:[#allocation2 + $0x1b0] sm:$0xff]
    %v4168 = vld [vmem:[#allocation2 + $0x1b8] sm:$0xff]
    %v4169 = vld [vmem:[#allocation2 + $0x1c0] sm:$0xff]
    %v4170 = vld [vmem:[#allocation2 + $0x1c8] sm:$0xff]
    %v4171 = vld [vmem:[#allocation2 + $0x1d0] sm:$0xff]
    %v4172 = vld [vmem:[#allocation2 + $0x1d8] sm:$0xff]
    %v4189 = vrot.slane %v4114, 1
    %v4190 = vrot.slane %v4117, 1
    %v4191 = vrot.slane %v4120, 1
    %v4192 = vrot.slane %v4123, 1
    %v4193 = vrot.slane %v4126, 1
    %v4194 = vrot.slane %v4129, 1
    %v4195 = vrot.slane %v4132, 1
    %v4196 = vrot.slane %v4135, 1
    %v4197 = vrot.slane %v4144, 1
    %v4198 = vrot.slane %v4147, 1
    %v4199 = vrot.slane %v4150, 1
    %v4200 = vrot.slane %v4153, 1
    %v4201 = vrot.slane %v4156, 1
    %v4202 = vrot.slane %v4159, 1
    %v4203 = vrot.slane %v4162, 1
    %v4204 = vrot.slane %v4165, 1
    %4205 = vrot.lane.b32.xlu0 %v4189, 4
    %v4206 = vpop.permute.xlu0 %4205
    %4207 = vrot.lane.b32.xlu0 %v4190, 4
    %v4208 = vpop.permute.xlu0 %4207
    %4209 = vrot.lane.b32.xlu0 %v4191, 4
    %v4210 = vpop.permute.xlu0 %4209
    %4211 = vrot.lane.b32.xlu0 %v4192, 4
    %v4212 = vpop.permute.xlu0 %4211
    %4213 = vrot.lane.b32.xlu0 %v4193, 4
    %v4214 = vpop.permute.xlu0 %4213
    %4215 = vrot.lane.b32.xlu0 %v4194, 4
    %v4216 = vpop.permute.xlu0 %4215
    %4217 = vrot.lane.b32.xlu0 %v4195, 4
    %v4218 = vpop.permute.xlu0 %4217
    %4219 = vrot.lane.b32.xlu0 %v4196, 4
    %v4220 = vpop.permute.xlu0 %4219
    %4221 = vrot.lane.b32.xlu0 %v4197, 4
    %v4222 = vpop.permute.xlu0 %4221
    %4223 = vrot.lane.b32.xlu0 %v4198, 4
    %v4224 = vpop.permute.xlu0 %4223
    %4225 = vrot.lane.b32.xlu0 %v4199, 4
    %v4226 = vpop.permute.xlu0 %4225
    %4227 = vrot.lane.b32.xlu0 %v4200, 4
    %v4228 = vpop.permute.xlu0 %4227
    %4229 = vrot.lane.b32.xlu0 %v4201, 4
    %v4230 = vpop.permute.xlu0 %4229
    %4231 = vrot.lane.b32.xlu0 %v4202, 4
    %v4232 = vpop.permute.xlu0 %4231
    %4233 = vrot.lane.b32.xlu0 %v4203, 4
    %v4234 = vpop.permute.xlu0 %4233
    %4235 = vrot.lane.b32.xlu0 %v4204, 4
    %v4236 = vpop.permute.xlu0 %4235
    %v4269 = vrot.slane %v4114, 2
    %v4270 = vrot.slane %v4115, 2
    %v4271 = vsel %vm795, %v4269, %v4270
    %v4272 = vrot.slane %v4117, 2
    %v4273 = vrot.slane %v4118, 2
    %v4274 = vsel %vm795, %v4272, %v4273
    %v4275 = vrot.slane %v4120, 2
    %v4276 = vrot.slane %v4121, 2
    %v4277 = vsel %vm795, %v4275, %v4276
    %v4278 = vrot.slane %v4123, 2
    %v4279 = vrot.slane %v4124, 2
    %v4280 = vsel %vm795, %v4278, %v4279
    %v4281 = vrot.slane %v4126, 2
    %v4282 = vrot.slane %v4127, 2
    %v4283 = vsel %vm795, %v4281, %v4282
    %v4284 = vrot.slane %v4129, 2
    %v4285 = vrot.slane %v4130, 2
    %v4286 = vsel %vm795, %v4284, %v4285
    %v4287 = vrot.slane %v4132, 2
    %v4288 = vrot.slane %v4133, 2
    %v4289 = vsel %vm795, %v4287, %v4288
    %v4290 = vrot.slane %v4135, 2
    %v4291 = vrot.slane %v4136, 2
    %v4292 = vsel %vm795, %v4290, %v4291
    %v4293 = vrot.slane %v4144, 2
    %v4294 = vrot.slane %v4145, 2
    %v4295 = vsel %vm795, %v4293, %v4294
    %v4296 = vrot.slane %v4147, 2
    %v4297 = vrot.slane %v4148, 2
    %v4298 = vsel %vm795, %v4296, %v4297
    %v4299 = vrot.slane %v4150, 2
    %v4300 = vrot.slane %v4151, 2
    %v4301 = vsel %vm795, %v4299, %v4300
    %v4302 = vrot.slane %v4153, 2
    %v4303 = vrot.slane %v4154, 2
    %v4304 = vsel %vm795, %v4302, %v4303
    %v4305 = vrot.slane %v4156, 2
    %v4306 = vrot.slane %v4157, 2
    %v4307 = vsel %vm795, %v4305, %v4306
    %v4308 = vrot.slane %v4159, 2
    %v4309 = vrot.slane %v4160, 2
    %v4310 = vsel %vm795, %v4308, %v4309
    %v4311 = vrot.slane %v4162, 2
    %v4312 = vrot.slane %v4163, 2
    %v4313 = vsel %vm795, %v4311, %v4312
    %v4314 = vrot.slane %v4165, 2
    %v4315 = vrot.slane %v4166, 2
    %v4316 = vsel %vm795, %v4314, %v4315
    %4317 = vrot.lane.b32.xlu0 %v4269, 8
    %v4318 = vpop.permute.xlu0 %4317
    %4319 = vrot.lane.b32.xlu0 %v4271, 8
    %v4320 = vpop.permute.xlu0 %4319
    %4321 = vrot.lane.b32.xlu0 %v4272, 8
    %v4322 = vpop.permute.xlu0 %4321
    %4323 = vrot.lane.b32.xlu0 %v4274, 8
    %v4324 = vpop.permute.xlu0 %4323
    %4325 = vrot.lane.b32.xlu0 %v4275, 8
    %v4326 = vpop.permute.xlu0 %4325
    %4327 = vrot.lane.b32.xlu0 %v4277, 8
    %v4328 = vpop.permute.xlu0 %4327
    %4329 = vrot.lane.b32.xlu0 %v4278, 8
    %v4330 = vpop.permute.xlu0 %4329
    %4331 = vrot.lane.b32.xlu0 %v4280, 8
    %v4332 = vpop.permute.xlu0 %4331
    %4333 = vrot.lane.b32.xlu0 %v4281, 8
    %v4334 = vpop.permute.xlu0 %4333
    %4335 = vrot.lane.b32.xlu0 %v4283, 8
    %v4336 = vpop.permute.xlu0 %4335
    %4337 = vrot.lane.b32.xlu0 %v4284, 8
    %v4338 = vpop.permute.xlu0 %4337
    %4339 = vrot.lane.b32.xlu0 %v4286, 8
    %v4340 = vpop.permute.xlu0 %4339
    %4341 = vrot.lane.b32.xlu0 %v4287, 8
    %v4342 = vpop.permute.xlu0 %4341
    %4343 = vrot.lane.b32.xlu0 %v4289, 8
    %v4344 = vpop.permute.xlu0 %4343
    %4345 = vrot.lane.b32.xlu0 %v4290, 8
    %v4346 = vpop.permute.xlu0 %4345
    %4347 = vrot.lane.b32.xlu0 %v4292, 8
    %v4348 = vpop.permute.xlu0 %4347
    %4349 = vrot.lane.b32.xlu0 %v4293, 8
    %v4350 = vpop.permute.xlu0 %4349
    %4351 = vrot.lane.b32.xlu0 %v4295, 8
    %v4352 = vpop.permute.xlu0 %4351
    %4353 = vrot.lane.b32.xlu0 %v4296, 8
    %v4354 = vpop.permute.xlu0 %4353
    %4355 = vrot.lane.b32.xlu0 %v4298, 8
    %v4356 = vpop.permute.xlu0 %4355
    %4357 = vrot.lane.b32.xlu0 %v4299, 8
    %v4358 = vpop.permute.xlu0 %4357
    %4359 = vrot.lane.b32.xlu0 %v4301, 8
    %v4360 = vpop.permute.xlu0 %4359
    %4361 = vrot.lane.b32.xlu0 %v4302, 8
    %v4362 = vpop.permute.xlu0 %4361
    %4363 = vrot.lane.b32.xlu0 %v4304, 8
    %v4364 = vpop.permute.xlu0 %4363
    %4365 = vrot.lane.b32.xlu0 %v4305, 8
    %v4366 = vpop.permute.xlu0 %4365
    %4367 = vrot.lane.b32.xlu0 %v4307, 8
    %v4368 = vpop.permute.xlu0 %4367
    %4369 = vrot.lane.b32.xlu0 %v4308, 8
    %v4370 = vpop.permute.xlu0 %4369
    %4371 = vrot.lane.b32.xlu0 %v4310, 8
    %v4372 = vpop.permute.xlu0 %4371
    %4373 = vrot.lane.b32.xlu0 %v4311, 8
    %v4374 = vpop.permute.xlu0 %4373
    %4375 = vrot.lane.b32.xlu0 %v4313, 8
    %v4376 = vpop.permute.xlu0 %4375
    %4377 = vrot.lane.b32.xlu0 %v4314, 8
    %v4378 = vpop.permute.xlu0 %4377
    %4379 = vrot.lane.b32.xlu0 %v4316, 8
    %v4380 = vpop.permute.xlu0 %4379
    %4431 = vrot.lane.b32.xlu0 %v4116, 12
    %v4432 = vpop.permute.xlu0 %4431
    %4433 = vrot.lane.b32.xlu0 %v4117, 12
    %v4434 = vpop.permute.xlu0 %4433
    %4435 = vrot.lane.b32.xlu0 %v4119, 12
    %v4436 = vpop.permute.xlu0 %4435
    %4437 = vrot.lane.b32.xlu0 %v4120, 12
    %v4438 = vpop.permute.xlu0 %4437
    %4439 = vrot.lane.b32.xlu0 %v4122, 12
    %v4440 = vpop.permute.xlu0 %4439
    %4441 = vrot.lane.b32.xlu0 %v4123, 12
    %v4442 = vpop.permute.xlu0 %4441
    %4443 = vrot.lane.b32.xlu0 %v4125, 12
    %v4444 = vpop.permute.xlu0 %4443
    %4445 = vrot.lane.b32.xlu0 %v4126, 12
    %v4446 = vpop.permute.xlu0 %4445
    %4447 = vrot.lane.b32.xlu0 %v4128, 12
    %v4448 = vpop.permute.xlu0 %4447
    %4449 = vrot.lane.b32.xlu0 %v4129, 12
    %v4450 = vpop.permute.xlu0 %4449
    %4451 = vrot.lane.b32.xlu0 %v4131, 12
    %v4452 = vpop.permute.xlu0 %4451
    %4453 = vrot.lane.b32.xlu0 %v4132, 12
    %v4454 = vpop.permute.xlu0 %4453
    %4455 = vrot.lane.b32.xlu0 %v4134, 12
    %v4456 = vpop.permute.xlu0 %4455
    %4457 = vrot.lane.b32.xlu0 %v4135, 12
    %v4458 = vpop.permute.xlu0 %4457
    %4459 = vrot.lane.b32.xlu0 %v4137, 12
    %v4460 = vpop.permute.xlu0 %4459
    %4461 = vrot.lane.b32.xlu0 %v4138, 12
    %v4462 = vpop.permute.xlu0 %4461
    %4463 = vrot.lane.b32.xlu0 %v4146, 12
    %v4464 = vpop.permute.xlu0 %4463
    %4465 = vrot.lane.b32.xlu0 %v4147, 12
    %v4466 = vpop.permute.xlu0 %4465
    %4467 = vrot.lane.b32.xlu0 %v4149, 12
    %v4468 = vpop.permute.xlu0 %4467
    %4469 = vrot.lane.b32.xlu0 %v4150, 12
    %v4470 = vpop.permute.xlu0 %4469
    %4471 = vrot.lane.b32.xlu0 %v4152, 12
    %v4472 = vpop.permute.xlu0 %4471
    %4473 = vrot.lane.b32.xlu0 %v4153, 12
    %v4474 = vpop.permute.xlu0 %4473
    %4475 = vrot.lane.b32.xlu0 %v4155, 12
    %v4476 = vpop.permute.xlu0 %4475
    %4477 = vrot.lane.b32.xlu0 %v4156, 12
    %v4478 = vpop.permute.xlu0 %4477
    %4479 = vrot.lane.b32.xlu0 %v4158, 12
    %v4480 = vpop.permute.xlu0 %4479
    %4481 = vrot.lane.b32.xlu0 %v4159, 12
    %v4482 = vpop.permute.xlu0 %4481
    %4483 = vrot.lane.b32.xlu0 %v4161, 12
    %v4484 = vpop.permute.xlu0 %4483
    %4485 = vrot.lane.b32.xlu0 %v4162, 12
    %v4486 = vpop.permute.xlu0 %4485
    %4487 = vrot.lane.b32.xlu0 %v4164, 12
    %v4488 = vpop.permute.xlu0 %4487
    %4489 = vrot.lane.b32.xlu0 %v4165, 12
    %v4490 = vpop.permute.xlu0 %4489
    %4491 = vrot.lane.b32.xlu0 %v4167, 12
    %v4492 = vpop.permute.xlu0 %4491
    %4493 = vrot.lane.b32.xlu0 %v4168, 12
    %v4494 = vpop.permute.xlu0 %4493
    %v4527 = vrot.slane %v4138, 1
    %v4528 = vrot.slane %v4168, 1
    %4529 = vrot.lane.b32.xlu0 %v4190, 16
    %v4530 = vpop.permute.xlu0 %4529
    %4531 = vrot.lane.b32.xlu0 %v4191, 16
    %v4532 = vpop.permute.xlu0 %4531
    %4533 = vrot.lane.b32.xlu0 %v4192, 16
    %v4534 = vpop.permute.xlu0 %4533
    %4535 = vrot.lane.b32.xlu0 %v4193, 16
    %v4536 = vpop.permute.xlu0 %4535
    %4537 = vrot.lane.b32.xlu0 %v4194, 16
    %v4538 = vpop.permute.xlu0 %4537
    %4539 = vrot.lane.b32.xlu0 %v4195, 16
    %v4540 = vpop.permute.xlu0 %4539
    %4541 = vrot.lane.b32.xlu0 %v4196, 16
    %v4542 = vpop.permute.xlu0 %4541
    %4543 = vrot.lane.b32.xlu0 %v4527, 16
    %v4544 = vpop.permute.xlu0 %4543
    %4545 = vrot.lane.b32.xlu0 %v4198, 16
    %v4546 = vpop.permute.xlu0 %4545
    %4547 = vrot.lane.b32.xlu0 %v4199, 16
    %v4548 = vpop.permute.xlu0 %4547
    %4549 = vrot.lane.b32.xlu0 %v4200, 16
    %v4550 = vpop.permute.xlu0 %4549
    %4551 = vrot.lane.b32.xlu0 %v4201, 16
    %v4552 = vpop.permute.xlu0 %4551
    %4553 = vrot.lane.b32.xlu0 %v4202, 16
    %v4554 = vpop.permute.xlu0 %4553
    %4555 = vrot.lane.b32.xlu0 %v4203, 16
    %v4556 = vpop.permute.xlu0 %4555
    %4557 = vrot.lane.b32.xlu0 %v4204, 16
    %v4558 = vpop.permute.xlu0 %4557
    %4559 = vrot.lane.b32.xlu0 %v4528, 16
    %v4560 = vpop.permute.xlu0 %4559
    %v4579 = vrot.slane %v4138, 2
    %v4580 = vrot.slane %v4139, 2
    %v4581 = vsel %vm795, %v4579, %v4580
    %v4582 = vrot.slane %v4168, 2
    %v4583 = vrot.slane %v4169, 2
    %v4584 = vsel %vm795, %v4582, %v4583
    %4585 = vrot.lane.b32.xlu0 %v4272, 20
    %v4586 = vpop.permute.xlu0 %4585
    %4587 = vrot.lane.b32.xlu0 %v4274, 20
    %v4588 = vpop.permute.xlu0 %4587
    %4589 = vrot.lane.b32.xlu0 %v4275, 20
    %v4590 = vpop.permute.xlu0 %4589
    %4591 = vrot.lane.b32.xlu0 %v4277, 20
    %v4592 = vpop.permute.xlu0 %4591
    %4593 = vrot.lane.b32.xlu0 %v4278, 20
    %v4594 = vpop.permute.xlu0 %4593
    %4595 = vrot.lane.b32.xlu0 %v4280, 20
    %v4596 = vpop.permute.xlu0 %4595
    %4597 = vrot.lane.b32.xlu0 %v4281, 20
    %v4598 = vpop.permute.xlu0 %4597
    %4599 = vrot.lane.b32.xlu0 %v4283, 20
    %v4600 = vpop.permute.xlu0 %4599
    %4601 = vrot.lane.b32.xlu0 %v4284, 20
    %v4602 = vpop.permute.xlu0 %4601
    %4603 = vrot.lane.b32.xlu0 %v4286, 20
    %v4604 = vpop.permute.xlu0 %4603
    %4605 = vrot.lane.b32.xlu0 %v4287, 20
    %v4606 = vpop.permute.xlu0 %4605
    %4607 = vrot.lane.b32.xlu0 %v4289, 20
    %v4608 = vpop.permute.xlu0 %4607
    %4609 = vrot.lane.b32.xlu0 %v4290, 20
    %v4610 = vpop.permute.xlu0 %4609
    %4611 = vrot.lane.b32.xlu0 %v4292, 20
    %v4612 = vpop.permute.xlu0 %4611
    %4613 = vrot.lane.b32.xlu0 %v4579, 20
    %v4614 = vpop.permute.xlu0 %4613
    %4615 = vrot.lane.b32.xlu0 %v4581, 20
    %v4616 = vpop.permute.xlu0 %4615
    %4617 = vrot.lane.b32.xlu0 %v4296, 20
    %v4618 = vpop.permute.xlu0 %4617
    %4619 = vrot.lane.b32.xlu0 %v4298, 20
    %v4620 = vpop.permute.xlu0 %4619
    %4621 = vrot.lane.b32.xlu0 %v4299, 20
    %v4622 = vpop.permute.xlu0 %4621
    %4623 = vrot.lane.b32.xlu0 %v4301, 20
    %v4624 = vpop.permute.xlu0 %4623
    %4625 = vrot.lane.b32.xlu0 %v4302, 20
    %v4626 = vpop.permute.xlu0 %4625
    %4627 = vrot.lane.b32.xlu0 %v4304, 20
    %v4628 = vpop.permute.xlu0 %4627
    %4629 = vrot.lane.b32.xlu0 %v4305, 20
    %v4630 = vpop.permute.xlu0 %4629
    %4631 = vrot.lane.b32.xlu0 %v4307, 20
    %v4632 = vpop.permute.xlu0 %4631
    %4633 = vrot.lane.b32.xlu0 %v4308, 20
    %v4634 = vpop.permute.xlu0 %4633
    %4635 = vrot.lane.b32.xlu0 %v4310, 20
    %v4636 = vpop.permute.xlu0 %4635
    %4637 = vrot.lane.b32.xlu0 %v4311, 20
    %v4638 = vpop.permute.xlu0 %4637
    %4639 = vrot.lane.b32.xlu0 %v4313, 20
    %v4640 = vpop.permute.xlu0 %4639
    %4641 = vrot.lane.b32.xlu0 %v4314, 20
    %v4642 = vpop.permute.xlu0 %4641
    %4643 = vrot.lane.b32.xlu0 %v4316, 20
    %v4644 = vpop.permute.xlu0 %4643
    %4645 = vrot.lane.b32.xlu0 %v4582, 20
    %v4646 = vpop.permute.xlu0 %4645
    %4647 = vrot.lane.b32.xlu0 %v4584, 20
    %v4648 = vpop.permute.xlu0 %4647
    %4685 = vrot.lane.b32.xlu0 %v4119, 24
    %v4686 = vpop.permute.xlu0 %4685
    %4687 = vrot.lane.b32.xlu0 %v4120, 24
    %v4688 = vpop.permute.xlu0 %4687
    %4689 = vrot.lane.b32.xlu0 %v4122, 24
    %v4690 = vpop.permute.xlu0 %4689
    %4691 = vrot.lane.b32.xlu0 %v4123, 24
    %v4692 = vpop.permute.xlu0 %4691
    %4693 = vrot.lane.b32.xlu0 %v4125, 24
    %v4694 = vpop.permute.xlu0 %4693
    %4695 = vrot.lane.b32.xlu0 %v4126, 24
    %v4696 = vpop.permute.xlu0 %4695
    %4697 = vrot.lane.b32.xlu0 %v4128, 24
    %v4698 = vpop.permute.xlu0 %4697
    %4699 = vrot.lane.b32.xlu0 %v4129, 24
    %v4700 = vpop.permute.xlu0 %4699
    %4701 = vrot.lane.b32.xlu0 %v4131, 24
    %v4702 = vpop.permute.xlu0 %4701
    %4703 = vrot.lane.b32.xlu0 %v4132, 24
    %v4704 = vpop.permute.xlu0 %4703
    %4705 = vrot.lane.b32.xlu0 %v4134, 24
    %v4706 = vpop.permute.xlu0 %4705
    %4707 = vrot.lane.b32.xlu0 %v4135, 24
    %v4708 = vpop.permute.xlu0 %4707
    %4709 = vrot.lane.b32.xlu0 %v4137, 24
    %v4710 = vpop.permute.xlu0 %4709
    %4711 = vrot.lane.b32.xlu0 %v4138, 24
    %v4712 = vpop.permute.xlu0 %4711
    %4713 = vrot.lane.b32.xlu0 %v4140, 24
    %v4714 = vpop.permute.xlu0 %4713
    %4715 = vrot.lane.b32.xlu0 %v4141, 24
    %v4716 = vpop.permute.xlu0 %4715
    %4717 = vrot.lane.b32.xlu0 %v4149, 24
    %v4718 = vpop.permute.xlu0 %4717
    %4719 = vrot.lane.b32.xlu0 %v4150, 24
    %v4720 = vpop.permute.xlu0 %4719
    %4721 = vrot.lane.b32.xlu0 %v4152, 24
    %v4722 = vpop.permute.xlu0 %4721
    %4723 = vrot.lane.b32.xlu0 %v4153, 24
    %v4724 = vpop.permute.xlu0 %4723
    %4725 = vrot.lane.b32.xlu0 %v4155, 24
    %v4726 = vpop.permute.xlu0 %4725
    %4727 = vrot.lane.b32.xlu0 %v4156, 24
    %v4728 = vpop.permute.xlu0 %4727
    %4729 = vrot.lane.b32.xlu0 %v4158, 24
    %v4730 = vpop.permute.xlu0 %4729
    %4731 = vrot.lane.b32.xlu0 %v4159, 24
    %v4732 = vpop.permute.xlu0 %4731
    %4733 = vrot.lane.b32.xlu0 %v4161, 24
    %v4734 = vpop.permute.xlu0 %4733
    %4735 = vrot.lane.b32.xlu0 %v4162, 24
    %v4736 = vpop.permute.xlu0 %4735
    %4737 = vrot.lane.b32.xlu0 %v4164, 24
    %v4738 = vpop.permute.xlu0 %4737
    %4739 = vrot.lane.b32.xlu0 %v4165, 24
    %v4740 = vpop.permute.xlu0 %4739
    %4741 = vrot.lane.b32.xlu0 %v4167, 24
    %v4742 = vpop.permute.xlu0 %4741
    %4743 = vrot.lane.b32.xlu0 %v4168, 24
    %v4744 = vpop.permute.xlu0 %4743
    %4745 = vrot.lane.b32.xlu0 %v4170, 24
    %v4746 = vpop.permute.xlu0 %4745
    %4747 = vrot.lane.b32.xlu0 %v4171, 24
    %v4748 = vpop.permute.xlu0 %4747
    %v4781 = vrot.slane %v4141, 1
    %v4782 = vrot.slane %v4171, 1
    %4783 = vrot.lane.b32.xlu0 %v4191, 28
    %v4784 = vpop.permute.xlu0 %4783
    %4785 = vrot.lane.b32.xlu0 %v4192, 28
    %v4786 = vpop.permute.xlu0 %4785
    %4787 = vrot.lane.b32.xlu0 %v4193, 28
    %v4788 = vpop.permute.xlu0 %4787
    %4789 = vrot.lane.b32.xlu0 %v4194, 28
    %v4790 = vpop.permute.xlu0 %4789
    %4791 = vrot.lane.b32.xlu0 %v4195, 28
    %v4792 = vpop.permute.xlu0 %4791
    %4793 = vrot.lane.b32.xlu0 %v4196, 28
    %v4794 = vpop.permute.xlu0 %4793
    %4795 = vrot.lane.b32.xlu0 %v4527, 28
    %v4796 = vpop.permute.xlu0 %4795
    %4797 = vrot.lane.b32.xlu0 %v4781, 28
    %v4798 = vpop.permute.xlu0 %4797
    %4799 = vrot.lane.b32.xlu0 %v4199, 28
    %v4800 = vpop.permute.xlu0 %4799
    %4801 = vrot.lane.b32.xlu0 %v4200, 28
    %v4802 = vpop.permute.xlu0 %4801
    %4803 = vrot.lane.b32.xlu0 %v4201, 28
    %v4804 = vpop.permute.xlu0 %4803
    %4805 = vrot.lane.b32.xlu0 %v4202, 28
    %v4806 = vpop.permute.xlu0 %4805
    %4807 = vrot.lane.b32.xlu0 %v4203, 28
    %v4808 = vpop.permute.xlu0 %4807
    %4809 = vrot.lane.b32.xlu0 %v4204, 28
    %v4810 = vpop.permute.xlu0 %4809
    %4811 = vrot.lane.b32.xlu0 %v4528, 28
    %v4812 = vpop.permute.xlu0 %4811
    %4813 = vrot.lane.b32.xlu0 %v4782, 28
    %v4814 = vpop.permute.xlu0 %4813
    %v4833 = vrot.slane %v4141, 2
    %v4834 = vrot.slane %v4142, 2
    %v4835 = vsel %vm795, %v4833, %v4834
    %v4836 = vrot.slane %v4171, 2
    %v4837 = vrot.slane %v4172, 2
    %v4838 = vsel %vm795, %v4836, %v4837
    %4839 = vrot.lane.b32.xlu0 %v4275, 32
    %v4840 = vpop.permute.xlu0 %4839
    %4841 = vrot.lane.b32.xlu0 %v4277, 32
    %v4842 = vpop.permute.xlu0 %4841
    %4843 = vrot.lane.b32.xlu0 %v4278, 32
    %v4844 = vpop.permute.xlu0 %4843
    %4845 = vrot.lane.b32.xlu0 %v4280, 32
    %v4846 = vpop.permute.xlu0 %4845
    %4847 = vrot.lane.b32.xlu0 %v4281, 32
    %v4848 = vpop.permute.xlu0 %4847
    %4849 = vrot.lane.b32.xlu0 %v4283, 32
    %v4850 = vpop.permute.xlu0 %4849
    %4851 = vrot.lane.b32.xlu0 %v4284, 32
    %v4852 = vpop.permute.xlu0 %4851
    %4853 = vrot.lane.b32.xlu0 %v4286, 32
    %v4854 = vpop.permute.xlu0 %4853
    %4855 = vrot.lane.b32.xlu0 %v4287, 32
    %v4856 = vpop.permute.xlu0 %4855
    %4857 = vrot.lane.b32.xlu0 %v4289, 32
    %v4858 = vpop.permute.xlu0 %4857
    %4859 = vrot.lane.b32.xlu0 %v4290, 32
    %v4860 = vpop.permute.xlu0 %4859
    %4861 = vrot.lane.b32.xlu0 %v4292, 32
    %v4862 = vpop.permute.xlu0 %4861
    %4863 = vrot.lane.b32.xlu0 %v4579, 32
    %v4864 = vpop.permute.xlu0 %4863
    %4865 = vrot.lane.b32.xlu0 %v4581, 32
    %v4866 = vpop.permute.xlu0 %4865
    %4867 = vrot.lane.b32.xlu0 %v4833, 32
    %v4868 = vpop.permute.xlu0 %4867
    %4869 = vrot.lane.b32.xlu0 %v4835, 32
    %v4870 = vpop.permute.xlu0 %4869
    %4871 = vrot.lane.b32.xlu0 %v4299, 32
    %v4872 = vpop.permute.xlu0 %4871
    %4873 = vrot.lane.b32.xlu0 %v4301, 32
    %v4874 = vpop.permute.xlu0 %4873
    %4875 = vrot.lane.b32.xlu0 %v4302, 32
    %v4876 = vpop.permute.xlu0 %4875
    %4877 = vrot.lane.b32.xlu0 %v4304, 32
    %v4878 = vpop.permute.xlu0 %4877
    %4879 = vrot.lane.b32.xlu0 %v4305, 32
    %v4880 = vpop.permute.xlu0 %4879
    %4881 = vrot.lane.b32.xlu0 %v4307, 32
    %v4882 = vpop.permute.xlu0 %4881
    %4883 = vrot.lane.b32.xlu0 %v4308, 32
    %v4884 = vpop.permute.xlu0 %4883
    %4885 = vrot.lane.b32.xlu0 %v4310, 32
    %v4886 = vpop.permute.xlu0 %4885
    %4887 = vrot.lane.b32.xlu0 %v4311, 32
    %v4888 = vpop.permute.xlu0 %4887
    %4889 = vrot.lane.b32.xlu0 %v4313, 32
    %v4890 = vpop.permute.xlu0 %4889
    %4891 = vrot.lane.b32.xlu0 %v4314, 32
    %v4892 = vpop.permute.xlu0 %4891
    %4893 = vrot.lane.b32.xlu0 %v4316, 32
    %v4894 = vpop.permute.xlu0 %4893
    %4895 = vrot.lane.b32.xlu0 %v4582, 32
    %v4896 = vpop.permute.xlu0 %4895
    %4897 = vrot.lane.b32.xlu0 %v4584, 32
    %v4898 = vpop.permute.xlu0 %4897
    %4899 = vrot.lane.b32.xlu0 %v4836, 32
    %v4900 = vpop.permute.xlu0 %4899
    %4901 = vrot.lane.b32.xlu0 %v4838, 32
    %v4902 = vpop.permute.xlu0 %4901
    %v4935 = vsel %vm43, %v4113, %v4206
    %v4936 = vsel %vm43, %v4114, %v4206
    %v4937 = vsel %vm43, %v4116, %v4208
    %v4938 = vsel %vm43, %v4117, %v4208
    %v4939 = vsel %vm43, %v4119, %v4210
    %v4940 = vsel %vm43, %v4120, %v4210
    %v4941 = vsel %vm43, %v4122, %v4212
    %v4942 = vsel %vm43, %v4123, %v4212
    %v4943 = vsel %vm43, %v4125, %v4214
    %v4944 = vsel %vm43, %v4126, %v4214
    %v4945 = vsel %vm43, %v4128, %v4216
    %v4946 = vsel %vm43, %v4129, %v4216
    %v4947 = vsel %vm43, %v4131, %v4218
    %v4948 = vsel %vm43, %v4132, %v4218
    %v4949 = vsel %vm43, %v4134, %v4220
    %v4950 = vsel %vm43, %v4135, %v4220
    %v4951 = vsel %vm43, %v4143, %v4222
    %v4952 = vsel %vm43, %v4144, %v4222
    %v4953 = vsel %vm43, %v4146, %v4224
    %v4954 = vsel %vm43, %v4147, %v4224
    %v4955 = vsel %vm43, %v4149, %v4226
    %v4956 = vsel %vm43, %v4150, %v4226
    %v4957 = vsel %vm43, %v4152, %v4228
    %v4958 = vsel %vm43, %v4153, %v4228
    %v4959 = vsel %vm43, %v4155, %v4230
    %v4960 = vsel %vm43, %v4156, %v4230
    %v4961 = vsel %vm43, %v4158, %v4232
    %v4962 = vsel %vm43, %v4159, %v4232
    %v4963 = vsel %vm43, %v4161, %v4234
    %v4964 = vsel %vm43, %v4162, %v4234
    %v4965 = vsel %vm43, %v4164, %v4236
    %v4966 = vsel %vm43, %v4165, %v4236
    %v4967 = vsel %vm1986, %v4935, %v4318
    %v4968 = vsel %vm1986, %v4936, %v4320
    %v4969 = vsel %vm1986, %v4937, %v4322
    %v4970 = vsel %vm1986, %v4938, %v4324
    %v4971 = vsel %vm1986, %v4939, %v4326
    %v4972 = vsel %vm1986, %v4940, %v4328
    %v4973 = vsel %vm1986, %v4941, %v4330
    %v4974 = vsel %vm1986, %v4942, %v4332
    %v4975 = vsel %vm1986, %v4943, %v4334
    %v4976 = vsel %vm1986, %v4944, %v4336
    %v4977 = vsel %vm1986, %v4945, %v4338
    %v4978 = vsel %vm1986, %v4946, %v4340
    %v4979 = vsel %vm1986, %v4947, %v4342
    %v4980 = vsel %vm1986, %v4948, %v4344
    %v4981 = vsel %vm1986, %v4949, %v4346
    %v4982 = vsel %vm1986, %v4950, %v4348
    %v4983 = vsel %vm1986, %v4951, %v4350
    %v4984 = vsel %vm1986, %v4952, %v4352
    %v4985 = vsel %vm1986, %v4953, %v4354
    %v4986 = vsel %vm1986, %v4954, %v4356
    %v4987 = vsel %vm1986, %v4955, %v4358
    %v4988 = vsel %vm1986, %v4956, %v4360
    %v4989 = vsel %vm1986, %v4957, %v4362
    %v4990 = vsel %vm1986, %v4958, %v4364
    %v4991 = vsel %vm1986, %v4959, %v4366
    %v4992 = vsel %vm1986, %v4960, %v4368
    %v4993 = vsel %vm1986, %v4961, %v4370
    %v4994 = vsel %vm1986, %v4962, %v4372
    %v4995 = vsel %vm1986, %v4963, %v4374
    %v4996 = vsel %vm1986, %v4964, %v4376
    %v4997 = vsel %vm1986, %v4965, %v4378
    %v4998 = vsel %vm1986, %v4966, %v4380
    %v4999 = vsel %vm791, %v4967, %v4432
    %v5000 = vsel %vm791, %v4968, %v4434
    %v5001 = vsel %vm791, %v4969, %v4436
    %v5002 = vsel %vm791, %v4970, %v4438
    %v5003 = vsel %vm791, %v4971, %v4440
    %v5004 = vsel %vm791, %v4972, %v4442
    %v5005 = vsel %vm791, %v4973, %v4444
    %v5006 = vsel %vm791, %v4974, %v4446
    %v5007 = vsel %vm791, %v4975, %v4448
    %v5008 = vsel %vm791, %v4976, %v4450
    %v5009 = vsel %vm791, %v4977, %v4452
    %v5010 = vsel %vm791, %v4978, %v4454
    %v5011 = vsel %vm791, %v4979, %v4456
    %v5012 = vsel %vm791, %v4980, %v4458
    %v5013 = vsel %vm791, %v4981, %v4460
    %v5014 = vsel %vm791, %v4982, %v4462
    %v5015 = vsel %vm791, %v4983, %v4464
    %v5016 = vsel %vm791, %v4984, %v4466
    %v5017 = vsel %vm791, %v4985, %v4468
    %v5018 = vsel %vm791, %v4986, %v4470
    %v5019 = vsel %vm791, %v4987, %v4472
    %v5020 = vsel %vm791, %v4988, %v4474
    %v5021 = vsel %vm791, %v4989, %v4476
    %v5022 = vsel %vm791, %v4990, %v4478
    %v5023 = vsel %vm791, %v4991, %v4480
    %v5024 = vsel %vm791, %v4992, %v4482
    %v5025 = vsel %vm791, %v4993, %v4484
    %v5026 = vsel %vm791, %v4994, %v4486
    %v5027 = vsel %vm791, %v4995, %v4488
    %v5028 = vsel %vm791, %v4996, %v4490
    %v5029 = vsel %vm791, %v4997, %v4492
    %v5030 = vsel %vm791, %v4998, %v4494
    %v5031 = vsel %vm168, %v4999, %v4530
    %v5032 = vsel %vm168, %v5000, %v4530
    %v5033 = vsel %vm168, %v5001, %v4532
    %v5034 = vsel %vm168, %v5002, %v4532
    %v5035 = vsel %vm168, %v5003, %v4534
    %v5036 = vsel %vm168, %v5004, %v4534
    %v5037 = vsel %vm168, %v5005, %v4536
    %v5038 = vsel %vm168, %v5006, %v4536
    %v5039 = vsel %vm168, %v5007, %v4538
    %v5040 = vsel %vm168, %v5008, %v4538
    %v5041 = vsel %vm168, %v5009, %v4540
    %v5042 = vsel %vm168, %v5010, %v4540
    %v5043 = vsel %vm168, %v5011, %v4542
    %v5044 = vsel %vm168, %v5012, %v4542
    %v5045 = vsel %vm168, %v5013, %v4544
    %v5046 = vsel %vm168, %v5014, %v4544
    %v5047 = vsel %vm168, %v5015, %v4546
    %v5048 = vsel %vm168, %v5016, %v4546
    %v5049 = vsel %vm168, %v5017, %v4548
    %v5050 = vsel %vm168, %v5018, %v4548
    %v5051 = vsel %vm168, %v5019, %v4550
    %v5052 = vsel %vm168, %v5020, %v4550
    %v5053 = vsel %vm168, %v5021, %v4552
    %v5054 = vsel %vm168, %v5022, %v4552
    %v5055 = vsel %vm168, %v5023, %v4554
    %v5056 = vsel %vm168, %v5024, %v4554
    %v5057 = vsel %vm168, %v5025, %v4556
    %v5058 = vsel %vm168, %v5026, %v4556
    %v5059 = vsel %vm168, %v5027, %v4558
    %v5060 = vsel %vm168, %v5028, %v4558
    %v5061 = vsel %vm168, %v5029, %v4560
    %v5062 = vsel %vm168, %v5030, %v4560
    %v5063 = vsel %vm2083, %v5031, %v4586
    %v5064 = vsel %vm2083, %v5032, %v4588
    %v5065 = vsel %vm2083, %v5033, %v4590
    %v5066 = vsel %vm2083, %v5034, %v4592
    %v5067 = vsel %vm2083, %v5035, %v4594
    %v5068 = vsel %vm2083, %v5036, %v4596
    %v5069 = vsel %vm2083, %v5037, %v4598
    %v5070 = vsel %vm2083, %v5038, %v4600
    %v5071 = vsel %vm2083, %v5039, %v4602
    %v5072 = vsel %vm2083, %v5040, %v4604
    %v5073 = vsel %vm2083, %v5041, %v4606
    %v5074 = vsel %vm2083, %v5042, %v4608
    %v5075 = vsel %vm2083, %v5043, %v4610
    %v5076 = vsel %vm2083, %v5044, %v4612
    %v5077 = vsel %vm2083, %v5045, %v4614
    %v5078 = vsel %vm2083, %v5046, %v4616
    %v5079 = vsel %vm2083, %v5047, %v4618
    %v5080 = vsel %vm2083, %v5048, %v4620
    %v5081 = vsel %vm2083, %v5049, %v4622
    %v5082 = vsel %vm2083, %v5050, %v4624
    %v5083 = vsel %vm2083, %v5051, %v4626
    %v5084 = vsel %vm2083, %v5052, %v4628
    %v5085 = vsel %vm2083, %v5053, %v4630
    %v5086 = vsel %vm2083, %v5054, %v4632
    %v5087 = vsel %vm2083, %v5055, %v4634
    %v5088 = vsel %vm2083, %v5056, %v4636
    %v5089 = vsel %vm2083, %v5057, %v4638
    %v5090 = vsel %vm2083, %v5058, %v4640
    %v5091 = vsel %vm2083, %v5059, %v4642
    %v5092 = vsel %vm2083, %v5060, %v4644
    %v5093 = vsel %vm2083, %v5061, %v4646
    %v5094 = vsel %vm2083, %v5062, %v4648
    %v5095 = vsel %vm2116, %v5063, %v4686
    %v5096 = vsel %vm2116, %v5064, %v4688
    %v5097 = vsel %vm2116, %v5065, %v4690
    %v5098 = vsel %vm2116, %v5066, %v4692
    %v5099 = vsel %vm2116, %v5067, %v4694
    %v5100 = vsel %vm2116, %v5068, %v4696
    %v5101 = vsel %vm2116, %v5069, %v4698
    %v5102 = vsel %vm2116, %v5070, %v4700
    %v5103 = vsel %vm2116, %v5071, %v4702
    %v5104 = vsel %vm2116, %v5072, %v4704
    %v5105 = vsel %vm2116, %v5073, %v4706
    %v5106 = vsel %vm2116, %v5074, %v4708
    %v5107 = vsel %vm2116, %v5075, %v4710
    %v5108 = vsel %vm2116, %v5076, %v4712
    %v5109 = vsel %vm2116, %v5077, %v4714
    %v5110 = vsel %vm2116, %v5078, %v4716
    %v5111 = vsel %vm2116, %v5079, %v4718
    %v5112 = vsel %vm2116, %v5080, %v4720
    %v5113 = vsel %vm2116, %v5081, %v4722
    %v5114 = vsel %vm2116, %v5082, %v4724
    %v5115 = vsel %vm2116, %v5083, %v4726
    %v5116 = vsel %vm2116, %v5084, %v4728
    %v5117 = vsel %vm2116, %v5085, %v4730
    %v5118 = vsel %vm2116, %v5086, %v4732
    %v5119 = vsel %vm2116, %v5087, %v4734
    %v5120 = vsel %vm2116, %v5088, %v4736
    %v5121 = vsel %vm2116, %v5089, %v4738
    %v5122 = vsel %vm2116, %v5090, %v4740
    %v5123 = vsel %vm2116, %v5091, %v4742
    %v5124 = vsel %vm2116, %v5092, %v4744
    %v5125 = vsel %vm2116, %v5093, %v4746
    %v5126 = vsel %vm2116, %v5094, %v4748
    %v5127 = vsel %vm2149, %v5095, %v4784
    %v5128 = vsel %vm2149, %v5096, %v4784
    %v5129 = vsel %vm2149, %v5097, %v4786
    %v5130 = vsel %vm2149, %v5098, %v4786
    %v5131 = vsel %vm2149, %v5099, %v4788
    %v5132 = vsel %vm2149, %v5100, %v4788
    %v5133 = vsel %vm2149, %v5101, %v4790
    %v5134 = vsel %vm2149, %v5102, %v4790
    %v5135 = vsel %vm2149, %v5103, %v4792
    %v5136 = vsel %vm2149, %v5104, %v4792
    %v5137 = vsel %vm2149, %v5105, %v4794
    %v5138 = vsel %vm2149, %v5106, %v4794
    %v5139 = vsel %vm2149, %v5107, %v4796
    %v5140 = vsel %vm2149, %v5108, %v4796
    %v5141 = vsel %vm2149, %v5109, %v4798
    %v5142 = vsel %vm2149, %v5110, %v4798
    %v5143 = vsel %vm2149, %v5111, %v4800
    %v5144 = vsel %vm2149, %v5112, %v4800
    %v5145 = vsel %vm2149, %v5113, %v4802
    %v5146 = vsel %vm2149, %v5114, %v4802
    %v5147 = vsel %vm2149, %v5115, %v4804
    %v5148 = vsel %vm2149, %v5116, %v4804
    %v5149 = vsel %vm2149, %v5117, %v4806
    %v5150 = vsel %vm2149, %v5118, %v4806
    %v5151 = vsel %vm2149, %v5119, %v4808
    %v5152 = vsel %vm2149, %v5120, %v4808
    %v5153 = vsel %vm2149, %v5121, %v4810
    %v5154 = vsel %vm2149, %v5122, %v4810
    %v5155 = vsel %vm2149, %v5123, %v4812
    %v5156 = vsel %vm2149, %v5124, %v4812
    %v5157 = vsel %vm2149, %v5125, %v4814
    %v5158 = vsel %vm2149, %v5126, %v4814
    %v5159 = vsel %vm2182, %v5127, %v4840
    %v5160 = vsel %vm2182, %v5128, %v4842
    %v5161 = vsel %vm2182, %v5129, %v4844
    %v5162 = vsel %vm2182, %v5130, %v4846
    %v5163 = vsel %vm2182, %v5131, %v4848
    %v5164 = vsel %vm2182, %v5132, %v4850
    %v5165 = vsel %vm2182, %v5133, %v4852
    %v5166 = vsel %vm2182, %v5134, %v4854
    %v5167 = vsel %vm2182, %v5135, %v4856
    %v5168 = vsel %vm2182, %v5136, %v4858
    %v5169 = vsel %vm2182, %v5137, %v4860
    %v5170 = vsel %vm2182, %v5138, %v4862
    %v5171 = vsel %vm2182, %v5139, %v4864
    %v5172 = vsel %vm2182, %v5140, %v4866
    %v5173 = vsel %vm2182, %v5141, %v4868
    %v5174 = vsel %vm2182, %v5142, %v4870
    %v5175 = vsel %vm2182, %v5143, %v4872
    %v5176 = vsel %vm2182, %v5144, %v4874
    %v5177 = vsel %vm2182, %v5145, %v4876
    %v5178 = vsel %vm2182, %v5146, %v4878
    %v5179 = vsel %vm2182, %v5147, %v4880
    %v5180 = vsel %vm2182, %v5148, %v4882
    %v5181 = vsel %vm2182, %v5149, %v4884
    %v5182 = vsel %vm2182, %v5150, %v4886
    %v5183 = vsel %vm2182, %v5151, %v4888
    %v5184 = vsel %vm2182, %v5152, %v4890
    %v5185 = vsel %vm2182, %v5153, %v4892
    %v5186 = vsel %vm2182, %v5154, %v4894
    %v5187 = vsel %vm2182, %v5155, %v4896
    %v5188 = vsel %vm2182, %v5156, %v4898
    %v5189 = vsel %vm2182, %v5157, %v4900
    %v5190 = vsel %vm2182, %v5158, %v4902
    %v5223 = vrot.slane %v5159, 7
    %v5224 = vrot.slane %v5160, 7
    %v5225 = vsel %vm2247, %v5223, %v5224
    %v5226 = vrot.slane %v5161, 7
    %v5227 = vrot.slane %v5162, 7
    %v5228 = vsel %vm2247, %v5226, %v5227
    %v5229 = vrot.slane %v5163, 7
    %v5230 = vrot.slane %v5164, 7
    %v5231 = vsel %vm2247, %v5229, %v5230
    %v5232 = vrot.slane %v5165, 7
    %v5233 = vrot.slane %v5166, 7
    %v5234 = vsel %vm2247, %v5232, %v5233
    %v5235 = vrot.slane %v5167, 7
    %v5236 = vrot.slane %v5168, 7
    %v5237 = vsel %vm2247, %v5235, %v5236
    %v5238 = vrot.slane %v5169, 7
    %v5239 = vrot.slane %v5170, 7
    %v5240 = vsel %vm2247, %v5238, %v5239
    %v5241 = vrot.slane %v5171, 7
    %v5242 = vrot.slane %v5172, 7
    %v5243 = vsel %vm2247, %v5241, %v5242
    %v5244 = vrot.slane %v5173, 7
    %v5245 = vrot.slane %v5174, 7
    %v5246 = vsel %vm2247, %v5244, %v5245
    %v5247 = vrot.slane %v5175, 7
    %v5248 = vrot.slane %v5176, 7
    %v5249 = vsel %vm2247, %v5247, %v5248
    %v5250 = vrot.slane %v5177, 7
    %v5251 = vrot.slane %v5178, 7
    %v5252 = vsel %vm2247, %v5250, %v5251
    %v5253 = vrot.slane %v5179, 7
    %v5254 = vrot.slane %v5180, 7
    %v5255 = vsel %vm2247, %v5253, %v5254
    %v5256 = vrot.slane %v5181, 7
    %v5257 = vrot.slane %v5182, 7
    %v5258 = vsel %vm2247, %v5256, %v5257
    %v5259 = vrot.slane %v5183, 7
    %v5260 = vrot.slane %v5184, 7
    %v5261 = vsel %vm2247, %v5259, %v5260
    %v5262 = vrot.slane %v5185, 7
    %v5263 = vrot.slane %v5186, 7
    %v5264 = vsel %vm2247, %v5262, %v5263
    %v5265 = vrot.slane %v5187, 7
    %v5266 = vrot.slane %v5188, 7
    %v5267 = vsel %vm2247, %v5265, %v5266
    %v5268 = vrot.slane %v5189, 7
    %v5269 = vrot.slane %v5190, 7
    %v5270 = vsel %vm2247, %v5268, %v5269
    %v5287 = vpack.c.bf16 %v5228, %v5225
    %v5288 = vpack.c.bf16 %v5234, %v5231
    %v5289 = vpack.c.bf16 %v5240, %v5237
    %v5290 = vpack.c.bf16 %v5246, %v5243
    %v5291 = vpack.c.bf16 %v5252, %v5249
    %v5292 = vpack.c.bf16 %v5258, %v5255
    %v5293 = vpack.c.bf16 %v5264, %v5261
    %v5294 = vpack.c.bf16 %v5270, %v5267
    %s5295 = scalar_lea.vmem %s8, 40
    %v5296 = vld [vmem:[%s5295] sm:$0xf]
    %v5297 = vld [vmem:[%s5295 + $0x4] sm:$0xf]
    %v5298 = vld [vmem:[%s5295 + $0x8] sm:$0xf]
    %v5299 = vld [vmem:[%s5295 + $0xc] sm:$0xf]
    %v5300 = vld [vmem:[%s5295 + $0x10] sm:$0x3]
    %v5306 = vunpack.c.l.b16 %v5296
    %v5307 = vunpack.c.l.b16 %v5297
    %v5308 = vunpack.c.l.b16 %v5298
    %v5309 = vunpack.c.l.b16 %v5299
    %v5310 = vunpack.c.l.b16 %v5300
    %v5311 = vpack.c.b16 %v5307, %v5306
    %v5312 = vpack.c.b16 %v5309, %v5308
    %v5313 = vpack.c.b16 %v5310, %v5310
    %v5317 = vsel %vm2340, %v5287, 0
    %v5320 = vsel %vm2340, %v5288, 0
    %v5323 = vsel %vm2340, %v5289, 0
    %v5326 = vsel %vm2340, %v5290, 0
    %v5329 = vsel %vm2340, %v5291, 0
    %v5332 = vsel %vm2340, %v5292, 0
    %v5335 = vsel %vm2340, %v5293, 0
    %v5338 = vsel %vm2340, %v5294, 0
    %v5341 = vsel %vm2365, %v5313, 0
    %5343 = vmatprep.subr.bf16.mxu0 0
    %5344 = vmatpush1.bf16.msra.mxu0 %v5311
    %5345 = vmatprep.subr.bf16.mxu0 0
    %5346 = vmatpush1.bf16.msra.mxu0 %v5312
    %5347 = vmatprep.subr.bf16.mxu0 0
    %5348 = vmatpush1.bf16.msra.mxu0 %v5341
    %5349 = vmatprep.subr.bf16.mxu0 0
    %5350 = vmatpush1.bf16.msra.mxu0 0
    %5351 = vmatprep.subr.bf16.mxu0 0
    %5352 = vmatpush1.bf16.msra.mxu0 0
    %5353 = vmatprep.subr.bf16.mxu0 0
    %5354 = vmatpush1.bf16.msra.mxu0 0
    %5355 = vmatprep.subr.bf16.mxu0 0
    %5356 = vmatpush1.bf16.msra.mxu0 0
    %5357 = vmatprep.subr.bf16.mxu0 0
    %5358 = vmatpush1.bf16.msra.mxu0 0
    %5359 = vmatprep.subr.bf16.mxu0 0
    %5360 = vmatpush1.bf16.msra.mxu0 0
    %5361 = vmatprep.subr.bf16.mxu0 0
    %5362 = vmatpush1.bf16.msra.mxu0 0
    %5363 = vmatprep.subr.bf16.mxu0 0
    %5364 = vmatpush1.bf16.msra.mxu0 0
    %5365 = vmatprep.subr.bf16.mxu0 0
    %5366 = vmatpush1.bf16.msra.mxu0 0
    %5367 = vmatprep.subr.bf16.mxu0 0
    %5368 = vmatpush1.bf16.msra.mxu0 0
    %5369 = vmatprep.subr.bf16.mxu0 0
    %5370 = vmatpush1.bf16.msra.mxu0 0
    %5371 = vmatprep.subr.bf16.mxu0 0
    %5372 = vmatpush1.bf16.msra.mxu0 0
    %5373 = vmatprep.subr.bf16.mxu0 0
    %5374 = vmatpush1.bf16.msra.mxu0 0
    %5375 = vmatprep.mubr.bf16.mxu0 0
    %5376 = vmatmul.mubr.bf16.gmra.mrb[0].mxu0 %v5317
    %v5377 = vpop.f32.mrb[0].mxu0
    %v5378 = vadd.f32 0.0, %v5377
    %v5379 = vpop.f32.mrb[0].mxu0
    %v5380 = vpop.f32.mrb[0].mxu0
    %v5381 = vadd.f32 0.0, %v5380
    %v5382 = vpop.f32.mrb[0].mxu0
    %5383 = vmatprep.mubr.bf16.mxu0 0
    %5384 = vmatmul.mubr.bf16.gmra.mrb[0].mxu0 %v5320
    %v5385 = vpop.f32.mrb[0].mxu0
    %v5386 = vadd.f32 0.0, %v5385
    %v5387 = vpop.f32.mrb[0].mxu0
    %v5388 = vpop.f32.mrb[0].mxu0
    %v5389 = vadd.f32 0.0, %v5388
    %v5390 = vpop.f32.mrb[0].mxu0
    %5391 = vmatprep.mubr.bf16.mxu0 0
    %5392 = vmatmul.mubr.bf16.gmra.mrb[0].mxu0 %v5323
    %v5393 = vpop.f32.mrb[0].mxu0
    %v5394 = vadd.f32 0.0, %v5393
    %v5395 = vpop.f32.mrb[0].mxu0
    %v5396 = vpop.f32.mrb[0].mxu0
    %v5397 = vadd.f32 0.0, %v5396
    %v5398 = vpop.f32.mrb[0].mxu0
    %5399 = vmatprep.mubr.bf16.mxu0 0
    %5400 = vmatmul.mubr.bf16.gmra.mrb[0].mxu0 %v5326
    %v5401 = vpop.f32.mrb[0].mxu0
    %v5402 = vadd.f32 0.0, %v5401
    %v5403 = vpop.f32.mrb[0].mxu0
    %v5404 = vpop.f32.mrb[0].mxu0
    %v5405 = vadd.f32 0.0, %v5404
    %v5406 = vpop.f32.mrb[0].mxu0
    %5407 = vmatprep.mubr.bf16.mxu0 0
    %5408 = vmatmul.mubr.bf16.gmra.mrb[0].mxu0 %v5329
    %v5409 = vpop.f32.mrb[0].mxu0
    %v5410 = vadd.f32 0.0, %v5409
    %v5411 = vpop.f32.mrb[0].mxu0
    %v5412 = vpop.f32.mrb[0].mxu0
    %v5413 = vadd.f32 0.0, %v5412
    %v5414 = vpop.f32.mrb[0].mxu0
    %5415 = vmatprep.mubr.bf16.mxu0 0
    %5416 = vmatmul.mubr.bf16.gmra.mrb[0].mxu0 %v5332
    %v5417 = vpop.f32.mrb[0].mxu0
    %v5418 = vadd.f32 0.0, %v5417
    %v5419 = vpop.f32.mrb[0].mxu0
    %v5420 = vpop.f32.mrb[0].mxu0
    %v5421 = vadd.f32 0.0, %v5420
    %v5422 = vpop.f32.mrb[0].mxu0
    %5423 = vmatprep.mubr.bf16.mxu0 0
    %5424 = vmatmul.mubr.bf16.gmra.mrb[0].mxu0 %v5335
    %v5425 = vpop.f32.mrb[0].mxu0
    %v5426 = vadd.f32 0.0, %v5425
    %v5427 = vpop.f32.mrb[0].mxu0
    %v5428 = vpop.f32.mrb[0].mxu0
    %v5429 = vadd.f32 0.0, %v5428
    %v5430 = vpop.f32.mrb[0].mxu0
    %5431 = vmatprep.mubr.bf16.mxu0 0
    %5432 = vmatmul.mubr.bf16.gmra.mrb[0].mxu0 %v5338
    %v5433 = vpop.f32.mrb[0].mxu0
    %v5434 = vadd.f32 0.0, %v5433
    %v5435 = vpop.f32.mrb[0].mxu0
    %v5436 = vpop.f32.mrb[0].mxu0
    %v5437 = vadd.f32 0.0, %v5436
    %v5438 = vpop.f32.mrb[0].mxu0
    %5439 = vdwg.mxu0
    %v5440 = vadd.f32 %v843, 1.0
    %v5443 = vunpack.c.l.s4 1966171168
    %v5444 = vunpack.c.0.s8 %v5443
    %v5445 = vlaneseq
    %v5446 = vshrl.u32 %v5445, 7
    %v5447 = vsub.s32 %v5444, %v5446
    %v5448 = vrot.slane %v5440, %v5447
    %v5449 = vcombine.high %v5448, %v5448
    %v5451 = vunpack.c.l.s4 1966171168
    %v5452 = vunpack.c.0.s8 %v5451
    %v5453 = vlaneseq
    %v5454 = vshrl.u32 %v5453, 7
    %v5455 = vsub.s32 %v5452, %v5454
    %v5456 = vrot.slane %v5448, %v5455
    %v5458 = vunpack.c.l.s4 1966171168
    %v5459 = vunpack.c.0.s8 %v5458
    %v5460 = vlaneseq
    %v5461 = vshrl.u32 %v5460, 7
    %v5462 = vsub.s32 %v5459, %v5461
    %v5463 = vrot.slane %v5449, %v5462
    %v5464 = vlaneseq
    %v5465 = vshrl.u32 %v5464, 7
    %v5466 = vsub.s32 0, %v5465
    %v5467 = vrot.slane %v5456, %v5466
    %v5468 = vlaneseq
    %v5469 = vshrl.u32 %v5468, 7
    %v5470 = vsub.s32 0, %v5469
    %v5471 = vrot.slane %v5463, %v5470
    %v5474 = vmul.f32 %v5467, %v418
    %v5475 = vmul.f32 %v5467, %v421
    %v5476 = vmul.f32 %v5467, %v426
    %v5477 = vmul.f32 %v5467, %v429
    %v5478 = vmul.f32 %v5467, %v434
    %v5479 = vmul.f32 %v5467, %v437
    %v5480 = vmul.f32 %v5467, %v442
    %v5481 = vmul.f32 %v5467, %v445
    %v5482 = vmul.f32 %v5471, %v450
    %v5483 = vmul.f32 %v5471, %v453
    %v5484 = vmul.f32 %v5471, %v458
    %v5485 = vmul.f32 %v5471, %v461
    %v5486 = vmul.f32 %v5471, %v466
    %v5487 = vmul.f32 %v5471, %v469
    %v5488 = vmul.f32 %v5471, %v474
    %v5489 = vmul.f32 %v5471, %v477
    %v5490 = vld [vmem:[%s9] sm:$0x1]
    %v5492 = vlaneseq
    %v5493 = vshrl.u32 %v5492, 7
    %v5494 = vsub.s32 0, %v5493
    %v5495 = vrot.slane %v5490, %v5494
    %v5497 = vmul.f32 %v5474, %v5495
    %v5498 = vmul.f32 %v5475, %v5495
    %v5499 = vmul.f32 %v5476, %v5495
    %v5500 = vmul.f32 %v5477, %v5495
    %v5501 = vmul.f32 %v5478, %v5495
    %v5502 = vmul.f32 %v5479, %v5495
    %v5503 = vmul.f32 %v5480, %v5495
    %v5504 = vmul.f32 %v5481, %v5495
    %v5505 = vmul.f32 %v5482, %v5495
    %v5506 = vmul.f32 %v5483, %v5495
    %v5507 = vmul.f32 %v5484, %v5495
    %v5508 = vmul.f32 %v5485, %v5495
    %v5509 = vmul.f32 %v5486, %v5495
    %v5510 = vmul.f32 %v5487, %v5495
    %v5511 = vmul.f32 %v5488, %v5495
    %v5512 = vmul.f32 %v5489, %v5495
    %v5513 = vld [vmem:[%s10] sm:$0x1]
    %v5515 = vlaneseq
    %v5516 = vshrl.u32 %v5515, 7
    %v5517 = vsub.s32 0, %v5516
    %v5518 = vrot.slane %v5513, %v5517
    %v5520 = vadd.f32 %v5497, %v5518
    %v5521 = vadd.f32 %v5498, %v5518
    %v5522 = vadd.f32 %v5499, %v5518
    %v5523 = vadd.f32 %v5500, %v5518
    %v5524 = vadd.f32 %v5501, %v5518
    %v5525 = vadd.f32 %v5502, %v5518
    %v5526 = vadd.f32 %v5503, %v5518
    %v5527 = vadd.f32 %v5504, %v5518
    %v5528 = vadd.f32 %v5505, %v5518
    %v5529 = vadd.f32 %v5506, %v5518
    %v5530 = vadd.f32 %v5507, %v5518
    %v5531 = vadd.f32 %v5508, %v5518
    %v5532 = vadd.f32 %v5509, %v5518
    %v5533 = vadd.f32 %v5510, %v5518
    %v5534 = vadd.f32 %v5511, %v5518
    %v5535 = vadd.f32 %v5512, %v5518
    %v5536 = vmax.f32 %v5520, 0.0
    %v5537 = vmax.f32 %v5521, 0.0
    %v5538 = vmax.f32 %v5522, 0.0
    %v5539 = vmax.f32 %v5523, 0.0
    %v5540 = vmax.f32 %v5524, 0.0
    %v5541 = vmax.f32 %v5525, 0.0
    %v5542 = vmax.f32 %v5526, 0.0
    %v5543 = vmax.f32 %v5527, 0.0
    %v5544 = vmax.f32 %v5528, 0.0
    %v5545 = vmax.f32 %v5529, 0.0
    %v5546 = vmax.f32 %v5530, 0.0
    %v5547 = vmax.f32 %v5531, 0.0
    %v5548 = vmax.f32 %v5532, 0.0
    %v5549 = vmax.f32 %v5533, 0.0
    %v5550 = vmax.f32 %v5534, 0.0
    %v5551 = vmax.f32 %v5535, 0.0
    %v5552 = vadd.f32 %v5536, 0.0
    %v5553 = vadd.f32 %v5537, 0.0
    %v5554 = vadd.f32 %v5538, 0.0
    %v5555 = vadd.f32 %v5539, 0.0
    %v5556 = vadd.f32 %v5540, 0.0
    %v5557 = vadd.f32 %v5541, 0.0
    %v5558 = vadd.f32 %v5542, 0.0
    %v5559 = vadd.f32 %v5543, 0.0
    %v5560 = vadd.f32 %v5544, 0.0
    %v5561 = vadd.f32 %v5545, 0.0
    %v5562 = vadd.f32 %v5546, 0.0
    %v5563 = vadd.f32 %v5547, 0.0
    %v5564 = vadd.f32 %v5548, 0.0
    %v5565 = vadd.f32 %v5549, 0.0
    %v5566 = vadd.f32 %v5550, 0.0
    %v5567 = vadd.f32 %v5551, 0.0
    %5584 = vrot.lane.b32.xlu0 %v418, 16
    %v5585 = vpop.permute.xlu0 %5584
    %5586 = vrot.lane.b32.xlu0 %v421, 16
    %v5587 = vpop.permute.xlu0 %5586
    %5588 = vrot.lane.b32.xlu0 %v426, 16
    %v5589 = vpop.permute.xlu0 %5588
    %5590 = vrot.lane.b32.xlu0 %v429, 16
    %v5591 = vpop.permute.xlu0 %5590
    %5592 = vrot.lane.b32.xlu0 %v434, 16
    %v5593 = vpop.permute.xlu0 %5592
    %5594 = vrot.lane.b32.xlu0 %v437, 16
    %v5595 = vpop.permute.xlu0 %5594
    %5596 = vrot.lane.b32.xlu0 %v442, 16
    %v5597 = vpop.permute.xlu0 %5596
    %5598 = vrot.lane.b32.xlu0 %v445, 16
    %v5599 = vpop.permute.xlu0 %5598
    %5600 = vrot.lane.b32.xlu0 %v450, 16
    %v5601 = vpop.permute.xlu0 %5600
    %5602 = vrot.lane.b32.xlu0 %v453, 16
    %v5603 = vpop.permute.xlu0 %5602
    %5604 = vrot.lane.b32.xlu0 %v458, 16
    %v5605 = vpop.permute.xlu0 %5604
    %5606 = vrot.lane.b32.xlu0 %v461, 16
    %v5607 = vpop.permute.xlu0 %5606
    %5608 = vrot.lane.b32.xlu0 %v466, 16
    %v5609 = vpop.permute.xlu0 %5608
    %5610 = vrot.lane.b32.xlu0 %v469, 16
    %v5611 = vpop.permute.xlu0 %5610
    %5612 = vrot.lane.b32.xlu0 %v474, 16
    %v5613 = vpop.permute.xlu0 %5612
    %5614 = vrot.lane.b32.xlu0 %v477, 16
    %v5615 = vpop.permute.xlu0 %5614
    %v5632 = vmul.f32 %v5467, %v5585
    %v5633 = vmul.f32 %v5467, %v5587
    %v5634 = vmul.f32 %v5467, %v5589
    %v5635 = vmul.f32 %v5467, %v5591
    %v5636 = vmul.f32 %v5467, %v5593
    %v5637 = vmul.f32 %v5467, %v5595
    %v5638 = vmul.f32 %v5467, %v5597
    %v5639 = vmul.f32 %v5467, %v5599
    %v5640 = vmul.f32 %v5471, %v5601
    %v5641 = vmul.f32 %v5471, %v5603
    %v5642 = vmul.f32 %v5471, %v5605
    %v5643 = vmul.f32 %v5471, %v5607
    %v5644 = vmul.f32 %v5471, %v5609
    %v5645 = vmul.f32 %v5471, %v5611
    %v5646 = vmul.f32 %v5471, %v5613
    %v5647 = vmul.f32 %v5471, %v5615
    %5648 = vrot.lane.b32.xlu0 %v5495, 16
    %v5649 = vpop.permute.xlu0 %5648
    %v5651 = vmul.f32 %v5632, %v5649
    %v5652 = vmul.f32 %v5633, %v5649
    %v5653 = vmul.f32 %v5634, %v5649
    %v5654 = vmul.f32 %v5635, %v5649
    %v5655 = vmul.f32 %v5636, %v5649
    %v5656 = vmul.f32 %v5637, %v5649
    %v5657 = vmul.f32 %v5638, %v5649
    %v5658 = vmul.f32 %v5639, %v5649
    %v5659 = vmul.f32 %v5640, %v5649
    %v5660 = vmul.f32 %v5641, %v5649
    %v5661 = vmul.f32 %v5642, %v5649
    %v5662 = vmul.f32 %v5643, %v5649
    %v5663 = vmul.f32 %v5644, %v5649
    %v5664 = vmul.f32 %v5645, %v5649
    %v5665 = vmul.f32 %v5646, %v5649
    %v5666 = vmul.f32 %v5647, %v5649
    %5667 = vrot.lane.b32.xlu0 %v5518, 16
    %v5668 = vpop.permute.xlu0 %5667
    %v5670 = vadd.f32 %v5651, %v5668
    %v5671 = vadd.f32 %v5652, %v5668
    %v5672 = vadd.f32 %v5653, %v5668
    %v5673 = vadd.f32 %v5654, %v5668
    %v5674 = vadd.f32 %v5655, %v5668
    %v5675 = vadd.f32 %v5656, %v5668
    %v5676 = vadd.f32 %v5657, %v5668
    %v5677 = vadd.f32 %v5658, %v5668
    %v5678 = vadd.f32 %v5659, %v5668
    %v5679 = vadd.f32 %v5660, %v5668
    %v5680 = vadd.f32 %v5661, %v5668
    %v5681 = vadd.f32 %v5662, %v5668
    %v5682 = vadd.f32 %v5663, %v5668
    %v5683 = vadd.f32 %v5664, %v5668
    %v5684 = vadd.f32 %v5665, %v5668
    %v5685 = vadd.f32 %v5666, %v5668
    %v5686 = vmax.f32 %v5670, 0.0
    %v5687 = vmax.f32 %v5671, 0.0
    %v5688 = vmax.f32 %v5672, 0.0
    %v5689 = vmax.f32 %v5673, 0.0
    %v5690 = vmax.f32 %v5674, 0.0
    %v5691 = vmax.f32 %v5675, 0.0
    %v5692 = vmax.f32 %v5676, 0.0
    %v5693 = vmax.f32 %v5677, 0.0
    %v5694 = vmax.f32 %v5678, 0.0
    %v5695 = vmax.f32 %v5679, 0.0
    %v5696 = vmax.f32 %v5680, 0.0
    %v5697 = vmax.f32 %v5681, 0.0
    %v5698 = vmax.f32 %v5682, 0.0
    %v5699 = vmax.f32 %v5683, 0.0
    %v5700 = vmax.f32 %v5684, 0.0
    %v5701 = vmax.f32 %v5685, 0.0
    %v5702 = vmul.f32 %v5686, 2.0
    %v5703 = vmul.f32 %v5687, 2.0
    %v5704 = vmul.f32 %v5688, 2.0
    %v5705 = vmul.f32 %v5689, 2.0
    %v5706 = vmul.f32 %v5690, 2.0
    %v5707 = vmul.f32 %v5691, 2.0
    %v5708 = vmul.f32 %v5692, 2.0
    %v5709 = vmul.f32 %v5693, 2.0
    %v5710 = vmul.f32 %v5694, 2.0
    %v5711 = vmul.f32 %v5695, 2.0
    %v5712 = vmul.f32 %v5696, 2.0
    %v5713 = vmul.f32 %v5697, 2.0
    %v5714 = vmul.f32 %v5698, 2.0
    %v5715 = vmul.f32 %v5699, 2.0
    %v5716 = vmul.f32 %v5700, 2.0
    %v5717 = vmul.f32 %v5701, 2.0
    %5734 = vrot.lane.b32.xlu0 %v5702, 112
    %v5735 = vpop.permute.xlu0 %5734
    %5736 = vrot.lane.b32.xlu0 %v5703, 112
    %v5737 = vpop.permute.xlu0 %5736
    %5738 = vrot.lane.b32.xlu0 %v5704, 112
    %v5739 = vpop.permute.xlu0 %5738
    %5740 = vrot.lane.b32.xlu0 %v5705, 112
    %v5741 = vpop.permute.xlu0 %5740
    %5742 = vrot.lane.b32.xlu0 %v5706, 112
    %v5743 = vpop.permute.xlu0 %5742
    %5744 = vrot.lane.b32.xlu0 %v5707, 112
    %v5745 = vpop.permute.xlu0 %5744
    %5746 = vrot.lane.b32.xlu0 %v5708, 112
    %v5747 = vpop.permute.xlu0 %5746
    %5748 = vrot.lane.b32.xlu0 %v5709, 112
    %v5749 = vpop.permute.xlu0 %5748
    %5750 = vrot.lane.b32.xlu0 %v5710, 112
    %v5751 = vpop.permute.xlu0 %5750
    %5752 = vrot.lane.b32.xlu0 %v5711, 112
    %v5753 = vpop.permute.xlu0 %5752
    %5754 = vrot.lane.b32.xlu0 %v5712, 112
    %v5755 = vpop.permute.xlu0 %5754
    %5756 = vrot.lane.b32.xlu0 %v5713, 112
    %v5757 = vpop.permute.xlu0 %5756
    %5758 = vrot.lane.b32.xlu0 %v5714, 112
    %v5759 = vpop.permute.xlu0 %5758
    %5760 = vrot.lane.b32.xlu0 %v5715, 112
    %v5761 = vpop.permute.xlu0 %5760
    %5762 = vrot.lane.b32.xlu0 %v5716, 112
    %v5763 = vpop.permute.xlu0 %5762
    %5764 = vrot.lane.b32.xlu0 %v5717, 112
    %v5765 = vpop.permute.xlu0 %5764
    %v5782 = vadd.f32 %v5552, %v5735
    %v5783 = vadd.f32 %v5553, %v5737
    %v5784 = vadd.f32 %v5554, %v5739
    %v5785 = vadd.f32 %v5555, %v5741
    %v5786 = vadd.f32 %v5556, %v5743
    %v5787 = vadd.f32 %v5557, %v5745
    %v5788 = vadd.f32 %v5558, %v5747
    %v5789 = vadd.f32 %v5559, %v5749
    %v5790 = vadd.f32 %v5560, %v5751
    %v5791 = vadd.f32 %v5561, %v5753
    %v5792 = vadd.f32 %v5562, %v5755
    %v5793 = vadd.f32 %v5563, %v5757
    %v5794 = vadd.f32 %v5564, %v5759
    %v5795 = vadd.f32 %v5565, %v5761
    %v5796 = vadd.f32 %v5566, %v5763
    %v5797 = vadd.f32 %v5567, %v5765
    %5798 = vrot.lane.b32.xlu0 %v418, 32
    %v5799 = vpop.permute.xlu0 %5798
    %5800 = vrot.lane.b32.xlu0 %v421, 32
    %v5801 = vpop.permute.xlu0 %5800
    %5802 = vrot.lane.b32.xlu0 %v426, 32
    %v5803 = vpop.permute.xlu0 %5802
    %5804 = vrot.lane.b32.xlu0 %v429, 32
    %v5805 = vpop.permute.xlu0 %5804
    %5806 = vrot.lane.b32.xlu0 %v434, 32
    %v5807 = vpop.permute.xlu0 %5806
    %5808 = vrot.lane.b32.xlu0 %v437, 32
    %v5809 = vpop.permute.xlu0 %5808
    %5810 = vrot.lane.b32.xlu0 %v442, 32
    %v5811 = vpop.permute.xlu0 %5810
    %5812 = vrot.lane.b32.xlu0 %v445, 32
    %v5813 = vpop.permute.xlu0 %5812
    %5814 = vrot.lane.b32.xlu0 %v450, 32
    %v5815 = vpop.permute.xlu0 %5814
    %5816 = vrot.lane.b32.xlu0 %v453, 32
    %v5817 = vpop.permute.xlu0 %5816
    %5818 = vrot.lane.b32.xlu0 %v458, 32
    %v5819 = vpop.permute.xlu0 %5818
    %5820 = vrot.lane.b32.xlu0 %v461, 32
    %v5821 = vpop.permute.xlu0 %5820
    %5822 = vrot.lane.b32.xlu0 %v466, 32
    %v5823 = vpop.permute.xlu0 %5822
    %5824 = vrot.lane.b32.xlu0 %v469, 32
    %v5825 = vpop.permute.xlu0 %5824
    %5826 = vrot.lane.b32.xlu0 %v474, 32
    %v5827 = vpop.permute.xlu0 %5826
    %5828 = vrot.lane.b32.xlu0 %v477, 32
    %v5829 = vpop.permute.xlu0 %5828
    %v5846 = vmul.f32 %v5467, %v5799
    %v5847 = vmul.f32 %v5467, %v5801
    %v5848 = vmul.f32 %v5467, %v5803
    %v5849 = vmul.f32 %v5467, %v5805
    %v5850 = vmul.f32 %v5467, %v5807
    %v5851 = vmul.f32 %v5467, %v5809
    %v5852 = vmul.f32 %v5467, %v5811
    %v5853 = vmul.f32 %v5467, %v5813
    %v5854 = vmul.f32 %v5471, %v5815
    %v5855 = vmul.f32 %v5471, %v5817
    %v5856 = vmul.f32 %v5471, %v5819
    %v5857 = vmul.f32 %v5471, %v5821
    %v5858 = vmul.f32 %v5471, %v5823
    %v5859 = vmul.f32 %v5471, %v5825
    %v5860 = vmul.f32 %v5471, %v5827
    %v5861 = vmul.f32 %v5471, %v5829
    %5862 = vrot.lane.b32.xlu0 %v5495, 32
    %v5863 = vpop.permute.xlu0 %5862
    %v5865 = vmul.f32 %v5846, %v5863
    %v5866 = vmul.f32 %v5847, %v5863
    %v5867 = vmul.f32 %v5848, %v5863
    %v5868 = vmul.f32 %v5849, %v5863
    %v5869 = vmul.f32 %v5850, %v5863
    %v5870 = vmul.f32 %v5851, %v5863
    %v5871 = vmul.f32 %v5852, %v5863
    %v5872 = vmul.f32 %v5853, %v5863
    %v5873 = vmul.f32 %v5854, %v5863
    %v5874 = vmul.f32 %v5855, %v5863
    %v5875 = vmul.f32 %v5856, %v5863
    %v5876 = vmul.f32 %v5857, %v5863
    %v5877 = vmul.f32 %v5858, %v5863
    %v5878 = vmul.f32 %v5859, %v5863
    %v5879 = vmul.f32 %v5860, %v5863
    %v5880 = vmul.f32 %v5861, %v5863
    %5881 = vrot.lane.b32.xlu0 %v5518, 32
    %v5882 = vpop.permute.xlu0 %5881
    %v5884 = vadd.f32 %v5865, %v5882
    %v5885 = vadd.f32 %v5866, %v5882
    %v5886 = vadd.f32 %v5867, %v5882
    %v5887 = vadd.f32 %v5868, %v5882
    %v5888 = vadd.f32 %v5869, %v5882
    %v5889 = vadd.f32 %v5870, %v5882
    %v5890 = vadd.f32 %v5871, %v5882
    %v5891 = vadd.f32 %v5872, %v5882
    %v5892 = vadd.f32 %v5873, %v5882
    %v5893 = vadd.f32 %v5874, %v5882
    %v5894 = vadd.f32 %v5875, %v5882
    %v5895 = vadd.f32 %v5876, %v5882
    %v5896 = vadd.f32 %v5877, %v5882
    %v5897 = vadd.f32 %v5878, %v5882
    %v5898 = vadd.f32 %v5879, %v5882
    %v5899 = vadd.f32 %v5880, %v5882
    %v5900 = vmax.f32 %v5884, 0.0
    %v5901 = vmax.f32 %v5885, 0.0
    %v5902 = vmax.f32 %v5886, 0.0
    %v5903 = vmax.f32 %v5887, 0.0
    %v5904 = vmax.f32 %v5888, 0.0
    %v5905 = vmax.f32 %v5889, 0.0
    %v5906 = vmax.f32 %v5890, 0.0
    %v5907 = vmax.f32 %v5891, 0.0
    %v5908 = vmax.f32 %v5892, 0.0
    %v5909 = vmax.f32 %v5893, 0.0
    %v5910 = vmax.f32 %v5894, 0.0
    %v5911 = vmax.f32 %v5895, 0.0
    %v5912 = vmax.f32 %v5896, 0.0
    %v5913 = vmax.f32 %v5897, 0.0
    %v5914 = vmax.f32 %v5898, 0.0
    %v5915 = vmax.f32 %v5899, 0.0
    %5932 = vrot.lane.b32.xlu0 %v5900, 96
    %v5933 = vpop.permute.xlu0 %5932
    %5934 = vrot.lane.b32.xlu0 %v5901, 96
    %v5935 = vpop.permute.xlu0 %5934
    %5936 = vrot.lane.b32.xlu0 %v5902, 96
    %v5937 = vpop.permute.xlu0 %5936
    %5938 = vrot.lane.b32.xlu0 %v5903, 96
    %v5939 = vpop.permute.xlu0 %5938
    %5940 = vrot.lane.b32.xlu0 %v5904, 96
    %v5941 = vpop.permute.xlu0 %5940
    %5942 = vrot.lane.b32.xlu0 %v5905, 96
    %v5943 = vpop.permute.xlu0 %5942
    %5944 = vrot.lane.b32.xlu0 %v5906, 96
    %v5945 = vpop.permute.xlu0 %5944
    %5946 = vrot.lane.b32.xlu0 %v5907, 96
    %v5947 = vpop.permute.xlu0 %5946
    %5948 = vrot.lane.b32.xlu0 %v5908, 96
    %v5949 = vpop.permute.xlu0 %5948
    %5950 = vrot.lane.b32.xlu0 %v5909, 96
    %v5951 = vpop.permute.xlu0 %5950
    %5952 = vrot.lane.b32.xlu0 %v5910, 96
    %v5953 = vpop.permute.xlu0 %5952
    %5954 = vrot.lane.b32.xlu0 %v5911, 96
    %v5955 = vpop.permute.xlu0 %5954
    %5956 = vrot.lane.b32.xlu0 %v5912, 96
    %v5957 = vpop.permute.xlu0 %5956
    %5958 = vrot.lane.b32.xlu0 %v5913, 96
    %v5959 = vpop.permute.xlu0 %5958
    %5960 = vrot.lane.b32.xlu0 %v5914, 96
    %v5961 = vpop.permute.xlu0 %5960
    %5962 = vrot.lane.b32.xlu0 %v5915, 96
    %v5963 = vpop.permute.xlu0 %5962
    %v5980 = vadd.f32 %v5782, %v5933
    %v5981 = vadd.f32 %v5783, %v5935
    %v5982 = vadd.f32 %v5784, %v5937
    %v5983 = vadd.f32 %v5785, %v5939
    %v5984 = vadd.f32 %v5786, %v5941
    %v5985 = vadd.f32 %v5787, %v5943
    %v5986 = vadd.f32 %v5788, %v5945
    %v5987 = vadd.f32 %v5789, %v5947
    %v5988 = vadd.f32 %v5790, %v5949
    %v5989 = vadd.f32 %v5791, %v5951
    %v5990 = vadd.f32 %v5792, %v5953
    %v5991 = vadd.f32 %v5793, %v5955
    %v5992 = vadd.f32 %v5794, %v5957
    %v5993 = vadd.f32 %v5795, %v5959
    %v5994 = vadd.f32 %v5796, %v5961
    %v5995 = vadd.f32 %v5797, %v5963
    %v5996 = vmul.f32 %v5980, 0.25
    %v5997 = vmul.f32 %v5981, 0.25
    %v5998 = vmul.f32 %v5982, 0.25
    %v5999 = vmul.f32 %v5983, 0.25
    %v6000 = vmul.f32 %v5984, 0.25
    %v6001 = vmul.f32 %v5985, 0.25
    %v6002 = vmul.f32 %v5986, 0.25
    %v6003 = vmul.f32 %v5987, 0.25
    %v6004 = vmul.f32 %v5988, 0.25
    %v6005 = vmul.f32 %v5989, 0.25
    %v6006 = vmul.f32 %v5990, 0.25
    %v6007 = vmul.f32 %v5991, 0.25
    %v6008 = vmul.f32 %v5992, 0.25
    %v6009 = vmul.f32 %v5993, 0.25
    %v6010 = vmul.f32 %v5994, 0.25
    %v6011 = vmul.f32 %v5995, 0.25
    %6012 = vrot.lane.b32.xlu0 %v5495, 124
    %v6013 = vpop.permute.xlu0 %6012
    %v6015 = vmul.f32 %v2404, %v6013
    %v6016 = vmul.f32 %v2407, %v6013
    %v6017 = vmul.f32 %v2412, %v6013
    %v6018 = vmul.f32 %v2415, %v6013
    %v6019 = vmul.f32 %v2420, %v6013
    %v6020 = vmul.f32 %v2423, %v6013
    %v6021 = vmul.f32 %v2428, %v6013
    %v6022 = vmul.f32 %v2431, %v6013
    %v6023 = vmul.f32 %v2436, %v6013
    %v6024 = vmul.f32 %v2439, %v6013
    %v6025 = vmul.f32 %v2444, %v6013
    %v6026 = vmul.f32 %v2447, %v6013
    %v6027 = vmul.f32 %v2452, %v6013
    %v6028 = vmul.f32 %v2455, %v6013
    %v6029 = vmul.f32 %v2460, %v6013
    %v6030 = vmul.f32 %v2463, %v6013
    %6031 = vrot.lane.b32.xlu0 %v5518, 124
    %v6032 = vpop.permute.xlu0 %6031
    %v6034 = vadd.f32 %v6015, %v6032
    %v6035 = vadd.f32 %v6016, %v6032
    %v6036 = vadd.f32 %v6017, %v6032
    %v6037 = vadd.f32 %v6018, %v6032
    %v6038 = vadd.f32 %v6019, %v6032
    %v6039 = vadd.f32 %v6020, %v6032
    %v6040 = vadd.f32 %v6021, %v6032
    %v6041 = vadd.f32 %v6022, %v6032
    %v6042 = vadd.f32 %v6023, %v6032
    %v6043 = vadd.f32 %v6024, %v6032
    %v6044 = vadd.f32 %v6025, %v6032
    %v6045 = vadd.f32 %v6026, %v6032
    %v6046 = vadd.f32 %v6027, %v6032
    %v6047 = vadd.f32 %v6028, %v6032
    %v6048 = vadd.f32 %v6029, %v6032
    %v6049 = vadd.f32 %v6030, %v6032
    %v6050 = vmax.f32 %v6034, 0.0
    %v6051 = vmax.f32 %v6035, 0.0
    %v6052 = vmax.f32 %v6036, 0.0
    %v6053 = vmax.f32 %v6037, 0.0
    %v6054 = vmax.f32 %v6038, 0.0
    %v6055 = vmax.f32 %v6039, 0.0
    %v6056 = vmax.f32 %v6040, 0.0
    %v6057 = vmax.f32 %v6041, 0.0
    %v6058 = vmax.f32 %v6042, 0.0
    %v6059 = vmax.f32 %v6043, 0.0
    %v6060 = vmax.f32 %v6044, 0.0
    %v6061 = vmax.f32 %v6045, 0.0
    %v6062 = vmax.f32 %v6046, 0.0
    %v6063 = vmax.f32 %v6047, 0.0
    %v6064 = vmax.f32 %v6048, 0.0
    %v6065 = vmax.f32 %v6049, 0.0
    %6066 = vrot.lane.b32.xlu0 %v5495, 120
    %v6067 = vpop.permute.xlu0 %6066
    %v6069 = vmul.f32 %v3891, %v6067
    %v6070 = vmul.f32 %v3894, %v6067
    %v6071 = vmul.f32 %v3899, %v6067
    %v6072 = vmul.f32 %v3902, %v6067
    %v6073 = vmul.f32 %v3907, %v6067
    %v6074 = vmul.f32 %v3910, %v6067
    %v6075 = vmul.f32 %v3915, %v6067
    %v6076 = vmul.f32 %v3918, %v6067
    %v6077 = vmul.f32 %v3923, %v6067
    %v6078 = vmul.f32 %v3926, %v6067
    %v6079 = vmul.f32 %v3931, %v6067
    %v6080 = vmul.f32 %v3934, %v6067
    %v6081 = vmul.f32 %v3939, %v6067
    %v6082 = vmul.f32 %v3942, %v6067
    %v6083 = vmul.f32 %v3947, %v6067
    %v6084 = vmul.f32 %v3950, %v6067
    %6085 = vrot.lane.b32.xlu0 %v5518, 120
    %v6086 = vpop.permute.xlu0 %6085
    %v6088 = vadd.f32 %v6069, %v6086
    %v6089 = vadd.f32 %v6070, %v6086
    %v6090 = vadd.f32 %v6071, %v6086
    %v6091 = vadd.f32 %v6072, %v6086
    %v6092 = vadd.f32 %v6073, %v6086
    %v6093 = vadd.f32 %v6074, %v6086
    %v6094 = vadd.f32 %v6075, %v6086
    %v6095 = vadd.f32 %v6076, %v6086
    %v6096 = vadd.f32 %v6077, %v6086
    %v6097 = vadd.f32 %v6078, %v6086
    %v6098 = vadd.f32 %v6079, %v6086
    %v6099 = vadd.f32 %v6080, %v6086
    %v6100 = vadd.f32 %v6081, %v6086
    %v6101 = vadd.f32 %v6082, %v6086
    %v6102 = vadd.f32 %v6083, %v6086
    %v6103 = vadd.f32 %v6084, %v6086
    %v6104 = vmax.f32 %v6088, 0.0
    %v6105 = vmax.f32 %v6089, 0.0
    %v6106 = vmax.f32 %v6090, 0.0
    %v6107 = vmax.f32 %v6091, 0.0
    %v6108 = vmax.f32 %v6092, 0.0
    %v6109 = vmax.f32 %v6093, 0.0
    %v6110 = vmax.f32 %v6094, 0.0
    %v6111 = vmax.f32 %v6095, 0.0
    %v6112 = vmax.f32 %v6096, 0.0
    %v6113 = vmax.f32 %v6097, 0.0
    %v6114 = vmax.f32 %v6098, 0.0
    %v6115 = vmax.f32 %v6099, 0.0
    %v6116 = vmax.f32 %v6100, 0.0
    %v6117 = vmax.f32 %v6101, 0.0
    %v6118 = vmax.f32 %v6102, 0.0
    %v6119 = vmax.f32 %v6103, 0.0
    %6120 = vrot.lane.b32.xlu0 %v5495, 116
    %v6121 = vpop.permute.xlu0 %6120
    %v6123 = vmul.f32 %v5378, %v6121
    %v6124 = vmul.f32 %v5381, %v6121
    %v6125 = vmul.f32 %v5386, %v6121
    %v6126 = vmul.f32 %v5389, %v6121
    %v6127 = vmul.f32 %v5394, %v6121
    %v6128 = vmul.f32 %v5397, %v6121
    %v6129 = vmul.f32 %v5402, %v6121
    %v6130 = vmul.f32 %v5405, %v6121
    %v6131 = vmul.f32 %v5410, %v6121
    %v6132 = vmul.f32 %v5413, %v6121
    %v6133 = vmul.f32 %v5418, %v6121
    %v6134 = vmul.f32 %v5421, %v6121
    %v6135 = vmul.f32 %v5426, %v6121
    %v6136 = vmul.f32 %v5429, %v6121
    %v6137 = vmul.f32 %v5434, %v6121
    %v6138 = vmul.f32 %v5437, %v6121
    %6139 = vrot.lane.b32.xlu0 %v5518, 116
    %v6140 = vpop.permute.xlu0 %6139
    %v6142 = vadd.f32 %v6123, %v6140
    %v6143 = vadd.f32 %v6124, %v6140
    %v6144 = vadd.f32 %v6125, %v6140
    %v6145 = vadd.f32 %v6126, %v6140
    %v6146 = vadd.f32 %v6127, %v6140
    %v6147 = vadd.f32 %v6128, %v6140
    %v6148 = vadd.f32 %v6129, %v6140
    %v6149 = vadd.f32 %v6130, %v6140
    %v6150 = vadd.f32 %v6131, %v6140
    %v6151 = vadd.f32 %v6132, %v6140
    %v6152 = vadd.f32 %v6133, %v6140
    %v6153 = vadd.f32 %v6134, %v6140
    %v6154 = vadd.f32 %v6135, %v6140
    %v6155 = vadd.f32 %v6136, %v6140
    %v6156 = vadd.f32 %v6137, %v6140
    %v6157 = vadd.f32 %v6138, %v6140
    %v6158 = vmax.f32 %v6142, 0.0
    %v6159 = vmax.f32 %v6143, 0.0
    %v6160 = vmax.f32 %v6144, 0.0
    %v6161 = vmax.f32 %v6145, 0.0
    %v6162 = vmax.f32 %v6146, 0.0
    %v6163 = vmax.f32 %v6147, 0.0
    %v6164 = vmax.f32 %v6148, 0.0
    %v6165 = vmax.f32 %v6149, 0.0
    %v6166 = vmax.f32 %v6150, 0.0
    %v6167 = vmax.f32 %v6151, 0.0
    %v6168 = vmax.f32 %v6152, 0.0
    %v6169 = vmax.f32 %v6153, 0.0
    %v6170 = vmax.f32 %v6154, 0.0
    %v6171 = vmax.f32 %v6155, 0.0
    %v6172 = vmax.f32 %v6156, 0.0
    %v6173 = vmax.f32 %v6157, 0.0
    %6190 = vrot.lane.b32.xlu0 %v6050, 4
    %v6191 = vpop.permute.xlu0 %6190
    %6192 = vrot.lane.b32.xlu0 %v6051, 4
    %v6193 = vpop.permute.xlu0 %6192
    %6194 = vrot.lane.b32.xlu0 %v6052, 4
    %v6195 = vpop.permute.xlu0 %6194
    %6196 = vrot.lane.b32.xlu0 %v6053, 4
    %v6197 = vpop.permute.xlu0 %6196
    %6198 = vrot.lane.b32.xlu0 %v6054, 4
    %v6199 = vpop.permute.xlu0 %6198
    %6200 = vrot.lane.b32.xlu0 %v6055, 4
    %v6201 = vpop.permute.xlu0 %6200
    %6202 = vrot.lane.b32.xlu0 %v6056, 4
    %v6203 = vpop.permute.xlu0 %6202
    %6204 = vrot.lane.b32.xlu0 %v6057, 4
    %v6205 = vpop.permute.xlu0 %6204
    %6206 = vrot.lane.b32.xlu0 %v6058, 4
    %v6207 = vpop.permute.xlu0 %6206
    %6208 = vrot.lane.b32.xlu0 %v6059, 4
    %v6209 = vpop.permute.xlu0 %6208
    %6210 = vrot.lane.b32.xlu0 %v6060, 4
    %v6211 = vpop.permute.xlu0 %6210
    %6212 = vrot.lane.b32.xlu0 %v6061, 4
    %v6213 = vpop.permute.xlu0 %6212
    %6214 = vrot.lane.b32.xlu0 %v6062, 4
    %v6215 = vpop.permute.xlu0 %6214
    %6216 = vrot.lane.b32.xlu0 %v6063, 4
    %v6217 = vpop.permute.xlu0 %6216
    %6218 = vrot.lane.b32.xlu0 %v6064, 4
    %v6219 = vpop.permute.xlu0 %6218
    %6220 = vrot.lane.b32.xlu0 %v6065, 4
    %v6221 = vpop.permute.xlu0 %6220
    %6254 = vrot.lane.b32.xlu0 %v6104, 8
    %v6255 = vpop.permute.xlu0 %6254
    %6256 = vrot.lane.b32.xlu0 %v6105, 8
    %v6257 = vpop.permute.xlu0 %6256
    %6258 = vrot.lane.b32.xlu0 %v6106, 8
    %v6259 = vpop.permute.xlu0 %6258
    %6260 = vrot.lane.b32.xlu0 %v6107, 8
    %v6261 = vpop.permute.xlu0 %6260
    %6262 = vrot.lane.b32.xlu0 %v6108, 8
    %v6263 = vpop.permute.xlu0 %6262
    %6264 = vrot.lane.b32.xlu0 %v6109, 8
    %v6265 = vpop.permute.xlu0 %6264
    %6266 = vrot.lane.b32.xlu0 %v6110, 8
    %v6267 = vpop.permute.xlu0 %6266
    %6268 = vrot.lane.b32.xlu0 %v6111, 8
    %v6269 = vpop.permute.xlu0 %6268
    %6270 = vrot.lane.b32.xlu0 %v6112, 8
    %v6271 = vpop.permute.xlu0 %6270
    %6272 = vrot.lane.b32.xlu0 %v6113, 8
    %v6273 = vpop.permute.xlu0 %6272
    %6274 = vrot.lane.b32.xlu0 %v6114, 8
    %v6275 = vpop.permute.xlu0 %6274
    %6276 = vrot.lane.b32.xlu0 %v6115, 8
    %v6277 = vpop.permute.xlu0 %6276
    %6278 = vrot.lane.b32.xlu0 %v6116, 8
    %v6279 = vpop.permute.xlu0 %6278
    %6280 = vrot.lane.b32.xlu0 %v6117, 8
    %v6281 = vpop.permute.xlu0 %6280
    %6282 = vrot.lane.b32.xlu0 %v6118, 8
    %v6283 = vpop.permute.xlu0 %6282
    %6284 = vrot.lane.b32.xlu0 %v6119, 8
    %v6285 = vpop.permute.xlu0 %6284
    %6318 = vrot.lane.b32.xlu0 %v6158, 12
    %v6319 = vpop.permute.xlu0 %6318
    %6320 = vrot.lane.b32.xlu0 %v6159, 12
    %v6321 = vpop.permute.xlu0 %6320
    %6322 = vrot.lane.b32.xlu0 %v6160, 12
    %v6323 = vpop.permute.xlu0 %6322
    %6324 = vrot.lane.b32.xlu0 %v6161, 12
    %v6325 = vpop.permute.xlu0 %6324
    %6326 = vrot.lane.b32.xlu0 %v6162, 12
    %v6327 = vpop.permute.xlu0 %6326
    %6328 = vrot.lane.b32.xlu0 %v6163, 12
    %v6329 = vpop.permute.xlu0 %6328
    %6330 = vrot.lane.b32.xlu0 %v6164, 12
    %v6331 = vpop.permute.xlu0 %6330
    %6332 = vrot.lane.b32.xlu0 %v6165, 12
    %v6333 = vpop.permute.xlu0 %6332
    %6334 = vrot.lane.b32.xlu0 %v6166, 12
    %v6335 = vpop.permute.xlu0 %6334
    %6336 = vrot.lane.b32.xlu0 %v6167, 12
    %v6337 = vpop.permute.xlu0 %6336
    %6338 = vrot.lane.b32.xlu0 %v6168, 12
    %v6339 = vpop.permute.xlu0 %6338
    %6340 = vrot.lane.b32.xlu0 %v6169, 12
    %v6341 = vpop.permute.xlu0 %6340
    %6342 = vrot.lane.b32.xlu0 %v6170, 12
    %v6343 = vpop.permute.xlu0 %6342
    %6344 = vrot.lane.b32.xlu0 %v6171, 12
    %v6345 = vpop.permute.xlu0 %6344
    %6346 = vrot.lane.b32.xlu0 %v6172, 12
    %v6347 = vpop.permute.xlu0 %6346
    %6348 = vrot.lane.b32.xlu0 %v6173, 12
    %v6349 = vpop.permute.xlu0 %6348
    %v6366 = vsel %vm43, %v5996, %v6191
    %v6367 = vsel %vm43, %v5997, %v6193
    %v6368 = vsel %vm43, %v5998, %v6195
    %v6369 = vsel %vm43, %v5999, %v6197
    %v6370 = vsel %vm43, %v6000, %v6199
    %v6371 = vsel %vm43, %v6001, %v6201
    %v6372 = vsel %vm43, %v6002, %v6203
    %v6373 = vsel %vm43, %v6003, %v6205
    %v6374 = vsel %vm43, %v6004, %v6207
    %v6375 = vsel %vm43, %v6005, %v6209
    %v6376 = vsel %vm43, %v6006, %v6211
    %v6377 = vsel %vm43, %v6007, %v6213
    %v6378 = vsel %vm43, %v6008, %v6215
    %v6379 = vsel %vm43, %v6009, %v6217
    %v6380 = vsel %vm43, %v6010, %v6219
    %v6381 = vsel %vm43, %v6011, %v6221
    %v6382 = vsel %vm1986, %v6366, %v6255
    %v6383 = vsel %vm1986, %v6367, %v6257
    %v6384 = vsel %vm1986, %v6368, %v6259
    %v6385 = vsel %vm1986, %v6369, %v6261
    %v6386 = vsel %vm1986, %v6370, %v6263
    %v6387 = vsel %vm1986, %v6371, %v6265
    %v6388 = vsel %vm1986, %v6372, %v6267
    %v6389 = vsel %vm1986, %v6373, %v6269
    %v6390 = vsel %vm1986, %v6374, %v6271
    %v6391 = vsel %vm1986, %v6375, %v6273
    %v6392 = vsel %vm1986, %v6376, %v6275
    %v6393 = vsel %vm1986, %v6377, %v6277
    %v6394 = vsel %vm1986, %v6378, %v6279
    %v6395 = vsel %vm1986, %v6379, %v6281
    %v6396 = vsel %vm1986, %v6380, %v6283
    %v6397 = vsel %vm1986, %v6381, %v6285
    %v6398 = vsel %vm791, %v6382, %v6319
    %v6399 = vsel %vm791, %v6383, %v6321
    %v6400 = vsel %vm791, %v6384, %v6323
    %v6401 = vsel %vm791, %v6385, %v6325
    %v6402 = vsel %vm791, %v6386, %v6327
    %v6403 = vsel %vm791, %v6387, %v6329
    %v6404 = vsel %vm791, %v6388, %v6331
    %v6405 = vsel %vm791, %v6389, %v6333
    %v6406 = vsel %vm791, %v6390, %v6335
    %v6407 = vsel %vm791, %v6391, %v6337
    %v6408 = vsel %vm791, %v6392, %v6339
    %v6409 = vsel %vm791, %v6393, %v6341
    %v6410 = vsel %vm791, %v6394, %v6343
    %v6411 = vsel %vm791, %v6395, %v6345
    %v6412 = vsel %vm791, %v6396, %v6347
    %v6413 = vsel %vm791, %v6397, %v6349
    %v6414 = vpack.c.bf16 %v6399, %v6398
    %v6415 = vpack.c.bf16 %v6401, %v6400
    %v6416 = vpack.c.bf16 %v6403, %v6402
    %v6417 = vpack.c.bf16 %v6405, %v6404
    %v6418 = vpack.c.bf16 %v6407, %v6406
    %v6419 = vpack.c.bf16 %v6409, %v6408
    %v6420 = vpack.c.bf16 %v6411, %v6410
    %v6421 = vpack.c.bf16 %v6413, %v6412
    %v6422 = vld [vmem:[%s11] sm:$0xf]
    %v6423 = vld [vmem:[%s11 + $0x4] sm:$0xf]
    %v6426 = vunpack.c.l.b16 %v6422
    %v6427 = vunpack.c.l.b16 %v6423
    %v6428 = vpack.c.b16 %v6427, %v6426
    %v6431 = vsel %vm168, %v6414, 0
    %v6434 = vsel %vm168, %v6415, 0
    %v6437 = vsel %vm168, %v6416, 0
    %v6440 = vsel %vm168, %v6417, 0
    %v6443 = vsel %vm168, %v6418, 0
    %v6446 = vsel %vm168, %v6419, 0
    %v6449 = vsel %vm168, %v6420, 0
    %v6452 = vsel %vm168, %v6421, 0
    %6454 = vmatprep.subr.bf16.mxu0 0
    %6455 = vmatpush1.bf16.msra.mxu0 %v6428
    %6456 = vmatprep.subr.bf16.mxu0 0
    %6457 = vmatpush1.bf16.msra.mxu0 0
    %6458 = vmatprep.subr.bf16.mxu0 0
    %6459 = vmatpush1.bf16.msra.mxu0 0
    %6460 = vmatprep.subr.bf16.mxu0 0
    %6461 = vmatpush1.bf16.msra.mxu0 0
    %6462 = vmatprep.subr.bf16.mxu0 0
    %6463 = vmatpush1.bf16.msra.mxu0 0
    %6464 = vmatprep.subr.bf16.mxu0 0
    %6465 = vmatpush1.bf16.msra.mxu0 0
    %6466 = vmatprep.subr.bf16.mxu0 0
    %6467 = vmatpush1.bf16.msra.mxu0 0
    %6468 = vmatprep.subr.bf16.mxu0 0
    %6469 = vmatpush1.bf16.msra.mxu0 0
    %6470 = vmatprep.subr.bf16.mxu0 0
    %6471 = vmatpush1.bf16.msra.mxu0 0
    %6472 = vmatprep.subr.bf16.mxu0 0
    %6473 = vmatpush1.bf16.msra.mxu0 0
    %6474 = vmatprep.subr.bf16.mxu0 0
    %6475 = vmatpush1.bf16.msra.mxu0 0
    %6476 = vmatprep.subr.bf16.mxu0 0
    %6477 = vmatpush1.bf16.msra.mxu0 0
    %6478 = vmatprep.subr.bf16.mxu0 0
    %6479 = vmatpush1.bf16.msra.mxu0 0
    %6480 = vmatprep.subr.bf16.mxu0 0
    %6481 = vmatpush1.bf16.msra.mxu0 0
    %6482 = vmatprep.subr.bf16.mxu0 0
    %6483 = vmatpush1.bf16.msra.mxu0 0
    %6484 = vmatprep.subr.bf16.mxu0 0
    %6485 = vmatpush1.bf16.msra.mxu0 0
    %6486 = vmatprep.mubr.bf16.mxu0 0
    %6487 = vmatmul.mubr.bf16.gmra.mrb[0].mxu0 %v6431
    %v6488 = vpop.f32.mrb[0].mxu0
    %v6489 = vadd.f32 0.0, %v6488
    %v6490 = vpop.f32.mrb[0].mxu0
    %v6491 = vpop.f32.mrb[0].mxu0
    %v6492 = vadd.f32 0.0, %v6491
    %v6493 = vpop.f32.mrb[0].mxu0
    %6494 = vmatprep.mubr.bf16.mxu0 0
    %6495 = vmatmul.mubr.bf16.gmra.mrb[0].mxu0 %v6434
    %v6496 = vpop.f32.mrb[0].mxu0
    %v6497 = vadd.f32 0.0, %v6496
    %v6498 = vpop.f32.mrb[0].mxu0
    %v6499 = vpop.f32.mrb[0].mxu0
    %v6500 = vadd.f32 0.0, %v6499
    %v6501 = vpop.f32.mrb[0].mxu0
    %6502 = vmatprep.mubr.bf16.mxu0 0
    %6503 = vmatmul.mubr.bf16.gmra.mrb[0].mxu0 %v6437
    %v6504 = vpop.f32.mrb[0].mxu0
    %v6505 = vadd.f32 0.0, %v6504
    %v6506 = vpop.f32.mrb[0].mxu0
    %v6507 = vpop.f32.mrb[0].mxu0
    %v6508 = vadd.f32 0.0, %v6507
    %v6509 = vpop.f32.mrb[0].mxu0
    %6510 = vmatprep.mubr.bf16.mxu0 0
    %6511 = vmatmul.mubr.bf16.gmra.mrb[0].mxu0 %v6440
    %v6512 = vpop.f32.mrb[0].mxu0
    %v6513 = vadd.f32 0.0, %v6512
    %v6514 = vpop.f32.mrb[0].mxu0
    %v6515 = vpop.f32.mrb[0].mxu0
    %v6516 = vadd.f32 0.0, %v6515
    %v6517 = vpop.f32.mrb[0].mxu0
    %6518 = vmatprep.mubr.bf16.mxu0 0
    %6519 = vmatmul.mubr.bf16.gmra.mrb[0].mxu0 %v6443
    %v6520 = vpop.f32.mrb[0].mxu0
    %v6521 = vadd.f32 0.0, %v6520
    %v6522 = vpop.f32.mrb[0].mxu0
    %v6523 = vpop.f32.mrb[0].mxu0
    %v6524 = vadd.f32 0.0, %v6523
    %v6525 = vpop.f32.mrb[0].mxu0
    %6526 = vmatprep.mubr.bf16.mxu0 0
    %6527 = vmatmul.mubr.bf16.gmra.mrb[0].mxu0 %v6446
    %v6528 = vpop.f32.mrb[0].mxu0
    %v6529 = vadd.f32 0.0, %v6528
    %v6530 = vpop.f32.mrb[0].mxu0
    %v6531 = vpop.f32.mrb[0].mxu0
    %v6532 = vadd.f32 0.0, %v6531
    %v6533 = vpop.f32.mrb[0].mxu0
    %6534 = vmatprep.mubr.bf16.mxu0 0
    %6535 = vmatmul.mubr.bf16.gmra.mrb[0].mxu0 %v6449
    %v6536 = vpop.f32.mrb[0].mxu0
    %v6537 = vadd.f32 0.0, %v6536
    %v6538 = vpop.f32.mrb[0].mxu0
    %v6539 = vpop.f32.mrb[0].mxu0
    %v6540 = vadd.f32 0.0, %v6539
    %v6541 = vpop.f32.mrb[0].mxu0
    %6542 = vmatprep.mubr.bf16.mxu0 0
    %6543 = vmatmul.mubr.bf16.gmra.mrb[0].mxu0 %v6452
    %v6544 = vpop.f32.mrb[0].mxu0
    %v6545 = vadd.f32 0.0, %v6544
    %v6546 = vpop.f32.mrb[0].mxu0
    %v6547 = vpop.f32.mrb[0].mxu0
    %v6548 = vadd.f32 0.0, %v6547
    %v6549 = vpop.f32.mrb[0].mxu0
    %6550 = vdwg.mxu0
    %v6551 = vld [vmem:[%s0] sm:$0xff]
    %v6552 = vld [vmem:[%s0 + $0x8] sm:$0xff]
    %v6553 = vld [vmem:[%s0 + $0x10] sm:$0xff]
    %v6554 = vld [vmem:[%s0 + $0x18] sm:$0xff]
    %v6555 = vld [vmem:[%s0 + $0x20] sm:$0xff]
    %v6556 = vld [vmem:[%s0 + $0x28] sm:$0xff]
    %v6557 = vld [vmem:[%s0 + $0x30] sm:$0xff]
    %v6558 = vld [vmem:[%s0 + $0x38] sm:$0xff]
    %v6559 = vld [vmem:[%s0 + $0x40] sm:$0xff]
    %v6560 = vld [vmem:[%s0 + $0x48] sm:$0xff]
    %v6561 = vld [vmem:[%s0 + $0x50] sm:$0xff]
    %v6562 = vld [vmem:[%s0 + $0x58] sm:$0xff]
    %v6563 = vld [vmem:[%s0 + $0x60] sm:$0xff]
    %v6564 = vld [vmem:[%s0 + $0x68] sm:$0xff]
    %v6565 = vld [vmem:[%s0 + $0x70] sm:$0xff]
    %v6566 = vld [vmem:[%s0 + $0x78] sm:$0xff]
    %v6567 = vld [vmem:[%s0 + $0x80] sm:$0xff]
    %v6568 = vld [vmem:[%s0 + $0x88] sm:$0xff]
    %v6569 = vld [vmem:[%s0 + $0x90] sm:$0xff]
    %v6570 = vld [vmem:[%s0 + $0x98] sm:$0xff]
    %v6571 = vld [vmem:[%s0 + $0xa0] sm:$0xff]
    %v6572 = vld [vmem:[%s0 + $0xa8] sm:$0xff]
    %v6573 = vld [vmem:[%s0 + $0xb0] sm:$0xff]
    %v6574 = vld [vmem:[%s0 + $0xb8] sm:$0xff]
    %v6575 = vld [vmem:[%s0 + $0xc0] sm:$0xff]
    %v6576 = vld [vmem:[%s0 + $0xc8] sm:$0xff]
    %v6577 = vld [vmem:[%s0 + $0xd0] sm:$0xff]
    %v6578 = vld [vmem:[%s0 + $0xd8] sm:$0xff]
    %v6579 = vld [vmem:[%s0 + $0xe0] sm:$0xff]
    %v6580 = vld [vmem:[%s0 + $0xe8] sm:$0xff]
    %v6581 = vld [vmem:[%s0 + $0xf0] sm:$0xff]
    %v6582 = vld [vmem:[%s0 + $0xf8] sm:$0xff]
    %v6583 = vld [vmem:[%s0 + $0x100] sm:$0xff]
    %v6584 = vld [vmem:[%s0 + $0x108] sm:$0xff]
    %v6585 = vld [vmem:[%s0 + $0x110] sm:$0xff]
    %v6586 = vld [vmem:[%s0 + $0x118] sm:$0xff]
    %v6587 = vld [vmem:[%s0 + $0x120] sm:$0xff]
    %v6588 = vld [vmem:[%s0 + $0x128] sm:$0xff]
    %v6589 = vld [vmem:[%s0 + $0x130] sm:$0xff]
    %v6590 = vld [vmem:[%s0 + $0x138] sm:$0xff]
    %v6591 = vld [vmem:[%s0 + $0x140] sm:$0xff]
    %v6592 = vld [vmem:[%s0 + $0x148] sm:$0xff]
    %v6593 = vld [vmem:[%s0 + $0x150] sm:$0xff]
    %v6594 = vld [vmem:[%s0 + $0x158] sm:$0xff]
    %v6595 = vld [vmem:[%s0 + $0x160] sm:$0xff]
    %v6596 = vld [vmem:[%s0 + $0x168] sm:$0xff]
    %v6597 = vld [vmem:[%s0 + $0x170] sm:$0xff]
    %v6598 = vld [vmem:[%s0 + $0x178] sm:$0xff]
    %v6599 = vld [vmem:[%s0 + $0x180] sm:$0xff]
    %v6600 = vld [vmem:[%s0 + $0x188] sm:$0xff]
    %v6601 = vld [vmem:[%s0 + $0x190] sm:$0xff]
    %v6602 = vld [vmem:[%s0 + $0x198] sm:$0xff]
    %v6603 = vld [vmem:[%s0 + $0x1a0] sm:$0xff]
    %v6604 = vld [vmem:[%s0 + $0x1a8] sm:$0xff]
    %v6605 = vld [vmem:[%s0 + $0x1b0] sm:$0xff]
    %v6606 = vld [vmem:[%s0 + $0x1b8] sm:$0xff]
    %v6607 = vld [vmem:[%s0 + $0x1c0] sm:$0xff]
    %v6608 = vld [vmem:[%s0 + $0x1c8] sm:$0xff]
    %v6609 = vld [vmem:[%s0 + $0x1d0] sm:$0xff]
    %v6610 = vld [vmem:[%s0 + $0x1d8] sm:$0xff]
    %v6611 = vld [vmem:[%s0 + $0x1e0] sm:$0xff]
    %v6612 = vld [vmem:[%s0 + $0x1e8] sm:$0xff]
    %v6613 = vld [vmem:[%s0 + $0x1f0] sm:$0xff]
    %v6614 = vld [vmem:[%s0 + $0x1f8] sm:$0xff]
    %v6615 = vadd.f32 %v6551, %v6489
    %v6616 = vadd.f32 %v6552, %v6492
    %v6617 = vadd.f32 %v6553, %v6497
    %v6618 = vadd.f32 %v6554, %v6500
    %v6619 = vadd.f32 %v6555, %v6505
    %v6620 = vadd.f32 %v6556, %v6508
    %v6621 = vadd.f32 %v6557, %v6513
    %v6622 = vadd.f32 %v6558, %v6516
    %v6623 = vadd.f32 %v6559, %v6489
    %v6624 = vadd.f32 %v6560, %v6492
    %v6625 = vadd.f32 %v6561, %v6497
    %v6626 = vadd.f32 %v6562, %v6500
    %v6627 = vadd.f32 %v6563, %v6505
    %v6628 = vadd.f32 %v6564, %v6508
    %v6629 = vadd.f32 %v6565, %v6513
    %v6630 = vadd.f32 %v6566, %v6516
    %v6631 = vadd.f32 %v6567, %v6489
    %v6632 = vadd.f32 %v6568, %v6492
    %v6633 = vadd.f32 %v6569, %v6497
    %v6634 = vadd.f32 %v6570, %v6500
    %v6635 = vadd.f32 %v6571, %v6505
    %v6636 = vadd.f32 %v6572, %v6508
    %v6637 = vadd.f32 %v6573, %v6513
    %v6638 = vadd.f32 %v6574, %v6516
    %v6639 = vadd.f32 %v6575, %v6489
    %v6640 = vadd.f32 %v6576, %v6492
    %v6641 = vadd.f32 %v6577, %v6497
    %v6642 = vadd.f32 %v6578, %v6500
    %v6643 = vadd.f32 %v6579, %v6505
    %v6644 = vadd.f32 %v6580, %v6508
    %v6645 = vadd.f32 %v6581, %v6513
    %v6646 = vadd.f32 %v6582, %v6516
    %v6647 = vadd.f32 %v6583, %v6521
    %v6648 = vadd.f32 %v6584, %v6524
    %v6649 = vadd.f32 %v6585, %v6529
    %v6650 = vadd.f32 %v6586, %v6532
    %v6651 = vadd.f32 %v6587, %v6537
    %v6652 = vadd.f32 %v6588, %v6540
    %v6653 = vadd.f32 %v6589, %v6545
    %v6654 = vadd.f32 %v6590, %v6548
    %v6655 = vadd.f32 %v6591, %v6521
    %v6656 = vadd.f32 %v6592, %v6524
    %v6657 = vadd.f32 %v6593, %v6529
    %v6658 = vadd.f32 %v6594, %v6532
    %v6659 = vadd.f32 %v6595, %v6537
    %v6660 = vadd.f32 %v6596, %v6540
    %v6661 = vadd.f32 %v6597, %v6545
    %v6662 = vadd.f32 %v6598, %v6548
    %v6663 = vadd.f32 %v6599, %v6521
    %v6664 = vadd.f32 %v6600, %v6524
    %v6665 = vadd.f32 %v6601, %v6529
    %v6666 = vadd.f32 %v6602, %v6532
    %v6667 = vadd.f32 %v6603, %v6537
    %v6668 = vadd.f32 %v6604, %v6540
    %v6669 = vadd.f32 %v6605, %v6545
    %v6670 = vadd.f32 %v6606, %v6548
    %v6671 = vadd.f32 %v6607, %v6521
    %v6672 = vadd.f32 %v6608, %v6524
    %v6673 = vadd.f32 %v6609, %v6529
    %v6674 = vadd.f32 %v6610, %v6532
    %v6675 = vadd.f32 %v6611, %v6537
    %v6676 = vadd.f32 %v6612, %v6540
    %v6677 = vadd.f32 %v6613, %v6545
    %v6678 = vadd.f32 %v6614, %v6548
    %6679 = vst.msk [vmem:[#allocation3] sm:$0xff] %vm168, %v6615
    %6680 = vst.msk [vmem:[#allocation3 + $0x8] sm:$0xff] %vm168, %v6616
    %6681 = vst.msk [vmem:[#allocation3 + $0x10] sm:$0xff] %vm168, %v6617
    %6682 = vst.msk [vmem:[#allocation3 + $0x18] sm:$0xff] %vm168, %v6618
    %6683 = vst.msk [vmem:[#allocation3 + $0x20] sm:$0xff] %vm168, %v6619
    %6684 = vst.msk [vmem:[#allocation3 + $0x28] sm:$0xff] %vm168, %v6620
    %6685 = vst.msk [vmem:[#allocation3 + $0x30] sm:$0xff] %vm168, %v6621
    %6686 = vst.msk [vmem:[#allocation3 + $0x38] sm:$0xff] %vm168, %v6622
    %6687 = vst.msk [vmem:[#allocation3 + $0x40] sm:$0xff] %vm168, %v6623
    %6688 = vst.msk [vmem:[#allocation3 + $0x48] sm:$0xff] %vm168, %v6624
    %6689 = vst.msk [vmem:[#allocation3 + $0x50] sm:$0xff] %vm168, %v6625
    %6690 = vst.msk [vmem:[#allocation3 + $0x58] sm:$0xff] %vm168, %v6626
    %6691 = vst.msk [vmem:[#allocation3 + $0x60] sm:$0xff] %vm168, %v6627
    %6692 = vst.msk [vmem:[#allocation3 + $0x68] sm:$0xff] %vm168, %v6628
    %6693 = vst.msk [vmem:[#allocation3 + $0x70] sm:$0xff] %vm168, %v6629
    %6694 = vst.msk [vmem:[#allocation3 + $0x78] sm:$0xff] %vm168, %v6630
    %6695 = vst.msk [vmem:[#allocation3 + $0x80] sm:$0xff] %vm168, %v6631
    %6696 = vst.msk [vmem:[#allocation3 + $0x88] sm:$0xff] %vm168, %v6632
    %6697 = vst.msk [vmem:[#allocation3 + $0x90] sm:$0xff] %vm168, %v6633
    %6698 = vst.msk [vmem:[#allocation3 + $0x98] sm:$0xff] %vm168, %v6634
    %6699 = vst.msk [vmem:[#allocation3 + $0xa0] sm:$0xff] %vm168, %v6635
    %6700 = vst.msk [vmem:[#allocation3 + $0xa8] sm:$0xff] %vm168, %v6636
    %6701 = vst.msk [vmem:[#allocation3 + $0xb0] sm:$0xff] %vm168, %v6637
    %6702 = vst.msk [vmem:[#allocation3 + $0xb8] sm:$0xff] %vm168, %v6638
    %6703 = vst.msk [vmem:[#allocation3 + $0xc0] sm:$0xff] %vm168, %v6639
    %6704 = vst.msk [vmem:[#allocation3 + $0xc8] sm:$0xff] %vm168, %v6640
    %6705 = vst.msk [vmem:[#allocation3 + $0xd0] sm:$0xff] %vm168, %v6641
    %6706 = vst.msk [vmem:[#allocation3 + $0xd8] sm:$0xff] %vm168, %v6642
    %6707 = vst.msk [vmem:[#allocation3 + $0xe0] sm:$0xff] %vm168, %v6643
    %6708 = vst.msk [vmem:[#allocation3 + $0xe8] sm:$0xff] %vm168, %v6644
    %6709 = vst.msk [vmem:[#allocation3 + $0xf0] sm:$0xff] %vm168, %v6645
    %6710 = vst.msk [vmem:[#allocation3 + $0xf8] sm:$0xff] %vm168, %v6646
    %6711 = vst.msk [vmem:[#allocation3 + $0x100] sm:$0xff] %vm168, %v6647
    %6712 = vst.msk [vmem:[#allocation3 + $0x108] sm:$0xff] %vm168, %v6648
    %6713 = vst.msk [vmem:[#allocation3 + $0x110] sm:$0xff] %vm168, %v6649
    %6714 = vst.msk [vmem:[#allocation3 + $0x118] sm:$0xff] %vm168, %v6650
    %6715 = vst.msk [vmem:[#allocation3 + $0x120] sm:$0xff] %vm168, %v6651
    %6716 = vst.msk [vmem:[#allocation3 + $0x128] sm:$0xff] %vm168, %v6652
    %6717 = vst.msk [vmem:[#allocation3 + $0x130] sm:$0xff] %vm168, %v6653
    %6718 = vst.msk [vmem:[#allocation3 + $0x138] sm:$0xff] %vm168, %v6654
    %6719 = vst.msk [vmem:[#allocation3 + $0x140] sm:$0xff] %vm168, %v6655
    %6720 = vst.msk [vmem:[#allocation3 + $0x148] sm:$0xff] %vm168, %v6656
    %6721 = vst.msk [vmem:[#allocation3 + $0x150] sm:$0xff] %vm168, %v6657
    %6722 = vst.msk [vmem:[#allocation3 + $0x158] sm:$0xff] %vm168, %v6658
    %6723 = vst.msk [vmem:[#allocation3 + $0x160] sm:$0xff] %vm168, %v6659
    %6724 = vst.msk [vmem:[#allocation3 + $0x168] sm:$0xff] %vm168, %v6660
    %6725 = vst.msk [vmem:[#allocation3 + $0x170] sm:$0xff] %vm168, %v6661
    %6726 = vst.msk [vmem:[#allocation3 + $0x178] sm:$0xff] %vm168, %v6662
    %6727 = vst.msk [vmem:[#allocation3 + $0x180] sm:$0xff] %vm168, %v6663
    %6728 = vst.msk [vmem:[#allocation3 + $0x188] sm:$0xff] %vm168, %v6664
    %6729 = vst.msk [vmem:[#allocation3 + $0x190] sm:$0xff] %vm168, %v6665
    %6730 = vst.msk [vmem:[#allocation3 + $0x198] sm:$0xff] %vm168, %v6666
    %6731 = vst.msk [vmem:[#allocation3 + $0x1a0] sm:$0xff] %vm168, %v6667
    %6732 = vst.msk [vmem:[#allocation3 + $0x1a8] sm:$0xff] %vm168, %v6668
    %6733 = vst.msk [vmem:[#allocation3 + $0x1b0] sm:$0xff] %vm168, %v6669
    %6734 = vst.msk [vmem:[#allocation3 + $0x1b8] sm:$0xff] %vm168, %v6670
    %6735 = vst.msk [vmem:[#allocation3 + $0x1c0] sm:$0xff] %vm168, %v6671
    %6736 = vst.msk [vmem:[#allocation3 + $0x1c8] sm:$0xff] %vm168, %v6672
    %6737 = vst.msk [vmem:[#allocation3 + $0x1d0] sm:$0xff] %vm168, %v6673
    %6738 = vst.msk [vmem:[#allocation3 + $0x1d8] sm:$0xff] %vm168, %v6674
    %6739 = vst.msk [vmem:[#allocation3 + $0x1e0] sm:$0xff] %vm168, %v6675
    %6740 = vst.msk [vmem:[#allocation3 + $0x1e8] sm:$0xff] %vm168, %v6676
    %6741 = vst.msk [vmem:[#allocation3 + $0x1f0] sm:$0xff] %vm168, %v6677
    %6742 = vst.msk [vmem:[#allocation3 + $0x1f8] sm:$0xff] %vm168, %v6678
    // Predicated region
    $region50: #{stfe_block_forward.1} parent=1 // pred_check
      _
    $region51: #{stfe_block_forward.1} parent=1 // pred_check_branch
      %6744 = sbr.rel (0) target = $region53
    $region52: #{stfe_block_forward.1} parent=1 // pred_region
      %s6746 = ssub.s32 8192, 8192
      %6747 = vsyncadd [#allocation4], %s6746
      %s6748 = sshll.u32 [#allocation3], 4
      %s6749 = int_to_ptr.vmem [resolvable:$true] %s6748
      %6754 = dma.vmem_to_hbm [thread:$0]  %s6749, 8192, %s12, [#allocation4], 128, 128, 8
    $region53: #{stfe_block_forward.1} parent=1 // pred_fallthru
      _
    // Predicated region
    $region54: #{stfe_block_forward.1} parent=1 // pred_check
      _
    $region55: #{stfe_block_forward.1} parent=1 // pred_check_branch
      %6756 = sbr.rel (0) target = $region57
    $region56: #{stfe_block_forward.1} parent=1 // pred_region
      %6757 = dma.done [#allocation4], 8192
    $region57: #{stfe_block_forward.1} parent=1 // pred_fallthru
      _
    %6758 = vsyncpa [#allocation4], 1

</llo_original>
